<compile_context>
chip_gen: v5e
topology: v5e:2x2
jax: 0.10.0
libtpu: 0.0.40
codegen_flags: <defaults>
</compile_context>

<pallas_src>
import jax
import jax.numpy as jnp
import numpy as np
from jax.experimental import pallas as pl
from jax.experimental.pallas import tpu as pltpu

# ----------------------------- configuration -------------------------------
IMAGE_SIZE = 16
PATCH = 4
IN_CHANNELS = 4
K_FACTOR = 8
HIDDEN = IN_CHANNELS * K_FACTOR           # 32
MLP_DIM = 64
NUM_LAYERS = 2
MASK_RATIO = 0.5
BATCH = 2

DESIRED = IMAGE_SIZE if IMAGE_SIZE % PATCH == 0 else (IMAGE_SIZE // PATCH + 1) * PATCH
PAD_TOP = DESIRED - IMAGE_SIZE
PAD_LEFT = DESIRED - IMAGE_SIZE
N_H = DESIRED // PATCH
SEQ = N_H * N_H                           # 16
PP = PATCH * PATCH                        # 16
CPP = IN_CHANNELS * PP                    # 64 (ConvTranspose features / token)
LN_EPS = 1e-6
OUT_LANES = 128                           # lane-dense kernel output (CPP padded)

# criss-cross constant-slab row offsets (all multiples of 8)
CC_EV, CC_TK, CC_TSUM, CC_FOLDT = 0, 32, 64, 192
CC_ROWS = 224

# encoder weight-slab lane offsets (every block starts on a 128-lane boundary)
EW_Q, EW_K, EW_V, EW_FC, EW_M1, EW_M2T = 0, 128, 256, 384, 512, 640
ENC_W_WIDTH = 768
# decoder weight-slab lane offsets
(DW_Q, DW_K, DW_V, DW_FC, DW_QC, DW_KC, DW_VC, DW_FCC, DW_M1, DW_M2T) = (
    0, 128, 256, 384, 512, 640, 768, 896, 1024, 1152)
DEC_W_WIDTH = 1280

# misc slab row offsets
MS_ENC_POS = 0        # rows 0..15  : enc_pos[1:17]     (lanes 0:32)
MS_DEC_POS = 16       # rows 16..31 : dec_pos[1:17]     (lanes 0:32)
MS_MASK = 32          # mask token
MS_EMB_B = 33         # patch-embed bias
MS_ENC_LNW, MS_ENC_LNB = 34, 35
MS_DEC_LNW, MS_DEC_LNB = 36, 37
MS_CT_B = 38          # ConvTranspose bias (lanes 0:64, zero-padded to 128)
MS_CT_W = 40          # rows 40..71 : ConvTranspose weight (32 x 64, zero-padded)
MISC_ROWS = 72


# ------------------------- in-kernel math helpers ---------------------------
def _erf(x):
    # Abramowitz & Stegun 7.1.26 (max abs err ~1.5e-7); exp goes to the EUP.
    a1, a2, a3, a4, a5 = 0.254829592, -0.284496736, 1.421413741, -1.453152027, 1.061405429
    p = 0.3275911
    sgn = jnp.where(x >= 0, 1.0, -1.0)
    ax = jnp.abs(x)
    t = 1.0 / (1.0 + p * ax)
    poly = ((((a5 * t + a4) * t + a3) * t + a2) * t + a1) * t
    return sgn * (1.0 - poly * jnp.exp(-ax * ax))


def _gelu(x):
    return 0.5 * x * (1.0 + _erf(x * 0.7071067811865476))


# ------------------------------ fused kernel --------------------------------
def fused_kernel(p_ref, keep_ref, embw_ref, misc_ref, cc_ref,
                 encw_ref, encv_ref, decw_ref, decv_ref, o_ref):
    H, M, K, C = HIDDEN, MLP_DIM, K_FACTOR, IN_CHANNELS
    f32 = jnp.float32

    def layernorm(x, w, b):
        mu = jnp.mean(x, axis=-1, keepdims=True)
        d = x - mu
        var = jnp.mean(d * d, axis=-1, keepdims=True)
        return d * jax.lax.rsqrt(var + LN_EPS) * w + b

    def mlp(x, w1, b1, w2t, b2):
        hid = _gelu(jnp.dot(x, w1, preferred_element_type=f32) + b1)
        out = jax.lax.dot_general(hid, w2t, (((1,), (1,)), ((), ())),
                                  preferred_element_type=f32)
        return out + b2

    def criss_cross(q, k, v, wfc, bfc):
        """Per-token criss-cross attention across the C=4 channel groups.

        q/k/v are (M, H) channel-major (lane c*K+f == channel c, feature f).
        Vectorised over query channels at lane width C*H = 128:
          lane i*H + j*K + f  <->  (query channel i, key channel j, feature f).
        Tiling / segmented-sum / fold steps are constant matmuls (MXU).
        """
        inv = 1.0 / (K ** 0.5)
        qs = q * inv
        # exact per-(i, f) max over key channels j, via sign-split against
        # per-feature max/min of k (computed once, 1-vreg ops).
        k0, k1 = k[:, 0:K], k[:, K:2 * K]
        k2, k3 = k[:, 2 * K:3 * K], k[:, 3 * K:4 * K]
        kmax = jnp.concatenate(
            [jnp.maximum(jnp.maximum(k0, k1), jnp.maximum(k2, k3))] * C, axis=1)
        kmin = jnp.concatenate(
            [jnp.minimum(jnp.minimum(k0, k1), jnp.minimum(k2, k3))] * C, axis=1)
        m32 = jnp.where(qs >= 0.0, qs * kmax, qs * kmin)                 # (M, H)

        ev = cc_ref[CC_EV:CC_EV + H, :]                                  # (H, 128)
        qe = jnp.dot(qs, ev, preferred_element_type=f32)                 # (M, 128)
        m128 = jnp.dot(m32, ev, preferred_element_type=f32)              # (M, 128)
        kt = jnp.dot(k, cc_ref[CC_TK:CC_TK + H, :], preferred_element_type=f32)
        ve = jnp.dot(v, ev, preferred_element_type=f32)

        e = jnp.exp(qe * kt - m128)                                      # (M, 128)
        den = jnp.dot(e, cc_ref[CC_TSUM:CC_TSUM + C * H, :],
                      preferred_element_type=f32)                        # seg-sum over j
        p = e / den                                                      # exact softmax
        ctx = jax.lax.dot_general(p * ve, cc_ref[CC_FOLDT:CC_FOLDT + H, :],
                                  (((1,), (1,)), ((), ())),
                                  preferred_element_type=f32)            # (M, H)
        return jnp.dot(ctx, wfc, preferred_element_type=f32) + bfc

    def attention(xq, xkv, wq, bq, wk, bk, wv, bv, wfc, bfc):
        q = jnp.dot(xq, wq, preferred_element_type=f32) + bq
        k = jnp.dot(xkv, wk, preferred_element_type=f32) + bk
        v = jnp.dot(xkv, wv, preferred_element_type=f32) + bv
        return criss_cross(q, k, v, wfc, bfc)

    x_patch = p_ref[...]                                                 # (SEQ, CPP)
    keep = keep_ref[...]                                                 # (SEQ, 1)

    # depthwise patch conv (kernel == stride) as one block-diagonal matmul
    tokens = (jnp.dot(x_patch, embw_ref[...], preferred_element_type=f32)
              + misc_ref[MS_EMB_B:MS_EMB_B + 1, 0:H])                    # (SEQ, H)

    # ---------------- encoder (all tokens; attention/LN/MLP are per-token) --
    h = tokens + misc_ref[MS_ENC_POS:MS_ENC_POS + SEQ, 0:H]
    for l in range(NUM_LAYERS):
        ln1w = encv_ref[l, 0:1, 0:H]; ln1b = encv_ref[l, 1:2, 0:H]
        ln2w = encv_ref[l, 2:3, 0:H]; ln2b = encv_ref[l, 3:4, 0:H]
        bq = encv_ref[l, 4:5, 0:H]; bk = encv_ref[l, 5:6, 0:H]; bv = encv_ref[l, 6:7, 0:H]
        bfc = encv_ref[l, 7:8, 0:H]
        bm1 = encv_ref[l, 8:9, 0:M]; bm2 = encv_ref[l, 9:10, 0:H]
        y = layernorm(h, ln1w, ln1b)
        h = h + attention(y, y,
                          encw_ref[l, :, EW_Q:EW_Q + H], bq,
                          encw_ref[l, :, EW_K:EW_K + H], bk,
                          encw_ref[l, :, EW_V:EW_V + H], bv,
                          encw_ref[l, :, EW_FC:EW_FC + H], bfc)
        h = h + mlp(layernorm(h, ln2w, ln2b),
                    encw_ref[l, :, EW_M1:EW_M1 + M], bm1,
                    encw_ref[l, :, EW_M2T:EW_M2T + M], bm2)
    enc_all = layernorm(h, misc_ref[MS_ENC_LNW:MS_ENC_LNW + 1, 0:H],
                        misc_ref[MS_ENC_LNB:MS_ENC_LNB + 1, 0:H])

    # ---- decoder context: kept token -> encoder output, else mask token ----
    mask_tok = misc_ref[MS_MASK:MS_MASK + 1, 0:H]
    ctx = (keep * enc_all + (1.0 - keep) * mask_tok
           + misc_ref[MS_DEC_POS:MS_DEC_POS + SEQ, 0:H])                 # (SEQ, H)

    # ---------------- decoder (cls row never reaches the output: skipped) ---
    d = tokens
    for l in range(NUM_LAYERS):
        ln1w = decv_ref[l, 0:1, 0:H]; ln1b = decv_ref[l, 1:2, 0:H]
        ln2w = decv_ref[l, 2:3, 0:H]; ln2b = decv_ref[l, 3:4, 0:H]
        ln3w = decv_ref[l, 4:5, 0:H]; ln3b = decv_ref[l, 5:6, 0:H]
        bq_s = decv_ref[l, 6:7, 0:H]; bk_s = decv_ref[l, 7:8, 0:H]; bv_s = decv_ref[l, 8:9, 0:H]
        bfc_s = decv_ref[l, 9:10, 0:H]
        bq_c = decv_ref[l, 10:11, 0:H]; bk_c = decv_ref[l, 11:12, 0:H]; bv_c = decv_ref[l, 12:13, 0:H]
        bfc_c = decv_ref[l, 13:14, 0:H]
        bm1 = decv_ref[l, 14:15, 0:M]; bm2 = decv_ref[l, 15:16, 0:H]
        y = layernorm(d, ln1w, ln1b)                        # ln_1(input)
        y = y + attention(y, y,
                          decw_ref[l, :, DW_Q:DW_Q + H], bq_s,
                          decw_ref[l, :, DW_K:DW_K + H], bk_s,
                          decw_ref[l, :, DW_V:DW_V + H], bv_s,
                          decw_ref[l, :, DW_FC:DW_FC + H], bfc_s)
        z = layernorm(y, ln2w, ln2b)
        ca = attention(z, ctx,
                       decw_ref[l, :, DW_QC:DW_QC + H], bq_c,
                       decw_ref[l, :, DW_KC:DW_KC + H], bk_c,
                       decw_ref[l, :, DW_VC:DW_VC + H], bv_c,
                       decw_ref[l, :, DW_FCC:DW_FCC + H], bfc_c)
        # NOTE: the reference DecoderBlock discards the running residual here:
        # block output = cross_attn + mlp(ln3(cross_attn)).
        d = ca + mlp(layernorm(ca, ln3w, ln3b),
                     decw_ref[l, :, DW_M1:DW_M1 + M], bm1,
                     decw_ref[l, :, DW_M2T:DW_M2T + M], bm2)
    dn = layernorm(d, misc_ref[MS_DEC_LNW:MS_DEC_LNW + 1, 0:H],
                   misc_ref[MS_DEC_LNB:MS_DEC_LNB + 1, 0:H])

    # ConvTranspose2d (kernel == stride) as a per-token matmul, lane-dense store
    o_ref[...] = (jnp.dot(dn, misc_ref[MS_CT_W:MS_CT_W + H, :],
                          preferred_element_type=f32)
                  + misc_ref[MS_CT_B:MS_CT_B + 1, :])                    # (SEQ, 128)


# --------------------------------- forward ----------------------------------
def forward(imgs, params, mask_key):
    n = imgs.shape[0]
    x = jnp.pad(imgs, ((0, 0), (0, 0), (PAD_TOP, 0), (PAD_LEFT, 0)))

    # patchify to (n, SEQ, C*PP) channel-major patch vectors (pure layout)
    xp = x.reshape(n, IN_CHANNELS, N_H, PATCH, N_H, PATCH)
    xp = xp.transpose(0, 2, 4, 1, 3, 5).reshape(n, SEQ, CPP)

    # TODO(synk): data-dependent random masking (uniform noise + argsort) has no
    # clean kernel form; only its per-token keep/mask bit enters the kernel.
    len_keep = int(SEQ * (1.0 - MASK_RATIO))
    noise = jax.random.uniform(mask_key, (n, SEQ))
    ids_shuffle = jnp.argsort(noise, axis=1)
    ids_restore = jnp.argsort(ids_shuffle, axis=1)
    keep = (ids_restore < len_keep).astype(jnp.float32)[..., None]       # (n, SEQ, 1)

    full2 = lambda b: (0, 0)
    full3 = lambda b: (0, 0, 0)
    out = pl.pallas_call(
        fused_kernel,
        out_shape=jax.ShapeDtypeStruct((n, SEQ, OUT_LANES), jnp.float32),
        grid=(n,),
        in_specs=[
            pl.BlockSpec((None, SEQ, CPP), lambda b: (b, 0, 0)),          # patches
            pl.BlockSpec((None, SEQ, 1), lambda b: (b, 0, 0)),            # keep mask
            pl.BlockSpec((CPP, HIDDEN), full2),                           # patch-embed W
            pl.BlockSpec((MISC_ROWS, 128), full2),                        # misc slab
            pl.BlockSpec((CC_ROWS, 128), full2),                          # attn constants
            pl.BlockSpec((NUM_LAYERS, HIDDEN, ENC_W_WIDTH), full3),       # enc weights
            pl.BlockSpec((NUM_LAYERS, 16, 128), full3),                   # enc vectors
            pl.BlockSpec((NUM_LAYERS, HIDDEN, DEC_W_WIDTH), full3),       # dec weights
            pl.BlockSpec((NUM_LAYERS, 16, 128), full3),                   # dec vectors
        ],
        out_specs=pl.BlockSpec((None, SEQ, OUT_LANES), lambda b: (b, 0, 0)),
        compiler_params=pltpu.CompilerParams(
            dimension_semantics=("parallel",)),
    )(xp, keep, params['emb_w'], params['misc'], params['cc'],
      params['enc_W'], params['enc_V'], params['dec_W'], params['dec_V'])

    # un-patchify (pure layout) and crop the zero padding
    y = out[:, :, :CPP]
    y = y.reshape(n, N_H, N_H, IN_CHANNELS, PATCH, PATCH)
    y = y.transpose(0, 3, 1, 4, 2, 5).reshape(n, IN_CHANNELS, DESIRED, DESIRED)
    return y[:, :, PAD_TOP:, PAD_LEFT:]


# ------------------------------ parameter init ------------------------------
class _Init:
    def __init__(self, key):
        self.key = key
        self.i = 0

    def nrm(self, shape, std=0.02):
        self.i += 1
        k = jax.random.fold_in(self.key, self.i)
        return np.asarray(jax.random.normal(k, shape), dtype=np.float32) * np.float32(std)


def _block_diag(blocks):
    r, c = blocks[0].shape
    n = len(blocks)
    out = np.zeros((n * r, n * c), np.float32)
    for i, b in enumerate(blocks):
        out[i * r:(i + 1) * r, i * c:(i + 1) * c] = b
    return out


def _cc_constants():
    """Expand / tile / segmented-sum / fold constants for criss-cross attention."""
    H, K, C = HIDDEN, K_FACTOR, IN_CHANNELS
    W = C * H  # 128
    ev = np.zeros((H, W), np.float32)     # expand q/v over key channels
    tk = np.zeros((H, W), np.float32)     # tile k over query channels
    tsum = np.zeros((W, W), np.float32)   # segmented sum over key channels
    foldt = np.zeros((H, W), np.float32)  # fold (sum over query channels), transposed
    for i in range(C):
        for j in range(C):
            for f in range(K):
                col = i * H + j * K + f
                ev[i * K + f, col] = 1.0
                tk[j * K + f, col] = 1.0
                foldt[j * K + f, col] = 1.0
                for j2 in range(C):
                    tsum[i * H + j2 * K + f, col] = 1.0
    return np.concatenate([ev, tk, tsum, foldt], axis=0)                 # (224, 128)


def _enc_layer(init):
    H, K, C, M = HIDDEN, K_FACTOR, IN_CHANNELS, MLP_DIM
    W = np.zeros((H, ENC_W_WIDTH), np.float32)
    W[:, EW_Q:EW_Q + H] = _block_diag([init.nrm((K, K)) for _ in range(C)])
    W[:, EW_K:EW_K + H] = _block_diag([init.nrm((K, K)) for _ in range(C)])
    W[:, EW_V:EW_V + H] = _block_diag([init.nrm((K, K)) for _ in range(C)])
    W[:, EW_FC:EW_FC + H] = _block_diag([init.nrm((K, K))] * C)          # shared fc_out
    W[:, EW_M1:EW_M1 + M] = init.nrm((H, M))
    W[:, EW_M2T:EW_M2T + M] = init.nrm((M, H)).T
    V = np.zeros((16, 128), np.float32)
    V[0, :H] = 1.0                                                        # ln1 weight
    V[2, :H] = 1.0                                                        # ln2 weight
    V[4, :H] = np.concatenate([init.nrm((K,), 0.01) for _ in range(C)])   # bq
    V[5, :H] = np.concatenate([init.nrm((K,), 0.01) for _ in range(C)])   # bk
    V[6, :H] = np.concatenate([init.nrm((K,), 0.01) for _ in range(C)])   # bv
    V[7, :H] = np.tile(init.nrm((K,), 0.01), C)                           # shared bfc
    V[8, :M] = init.nrm((M,), 1e-6)                                       # bm1
    V[9, :H] = init.nrm((H,), 1e-6)                                       # bm2
    return W, V


def _dec_layer(init):
    H, K, C, M = HIDDEN, K_FACTOR, IN_CHANNELS, MLP_DIM
    W = np.zeros((H, DEC_W_WIDTH), np.float32)
    for off in (DW_Q, DW_K, DW_V, DW_QC, DW_KC, DW_VC):
        W[:, off:off + H] = _block_diag([init.nrm((K, K)) for _ in range(C)])
    W[:, DW_FC:DW_FC + H] = _block_diag([init.nrm((K, K))] * C)
    W[:, DW_FCC:DW_FCC + H] = _block_diag([init.nrm((K, K))] * C)
    W[:, DW_M1:DW_M1 + M] = init.nrm((H, M))
    W[:, DW_M2T:DW_M2T + M] = init.nrm((M, H)).T
    V = np.zeros((16, 128), np.float32)
    V[0, :H] = 1.0; V[2, :H] = 1.0; V[4, :H] = 1.0                        # ln1/ln2/ln3 w
    for r in (6, 7, 8, 10, 11, 12):                                       # per-channel q/k/v biases
        V[r, :H] = np.concatenate([init.nrm((K,), 0.01) for _ in range(C)])
    V[9, :H] = np.tile(init.nrm((K,), 0.01), C)                           # bfc (self)
    V[13, :H] = np.tile(init.nrm((K,), 0.01), C)                          # bfc (cross)
    V[14, :M] = init.nrm((M,), 1e-6)
    V[15, :H] = init.nrm((H,), 1e-6)
    return W, V


def init_params(key):
    init = _Init(key)
    H, K, C = HIDDEN, K_FACTOR, IN_CHANNELS

    # depthwise patch conv as block-diagonal (C*PP, H) matmul; bias zeros.
    emb_std = (1.0 / (C * PP)) ** 0.5
    emb_w = _block_diag([init.nrm((PP, K), emb_std) for _ in range(C)])   # (64, 32)

    enc = [_enc_layer(init) for _ in range(NUM_LAYERS)]
    dec = [_dec_layer(init) for _ in range(NUM_LAYERS)]

    enc_pos = init.nrm((SEQ + 1, H))
    dec_pos = init.nrm((SEQ + 1, H))
    convt_w = init.nrm((H, CPP))
    convt_b = np.repeat(init.nrm((C,), 0.02), PP)                         # per out-channel

    misc = np.zeros((MISC_ROWS, 128), np.float32)
    misc[MS_ENC_POS:MS_ENC_POS + SEQ, :H] = enc_pos[1:]
    misc[MS_DEC_POS:MS_DEC_POS + SEQ, :H] = dec_pos[1:]
    # MS_MASK row (mask token) and MS_EMB_B row (conv bias) stay zero.
    misc[MS_ENC_LNW, :H] = 1.0
    misc[MS_DEC_LNW, :H] = 1.0
    misc[MS_CT_B, :CPP] = convt_b
    misc[MS_CT_W:MS_CT_W + H, :CPP] = convt_w

    return dict(
        emb_w=jnp.asarray(emb_w),
        misc=jnp.asarray(misc),
        cc=jnp.asarray(_cc_constants()),
        enc_W=jnp.asarray(np.stack([w for w, _ in enc])),     # (L, 32, 768)
        enc_V=jnp.asarray(np.stack([v for _, v in enc])),     # (L, 16, 128)
        dec_W=jnp.asarray(np.stack([w for w, _ in dec])),     # (L, 32, 1280)
        dec_V=jnp.asarray(np.stack([v for _, v in dec])),     # (L, 16, 128)
    )


# ----------------------------------- main ------------------------------------
if __name__ == "__main__":
    key = jax.random.PRNGKey(0)
    pkey, xkey, mkey = jax.random.split(key, 3)
    params = init_params(pkey)
    imgs = jax.random.normal(xkey, (BATCH, IN_CHANNELS, IMAGE_SIZE, IMAGE_SIZE), jnp.float32)
    fwd = jax.jit(forward)
    out = jax.block_until_ready(fwd(imgs, params, mkey))
    assert out.shape == (BATCH, IN_CHANNELS, IMAGE_SIZE, IMAGE_SIZE)
    assert bool(jnp.all(jnp.isfinite(out)))
    print("KERNEL_OK")
</pallas_src>

<mosaic_0001>
module attributes {stable_mosaic.version = 11 : i64} {
  func.func @fused_kernel(%arg0: i32, %arg1: memref<1x16x64xf32, #tpu.memory_space<vmem>>, %arg2: memref<1x16x1xf32, #tpu.memory_space<vmem>>, %arg3: memref<64x32xf32, #tpu.memory_space<vmem>>, %arg4: memref<72x128xf32, #tpu.memory_space<vmem>>, %arg5: memref<224x128xf32, #tpu.memory_space<vmem>>, %arg6: memref<2x32x768xf32, #tpu.memory_space<vmem>>, %arg7: memref<2x16x128xf32, #tpu.memory_space<vmem>>, %arg8: memref<2x32x1280xf32, #tpu.memory_space<vmem>>, %arg9: memref<2x16x128xf32, #tpu.memory_space<vmem>>, %arg10: memref<1x16x128xf32, #tpu.memory_space<vmem>>) attributes {dimension_semantics = [#tpu.dimension_semantics<parallel>], iteration_bounds = array<i64: 2>, scalar_prefetch = 0 : i64, scratch_operands = 0 : i64, tpu.core_type = #tpu.core_type<tc>, window_params = [{transform_indices = @transform_0, window_bounds = array<i64: 1, 16, 64>}, {transform_indices = @transform_1, window_bounds = array<i64: 1, 16, 1>}, {pipeline_mode = #tpu.pipeline_mode<synchronous>, transform_indices = @transform_2, window_bounds = array<i64: 64, 32>}, {pipeline_mode = #tpu.pipeline_mode<synchronous>, transform_indices = @transform_3, window_bounds = array<i64: 72, 128>}, {pipeline_mode = #tpu.pipeline_mode<synchronous>, transform_indices = @transform_4, window_bounds = array<i64: 224, 128>}, {pipeline_mode = #tpu.pipeline_mode<synchronous>, transform_indices = @transform_5, window_bounds = array<i64: 2, 32, 768>}, {pipeline_mode = #tpu.pipeline_mode<synchronous>, transform_indices = @transform_6, window_bounds = array<i64: 2, 16, 128>}, {pipeline_mode = #tpu.pipeline_mode<synchronous>, transform_indices = @transform_7, window_bounds = array<i64: 2, 32, 1280>}, {pipeline_mode = #tpu.pipeline_mode<synchronous>, transform_indices = @transform_8, window_bounds = array<i64: 2, 16, 128>}, {transform_indices = @transform_9, window_bounds = array<i64: 1, 16, 128>}]} {
    %c0 = arith.constant 0 : index
    %c0_0 = arith.constant 0 : index
    %c0_1 = arith.constant 0 : index
    %0 = vector.load %arg1[%c0, %c0_0, %c0_1] : memref<1x16x64xf32, #tpu.memory_space<vmem>>, vector<1x16x64xf32>
    %1 = vector.shape_cast %0 : vector<1x16x64xf32> to vector<16x64xf32>
    %c0_2 = arith.constant 0 : index
    %c0_3 = arith.constant 0 : index
    %c0_4 = arith.constant 0 : index
    %2 = vector.load %arg2[%c0_2, %c0_3, %c0_4] : memref<1x16x1xf32, #tpu.memory_space<vmem>>, vector<1x16x1xf32>
    %3 = vector.shape_cast %2 : vector<1x16x1xf32> to vector<16x1xf32>
    %c0_5 = arith.constant 0 : index
    %c0_6 = arith.constant 0 : index
    %4 = vector.load %arg3[%c0_5, %c0_6] : memref<64x32xf32, #tpu.memory_space<vmem>>, vector<64x32xf32>
    %cst = arith.constant dense<0.000000e+00> : vector<16x32xf32>
    %5 = tpu.matmul %1, %4, %cst {dimension_numbers = #tpu.dot_dimension_numbers<[1], [0], [0], [1], [0, 0, 1, 1], [], []>} : vector<16x64xf32>, vector<64x32xf32>, vector<16x32xf32> -> vector<16x32xf32>
    %c33 = arith.constant 33 : index
    %c0_7 = arith.constant 0 : index
    %6 = vector.load %arg4[%c33, %c0_7] : memref<72x128xf32, #tpu.memory_space<vmem>>, vector<1x32xf32>
    %7 = vector.broadcast %6 : vector<1x32xf32> to vector<16x32xf32>
    %8 = arith.addf %5, %7 : vector<16x32xf32>
    %c0_8 = arith.constant 0 : index
    %c0_9 = arith.constant 0 : index
    %9 = vector.load %arg4[%c0_8, %c0_9] : memref<72x128xf32, #tpu.memory_space<vmem>>, vector<16x32xf32>
    %10 = arith.addf %8, %9 : vector<16x32xf32>
    %c0_10 = arith.constant 0 : index
    %c0_11 = arith.constant 0 : index
    %c0_12 = arith.constant 0 : index
    %11 = vector.load %arg7[%c0_10, %c0_11, %c0_12] : memref<2x16x128xf32, #tpu.memory_space<vmem>>, vector<1x1x32xf32>
    %12 = vector.shape_cast %11 : vector<1x1x32xf32> to vector<1x32xf32>
    %c0_13 = arith.constant 0 : index
    %c1 = arith.constant 1 : index
    %c0_14 = arith.constant 0 : index
    %13 = vector.load %arg7[%c0_13, %c1, %c0_14] : memref<2x16x128xf32, #tpu.memory_space<vmem>>, vector<1x1x32xf32>
    %14 = vector.shape_cast %13 : vector<1x1x32xf32> to vector<1x32xf32>
    %c0_15 = arith.constant 0 : index
    %c2 = arith.constant 2 : index
    %c0_16 = arith.constant 0 : index
    %15 = vector.load %arg7[%c0_15, %c2, %c0_16] : memref<2x16x128xf32, #tpu.memory_space<vmem>>, vector<1x1x32xf32>
    %16 = vector.shape_cast %15 : vector<1x1x32xf32> to vector<1x32xf32>
    %c0_17 = arith.constant 0 : index
    %c3 = arith.constant 3 : index
    %c0_18 = arith.constant 0 : index
    %17 = vector.load %arg7[%c0_17, %c3, %c0_18] : memref<2x16x128xf32, #tpu.memory_space<vmem>>, vector<1x1x32xf32>
    %18 = vector.shape_cast %17 : vector<1x1x32xf32> to vector<1x32xf32>
    %c0_19 = arith.constant 0 : index
    %c4 = arith.constant 4 : index
    %c0_20 = arith.constant 0 : index
    %19 = vector.load %arg7[%c0_19, %c4, %c0_20] : memref<2x16x128xf32, #tpu.memory_space<vmem>>, vector<1x1x32xf32>
    %20 = vector.shape_cast %19 : vector<1x1x32xf32> to vector<1x32xf32>
    %c0_21 = arith.constant 0 : index
    %c5 = arith.constant 5 : index
    %c0_22 = arith.constant 0 : index
    %21 = vector.load %arg7[%c0_21, %c5, %c0_22] : memref<2x16x128xf32, #tpu.memory_space<vmem>>, vector<1x1x32xf32>
    %22 = vector.shape_cast %21 : vector<1x1x32xf32> to vector<1x32xf32>
    %c0_23 = arith.constant 0 : index
    %c6 = arith.constant 6 : index
    %c0_24 = arith.constant 0 : index
    %23 = vector.load %arg7[%c0_23, %c6, %c0_24] : memref<2x16x128xf32, #tpu.memory_space<vmem>>, vector<1x1x32xf32>
    %24 = vector.shape_cast %23 : vector<1x1x32xf32> to vector<1x32xf32>
    %c0_25 = arith.constant 0 : index
    %c7 = arith.constant 7 : index
    %c0_26 = arith.constant 0 : index
    %25 = vector.load %arg7[%c0_25, %c7, %c0_26] : memref<2x16x128xf32, #tpu.memory_space<vmem>>, vector<1x1x32xf32>
    %26 = vector.shape_cast %25 : vector<1x1x32xf32> to vector<1x32xf32>
    %c0_27 = arith.constant 0 : index
    %c8 = arith.constant 8 : index
    %c0_28 = arith.constant 0 : index
    %27 = vector.load %arg7[%c0_27, %c8, %c0_28] : memref<2x16x128xf32, #tpu.memory_space<vmem>>, vector<1x1x64xf32>
    %28 = vector.shape_cast %27 : vector<1x1x64xf32> to vector<1x64xf32>
    %c0_29 = arith.constant 0 : index
    %c9 = arith.constant 9 : index
    %c0_30 = arith.constant 0 : index
    %29 = vector.load %arg7[%c0_29, %c9, %c0_30] : memref<2x16x128xf32, #tpu.memory_space<vmem>>, vector<1x1x32xf32>
    %30 = vector.shape_cast %29 : vector<1x1x32xf32> to vector<1x32xf32>
    %cst_31 = arith.constant dense<0.000000e+00> : vector<16xf32>
    %31 = vector.multi_reduction <add>, %10, %cst_31 [1] : vector<16x32xf32> to vector<16xf32>
    %32 = vector.shape_cast %31 : vector<16xf32> to vector<16x1xf32>
    %cst_32 = arith.constant 3.200000e+01 : f32
    %33 = vector.broadcast %cst_32 : f32 to vector<16x1xf32>
    %34 = arith.divf %32, %33 : vector<16x1xf32>
    %35 = vector.broadcast %34 : vector<16x1xf32> to vector<16x32xf32>
    %36 = arith.subf %10, %35 : vector<16x32xf32>
    %37 = arith.mulf %36, %36 : vector<16x32xf32>
    %cst_33 = arith.constant dense<0.000000e+00> : vector<16xf32>
    %38 = vector.multi_reduction <add>, %37, %cst_33 [1] : vector<16x32xf32> to vector<16xf32>
    %39 = vector.shape_cast %38 : vector<16xf32> to vector<16x1xf32>
    %cst_34 = arith.constant 3.200000e+01 : f32
    %40 = vector.broadcast %cst_34 : f32 to vector<16x1xf32>
    %41 = arith.divf %39, %40 : vector<16x1xf32>
    %cst_35 = arith.constant 9.99999997E-7 : f32
    %42 = vector.broadcast %cst_35 : f32 to vector<16x1xf32>
    %43 = arith.addf %41, %42 : vector<16x1xf32>
    %44 = math.rsqrt %43 : vector<16x1xf32>
    %45 = vector.broadcast %44 : vector<16x1xf32> to vector<16x32xf32>
    %46 = arith.mulf %36, %45 : vector<16x32xf32>
    %47 = vector.broadcast %12 : vector<1x32xf32> to vector<16x32xf32>
    %48 = arith.mulf %46, %47 : vector<16x32xf32>
    %49 = vector.broadcast %14 : vector<1x32xf32> to vector<16x32xf32>
    %50 = arith.addf %48, %49 : vector<16x32xf32>
    %c0_36 = arith.constant 0 : index
    %c0_37 = arith.constant 0 : index
    %c0_38 = arith.constant 0 : index
    %51 = vector.load %arg6[%c0_36, %c0_37, %c0_38] : memref<2x32x768xf32, #tpu.memory_space<vmem>>, vector<1x32x32xf32>
    %52 = vector.shape_cast %51 : vector<1x32x32xf32> to vector<32x32xf32>
    %c0_39 = arith.constant 0 : index
    %c0_40 = arith.constant 0 : index
    %c128 = arith.constant 128 : index
    %53 = vector.load %arg6[%c0_39, %c0_40, %c128] : memref<2x32x768xf32, #tpu.memory_space<vmem>>, vector<1x32x32xf32>
    %54 = vector.shape_cast %53 : vector<1x32x32xf32> to vector<32x32xf32>
    %c0_41 = arith.constant 0 : index
    %c0_42 = arith.constant 0 : index
    %c256 = arith.constant 256 : index
    %55 = vector.load %arg6[%c0_41, %c0_42, %c256] : memref<2x32x768xf32, #tpu.memory_space<vmem>>, vector<1x32x32xf32>
    %56 = vector.shape_cast %55 : vector<1x32x32xf32> to vector<32x32xf32>
    %c0_43 = arith.constant 0 : index
    %c0_44 = arith.constant 0 : index
    %c384 = arith.constant 384 : index
    %57 = vector.load %arg6[%c0_43, %c0_44, %c384] : memref<2x32x768xf32, #tpu.memory_space<vmem>>, vector<1x32x32xf32>
    %58 = vector.shape_cast %57 : vector<1x32x32xf32> to vector<32x32xf32>
    %cst_45 = arith.constant dense<0.000000e+00> : vector<16x32xf32>
    %59 = tpu.matmul %50, %52, %cst_45 {dimension_numbers = #tpu.dot_dimension_numbers<[1], [0], [0], [1], [0, 0, 1, 1], [], []>} : vector<16x32xf32>, vector<32x32xf32>, vector<16x32xf32> -> vector<16x32xf32>
    %60 = vector.broadcast %20 : vector<1x32xf32> to vector<16x32xf32>
    %61 = arith.addf %59, %60 : vector<16x32xf32>
    %cst_46 = arith.constant dense<0.000000e+00> : vector<16x32xf32>
    %62 = tpu.matmul %50, %54, %cst_46 {dimension_numbers = #tpu.dot_dimension_numbers<[1], [0], [0], [1], [0, 0, 1, 1], [], []>} : vector<16x32xf32>, vector<32x32xf32>, vector<16x32xf32> -> vector<16x32xf32>
    %63 = vector.broadcast %22 : vector<1x32xf32> to vector<16x32xf32>
    %64 = arith.addf %62, %63 : vector<16x32xf32>
    %cst_47 = arith.constant dense<0.000000e+00> : vector<16x32xf32>
    %65 = tpu.matmul %50, %56, %cst_47 {dimension_numbers = #tpu.dot_dimension_numbers<[1], [0], [0], [1], [0, 0, 1, 1], [], []>} : vector<16x32xf32>, vector<32x32xf32>, vector<16x32xf32> -> vector<16x32xf32>
    %66 = vector.broadcast %24 : vector<1x32xf32> to vector<16x32xf32>
    %67 = arith.addf %65, %66 : vector<16x32xf32>
    %cst_48 = arith.constant 0.353553385 : f32
    %68 = vector.broadcast %cst_48 : f32 to vector<16x32xf32>
    %69 = arith.mulf %61, %68 : vector<16x32xf32>
    %70 = vector.extract_strided_slice %64 {offsets = [0, 0], sizes = [16, 8], strides = [1, 1]} : vector<16x32xf32> to vector<16x8xf32>
    %71 = vector.extract_strided_slice %64 {offsets = [0, 8], sizes = [16, 8], strides = [1, 1]} : vector<16x32xf32> to vector<16x8xf32>
    %72 = vector.extract_strided_slice %64 {offsets = [0, 16], sizes = [16, 8], strides = [1, 1]} : vector<16x32xf32> to vector<16x8xf32>
    %73 = vector.extract_strided_slice %64 {offsets = [0, 24], sizes = [16, 8], strides = [1, 1]} : vector<16x32xf32> to vector<16x8xf32>
    %74 = arith.maximumf %70, %71 : vector<16x8xf32>
    %75 = arith.maximumf %72, %73 : vector<16x8xf32>
    %76 = arith.maximumf %74, %75 : vector<16x8xf32>
    %77 = tpu.concatenate %76, %76, %76, %76 in 1 : vector<16x8xf32>, vector<16x8xf32>, vector<16x8xf32>, vector<16x8xf32> -> vector<16x32xf32>
    %78 = arith.minimumf %70, %71 : vector<16x8xf32>
    %79 = arith.minimumf %72, %73 : vector<16x8xf32>
    %80 = arith.minimumf %78, %79 : vector<16x8xf32>
    %81 = tpu.concatenate %80, %80, %80, %80 in 1 : vector<16x8xf32>, vector<16x8xf32>, vector<16x8xf32>, vector<16x8xf32> -> vector<16x32xf32>
    %cst_49 = arith.constant 0.000000e+00 : f32
    %82 = vector.broadcast %cst_49 : f32 to vector<16x32xf32>
    %83 = arith.cmpf oge, %69, %82 : vector<16x32xf32>
    %84 = arith.mulf %69, %77 : vector<16x32xf32>
    %85 = arith.mulf %69, %81 : vector<16x32xf32>
    %86 = arith.select %83, %84, %85 : vector<16x32xi1>, vector<16x32xf32>
    %c0_50 = arith.constant 0 : index
    %c0_51 = arith.constant 0 : index
    %87 = vector.load %arg5[%c0_50, %c0_51] : memref<224x128xf32, #tpu.memory_space<vmem>>, vector<32x128xf32>
    %cst_52 = arith.constant dense<0.000000e+00> : vector<16x128xf32>
    %88 = tpu.matmul %69, %87, %cst_52 {dimension_numbers = #tpu.dot_dimension_numbers<[1], [0], [0], [1], [0, 0, 1, 1], [], []>} : vector<16x32xf32>, vector<32x128xf32>, vector<16x128xf32> -> vector<16x128xf32>
    %cst_53 = arith.constant dense<0.000000e+00> : vector<16x128xf32>
    %89 = tpu.matmul %86, %87, %cst_53 {dimension_numbers = #tpu.dot_dimension_numbers<[1], [0], [0], [1], [0, 0, 1, 1], [], []>} : vector<16x32xf32>, vector<32x128xf32>, vector<16x128xf32> -> vector<16x128xf32>
    %c32 = arith.constant 32 : index
    %c0_54 = arith.constant 0 : index
    %90 = vector.load %arg5[%c32, %c0_54] : memref<224x128xf32, #tpu.memory_space<vmem>>, vector<32x128xf32>
    %cst_55 = arith.constant dense<0.000000e+00> : vector<16x128xf32>
    %91 = tpu.matmul %64, %90, %cst_55 {dimension_numbers = #tpu.dot_dimension_numbers<[1], [0], [0], [1], [0, 0, 1, 1], [], []>} : vector<16x32xf32>, vector<32x128xf32>, vector<16x128xf32> -> vector<16x128xf32>
    %cst_56 = arith.constant dense<0.000000e+00> : vector<16x128xf32>
    %92 = tpu.matmul %67, %87, %cst_56 {dimension_numbers = #tpu.dot_dimension_numbers<[1], [0], [0], [1], [0, 0, 1, 1], [], []>} : vector<16x32xf32>, vector<32x128xf32>, vector<16x128xf32> -> vector<16x128xf32>
    %93 = arith.mulf %88, %91 : vector<16x128xf32>
    %94 = arith.subf %93, %89 : vector<16x128xf32>
    %95 = math.exp %94 : vector<16x128xf32>
    %c64 = arith.constant 64 : index
    %c0_57 = arith.constant 0 : index
    %96 = vector.load %arg5[%c64, %c0_57] : memref<224x128xf32, #tpu.memory_space<vmem>>, vector<128x128xf32>
    %cst_58 = arith.constant dense<0.000000e+00> : vector<16x128xf32>
    %97 = tpu.matmul %95, %96, %cst_58 {dimension_numbers = #tpu.dot_dimension_numbers<[1], [0], [0], [1], [0, 0, 1, 1], [], []>} : vector<16x128xf32>, vector<128x128xf32>, vector<16x128xf32> -> vector<16x128xf32>
    %98 = arith.divf %95, %97 : vector<16x128xf32>
    %99 = arith.mulf %98, %92 : vector<16x128xf32>
    %c192 = arith.constant 192 : index
    %c0_59 = arith.constant 0 : index
    %100 = vector.load %arg5[%c192, %c0_59] : memref<224x128xf32, #tpu.memory_space<vmem>>, vector<32x128xf32>
    %cst_60 = arith.constant dense<0.000000e+00> : vector<16x32xf32>
    %101 = tpu.matmul %99, %100, %cst_60 {dimension_numbers = #tpu.dot_dimension_numbers<[1], [1], [0], [0], [0, 0, 1, 0], [], []>} : vector<16x128xf32>, vector<32x128xf32>, vector<16x32xf32> -> vector<16x32xf32>
    %cst_61 = arith.constant dense<0.000000e+00> : vector<16x32xf32>
    %102 = tpu.matmul %101, %58, %cst_61 {dimension_numbers = #tpu.dot_dimension_numbers<[1], [0], [0], [1], [0, 0, 1, 1], [], []>} : vector<16x32xf32>, vector<32x32xf32>, vector<16x32xf32> -> vector<16x32xf32>
    %103 = vector.broadcast %26 : vector<1x32xf32> to vector<16x32xf32>
    %104 = arith.addf %102, %103 : vector<16x32xf32>
    %105 = arith.addf %10, %104 : vector<16x32xf32>
    %cst_62 = arith.constant dense<0.000000e+00> : vector<16xf32>
    %106 = vector.multi_reduction <add>, %105, %cst_62 [1] : vector<16x32xf32> to vector<16xf32>
    %107 = vector.shape_cast %106 : vector<16xf32> to vector<16x1xf32>
    %cst_63 = arith.constant 3.200000e+01 : f32
    %108 = vector.broadcast %cst_63 : f32 to vector<16x1xf32>
    %109 = arith.divf %107, %108 : vector<16x1xf32>
    %110 = vector.broadcast %109 : vector<16x1xf32> to vector<16x32xf32>
    %111 = arith.subf %105, %110 : vector<16x32xf32>
    %112 = arith.mulf %111, %111 : vector<16x32xf32>
    %cst_64 = arith.constant dense<0.000000e+00> : vector<16xf32>
    %113 = vector.multi_reduction <add>, %112, %cst_64 [1] : vector<16x32xf32> to vector<16xf32>
    %114 = vector.shape_cast %113 : vector<16xf32> to vector<16x1xf32>
    %cst_65 = arith.constant 3.200000e+01 : f32
    %115 = vector.broadcast %cst_65 : f32 to vector<16x1xf32>
    %116 = arith.divf %114, %115 : vector<16x1xf32>
    %cst_66 = arith.constant 9.99999997E-7 : f32
    %117 = vector.broadcast %cst_66 : f32 to vector<16x1xf32>
    %118 = arith.addf %116, %117 : vector<16x1xf32>
    %119 = math.rsqrt %118 : vector<16x1xf32>
    %120 = vector.broadcast %119 : vector<16x1xf32> to vector<16x32xf32>
    %121 = arith.mulf %111, %120 : vector<16x32xf32>
    %122 = vector.broadcast %16 : vector<1x32xf32> to vector<16x32xf32>
    %123 = arith.mulf %121, %122 : vector<16x32xf32>
    %124 = vector.broadcast %18 : vector<1x32xf32> to vector<16x32xf32>
    %125 = arith.addf %123, %124 : vector<16x32xf32>
    %c0_67 = arith.constant 0 : index
    %c0_68 = arith.constant 0 : index
    %c512 = arith.constant 512 : index
    %126 = vector.load %arg6[%c0_67, %c0_68, %c512] : memref<2x32x768xf32, #tpu.memory_space<vmem>>, vector<1x32x64xf32>
    %127 = vector.shape_cast %126 : vector<1x32x64xf32> to vector<32x64xf32>
    %c0_69 = arith.constant 0 : index
    %c0_70 = arith.constant 0 : index
    %c640 = arith.constant 640 : index
    %128 = vector.load %arg6[%c0_69, %c0_70, %c640] : memref<2x32x768xf32, #tpu.memory_space<vmem>>, vector<1x32x64xf32>
    %129 = vector.shape_cast %128 : vector<1x32x64xf32> to vector<32x64xf32>
    %cst_71 = arith.constant dense<0.000000e+00> : vector<16x64xf32>
    %130 = tpu.matmul %125, %127, %cst_71 {dimension_numbers = #tpu.dot_dimension_numbers<[1], [0], [0], [1], [0, 0, 1, 1], [], []>} : vector<16x32xf32>, vector<32x64xf32>, vector<16x64xf32> -> vector<16x64xf32>
    %131 = vector.broadcast %28 : vector<1x64xf32> to vector<16x64xf32>
    %132 = arith.addf %130, %131 : vector<16x64xf32>
    %cst_72 = arith.constant 5.000000e-01 : f32
    %133 = vector.broadcast %cst_72 : f32 to vector<16x64xf32>
    %134 = arith.mulf %133, %132 : vector<16x64xf32>
    %cst_73 = arith.constant 0.707106769 : f32
    %135 = vector.broadcast %cst_73 : f32 to vector<16x64xf32>
    %136 = arith.mulf %132, %135 : vector<16x64xf32>
    %cst_74 = arith.constant 0.000000e+00 : f32
    %137 = vector.broadcast %cst_74 : f32 to vector<16x64xf32>
    %138 = arith.cmpf oge, %136, %137 : vector<16x64xf32>
    %cst_75 = arith.constant 1.000000e+00 : f32
    %cst_76 = arith.constant -1.000000e+00 : f32
    %139 = vector.broadcast %cst_75 : f32 to vector<16x64xf32>
    %140 = vector.broadcast %cst_76 : f32 to vector<16x64xf32>
    %141 = arith.select %138, %139, %140 : vector<16x64xi1>, vector<16x64xf32>
    %142 = math.absf %136 : vector<16x64xf32>
    %cst_77 = arith.constant 0.327591091 : f32
    %143 = vector.broadcast %cst_77 : f32 to vector<16x64xf32>
    %144 = arith.mulf %143, %142 : vector<16x64xf32>
    %cst_78 = arith.constant 1.000000e+00 : f32
    %145 = vector.broadcast %cst_78 : f32 to vector<16x64xf32>
    %146 = arith.addf %145, %144 : vector<16x64xf32>
    %cst_79 = arith.constant 1.000000e+00 : f32
    %147 = vector.broadcast %cst_79 : f32 to vector<16x64xf32>
    %148 = arith.divf %147, %146 : vector<16x64xf32>
    %cst_80 = arith.constant 1.06140542 : f32
    %149 = vector.broadcast %cst_80 : f32 to vector<16x64xf32>
    %150 = arith.mulf %149, %148 : vector<16x64xf32>
    %cst_81 = arith.constant -1.45315206 : f32
    %151 = vector.broadcast %cst_81 : f32 to vector<16x64xf32>
    %152 = arith.addf %150, %151 : vector<16x64xf32>
    %153 = arith.mulf %152, %148 : vector<16x64xf32>
    %cst_82 = arith.constant 1.42141378 : f32
    %154 = vector.broadcast %cst_82 : f32 to vector<16x64xf32>
    %155 = arith.addf %153, %154 : vector<16x64xf32>
    %156 = arith.mulf %155, %148 : vector<16x64xf32>
    %cst_83 = arith.constant -0.284496725 : f32
    %157 = vector.broadcast %cst_83 : f32 to vector<16x64xf32>
    %158 = arith.addf %156, %157 : vector<16x64xf32>
    %159 = arith.mulf %158, %148 : vector<16x64xf32>
    %cst_84 = arith.constant 0.254829586 : f32
    %160 = vector.broadcast %cst_84 : f32 to vector<16x64xf32>
    %161 = arith.addf %159, %160 : vector<16x64xf32>
    %162 = arith.mulf %161, %148 : vector<16x64xf32>
    %cst_85 = arith.constant 0.000000e+00 : f32
    %163 = vector.broadcast %cst_85 : f32 to vector<16x64xf32>
    %164 = arith.subf %163, %142 : vector<16x64xf32>
    %165 = arith.mulf %164, %142 : vector<16x64xf32>
    %166 = math.exp %165 : vector<16x64xf32>
    %167 = arith.mulf %162, %166 : vector<16x64xf32>
    %cst_86 = arith.constant 1.000000e+00 : f32
    %168 = vector.broadcast %cst_86 : f32 to vector<16x64xf32>
    %169 = arith.subf %168, %167 : vector<16x64xf32>
    %170 = arith.mulf %141, %169 : vector<16x64xf32>
    %cst_87 = arith.constant 1.000000e+00 : f32
    %171 = vector.broadcast %cst_87 : f32 to vector<16x64xf32>
    %172 = arith.addf %171, %170 : vector<16x64xf32>
    %173 = arith.mulf %134, %172 : vector<16x64xf32>
    %cst_88 = arith.constant dense<0.000000e+00> : vector<16x32xf32>
    %174 = tpu.matmul %173, %129, %cst_88 {dimension_numbers = #tpu.dot_dimension_numbers<[1], [1], [0], [0], [0, 0, 1, 0], [], []>} : vector<16x64xf32>, vector<32x64xf32>, vector<16x32xf32> -> vector<16x32xf32>
    %175 = vector.broadcast %30 : vector<1x32xf32> to vector<16x32xf32>
    %176 = arith.addf %174, %175 : vector<16x32xf32>
    %177 = arith.addf %105, %176 : vector<16x32xf32>
    %c1_89 = arith.constant 1 : index
    %c0_90 = arith.constant 0 : index
    %c0_91 = arith.constant 0 : index
    %178 = vector.load %arg7[%c1_89, %c0_90, %c0_91] : memref<2x16x128xf32, #tpu.memory_space<vmem>>, vector<1x1x32xf32>
    %179 = vector.shape_cast %178 : vector<1x1x32xf32> to vector<1x32xf32>
    %c1_92 = arith.constant 1 : index
    %c1_93 = arith.constant 1 : index
    %c0_94 = arith.constant 0 : index
    %180 = vector.load %arg7[%c1_92, %c1_93, %c0_94] : memref<2x16x128xf32, #tpu.memory_space<vmem>>, vector<1x1x32xf32>
    %181 = vector.shape_cast %180 : vector<1x1x32xf32> to vector<1x32xf32>
    %c1_95 = arith.constant 1 : index
    %c2_96 = arith.constant 2 : index
    %c0_97 = arith.constant 0 : index
    %182 = vector.load %arg7[%c1_95, %c2_96, %c0_97] : memref<2x16x128xf32, #tpu.memory_space<vmem>>, vector<1x1x32xf32>
    %183 = vector.shape_cast %182 : vector<1x1x32xf32> to vector<1x32xf32>
    %c1_98 = arith.constant 1 : index
    %c3_99 = arith.constant 3 : index
    %c0_100 = arith.constant 0 : index
    %184 = vector.load %arg7[%c1_98, %c3_99, %c0_100] : memref<2x16x128xf32, #tpu.memory_space<vmem>>, vector<1x1x32xf32>
    %185 = vector.shape_cast %184 : vector<1x1x32xf32> to vector<1x32xf32>
    %c1_101 = arith.constant 1 : index
    %c4_102 = arith.constant 4 : index
    %c0_103 = arith.constant 0 : index
    %186 = vector.load %arg7[%c1_101, %c4_102, %c0_103] : memref<2x16x128xf32, #tpu.memory_space<vmem>>, vector<1x1x32xf32>
    %187 = vector.shape_cast %186 : vector<1x1x32xf32> to vector<1x32xf32>
    %c1_104 = arith.constant 1 : index
    %c5_105 = arith.constant 5 : index
    %c0_106 = arith.constant 0 : index
    %188 = vector.load %arg7[%c1_104, %c5_105, %c0_106] : memref<2x16x128xf32, #tpu.memory_space<vmem>>, vector<1x1x32xf32>
    %189 = vector.shape_cast %188 : vector<1x1x32xf32> to vector<1x32xf32>
    %c1_107 = arith.constant 1 : index
    %c6_108 = arith.constant 6 : index
    %c0_109 = arith.constant 0 : index
    %190 = vector.load %arg7[%c1_107, %c6_108, %c0_109] : memref<2x16x128xf32, #tpu.memory_space<vmem>>, vector<1x1x32xf32>
    %191 = vector.shape_cast %190 : vector<1x1x32xf32> to vector<1x32xf32>
    %c1_110 = arith.constant 1 : index
    %c7_111 = arith.constant 7 : index
    %c0_112 = arith.constant 0 : index
    %192 = vector.load %arg7[%c1_110, %c7_111, %c0_112] : memref<2x16x128xf32, #tpu.memory_space<vmem>>, vector<1x1x32xf32>
    %193 = vector.shape_cast %192 : vector<1x1x32xf32> to vector<1x32xf32>
    %c1_113 = arith.constant 1 : index
    %c8_114 = arith.constant 8 : index
    %c0_115 = arith.constant 0 : index
    %194 = vector.load %arg7[%c1_113, %c8_114, %c0_115] : memref<2x16x128xf32, #tpu.memory_space<vmem>>, vector<1x1x64xf32>
    %195 = vector.shape_cast %194 : vector<1x1x64xf32> to vector<1x64xf32>
    %c1_116 = arith.constant 1 : index
    %c9_117 = arith.constant 9 : index
    %c0_118 = arith.constant 0 : index
    %196 = vector.load %arg7[%c1_116, %c9_117, %c0_118] : memref<2x16x128xf32, #tpu.memory_space<vmem>>, vector<1x1x32xf32>
    %197 = vector.shape_cast %196 : vector<1x1x32xf32> to vector<1x32xf32>
    %cst_119 = arith.constant dense<0.000000e+00> : vector<16xf32>
    %198 = vector.multi_reduction <add>, %177, %cst_119 [1] : vector<16x32xf32> to vector<16xf32>
    %199 = vector.shape_cast %198 : vector<16xf32> to vector<16x1xf32>
    %cst_120 = arith.constant 3.200000e+01 : f32
    %200 = vector.broadcast %cst_120 : f32 to vector<16x1xf32>
    %201 = arith.divf %199, %200 : vector<16x1xf32>
    %202 = vector.broadcast %201 : vector<16x1xf32> to vector<16x32xf32>
    %203 = arith.subf %177, %202 : vector<16x32xf32>
    %204 = arith.mulf %203, %203 : vector<16x32xf32>
    %cst_121 = arith.constant dense<0.000000e+00> : vector<16xf32>
    %205 = vector.multi_reduction <add>, %204, %cst_121 [1] : vector<16x32xf32> to vector<16xf32>
    %206 = vector.shape_cast %205 : vector<16xf32> to vector<16x1xf32>
    %cst_122 = arith.constant 3.200000e+01 : f32
    %207 = vector.broadcast %cst_122 : f32 to vector<16x1xf32>
    %208 = arith.divf %206, %207 : vector<16x1xf32>
    %cst_123 = arith.constant 9.99999997E-7 : f32
    %209 = vector.broadcast %cst_123 : f32 to vector<16x1xf32>
    %210 = arith.addf %208, %209 : vector<16x1xf32>
    %211 = math.rsqrt %210 : vector<16x1xf32>
    %212 = vector.broadcast %211 : vector<16x1xf32> to vector<16x32xf32>
    %213 = arith.mulf %203, %212 : vector<16x32xf32>
    %214 = vector.broadcast %179 : vector<1x32xf32> to vector<16x32xf32>
    %215 = arith.mulf %213, %214 : vector<16x32xf32>
    %216 = vector.broadcast %181 : vector<1x32xf32> to vector<16x32xf32>
    %217 = arith.addf %215, %216 : vector<16x32xf32>
    %c1_124 = arith.constant 1 : index
    %c0_125 = arith.constant 0 : index
    %c0_126 = arith.constant 0 : index
    %218 = vector.load %arg6[%c1_124, %c0_125, %c0_126] : memref<2x32x768xf32, #tpu.memory_space<vmem>>, vector<1x32x32xf32>
    %219 = vector.shape_cast %218 : vector<1x32x32xf32> to vector<32x32xf32>
    %c1_127 = arith.constant 1 : index
    %c0_128 = arith.constant 0 : index
    %c128_129 = arith.constant 128 : index
    %220 = vector.load %arg6[%c1_127, %c0_128, %c128_129] : memref<2x32x768xf32, #tpu.memory_space<vmem>>, vector<1x32x32xf32>
    %221 = vector.shape_cast %220 : vector<1x32x32xf32> to vector<32x32xf32>
    %c1_130 = arith.constant 1 : index
    %c0_131 = arith.constant 0 : index
    %c256_132 = arith.constant 256 : index
    %222 = vector.load %arg6[%c1_130, %c0_131, %c256_132] : memref<2x32x768xf32, #tpu.memory_space<vmem>>, vector<1x32x32xf32>
    %223 = vector.shape_cast %222 : vector<1x32x32xf32> to vector<32x32xf32>
    %c1_133 = arith.constant 1 : index
    %c0_134 = arith.constant 0 : index
    %c384_135 = arith.constant 384 : index
    %224 = vector.load %arg6[%c1_133, %c0_134, %c384_135] : memref<2x32x768xf32, #tpu.memory_space<vmem>>, vector<1x32x32xf32>
    %225 = vector.shape_cast %224 : vector<1x32x32xf32> to vector<32x32xf32>
    %cst_136 = arith.constant dense<0.000000e+00> : vector<16x32xf32>
    %226 = tpu.matmul %217, %219, %cst_136 {dimension_numbers = #tpu.dot_dimension_numbers<[1], [0], [0], [1], [0, 0, 1, 1], [], []>} : vector<16x32xf32>, vector<32x32xf32>, vector<16x32xf32> -> vector<16x32xf32>
    %227 = vector.broadcast %187 : vector<1x32xf32> to vector<16x32xf32>
    %228 = arith.addf %226, %227 : vector<16x32xf32>
    %cst_137 = arith.constant dense<0.000000e+00> : vector<16x32xf32>
    %229 = tpu.matmul %217, %221, %cst_137 {dimension_numbers = #tpu.dot_dimension_numbers<[1], [0], [0], [1], [0, 0, 1, 1], [], []>} : vector<16x32xf32>, vector<32x32xf32>, vector<16x32xf32> -> vector<16x32xf32>
    %230 = vector.broadcast %189 : vector<1x32xf32> to vector<16x32xf32>
    %231 = arith.addf %229, %230 : vector<16x32xf32>
    %cst_138 = arith.constant dense<0.000000e+00> : vector<16x32xf32>
    %232 = tpu.matmul %217, %223, %cst_138 {dimension_numbers = #tpu.dot_dimension_numbers<[1], [0], [0], [1], [0, 0, 1, 1], [], []>} : vector<16x32xf32>, vector<32x32xf32>, vector<16x32xf32> -> vector<16x32xf32>
    %233 = vector.broadcast %191 : vector<1x32xf32> to vector<16x32xf32>
    %234 = arith.addf %232, %233 : vector<16x32xf32>
    %cst_139 = arith.constant 0.353553385 : f32
    %235 = vector.broadcast %cst_139 : f32 to vector<16x32xf32>
    %236 = arith.mulf %228, %235 : vector<16x32xf32>
    %237 = vector.extract_strided_slice %231 {offsets = [0, 0], sizes = [16, 8], strides = [1, 1]} : vector<16x32xf32> to vector<16x8xf32>
    %238 = vector.extract_strided_slice %231 {offsets = [0, 8], sizes = [16, 8], strides = [1, 1]} : vector<16x32xf32> to vector<16x8xf32>
    %239 = vector.extract_strided_slice %231 {offsets = [0, 16], sizes = [16, 8], strides = [1, 1]} : vector<16x32xf32> to vector<16x8xf32>
    %240 = vector.extract_strided_slice %231 {offsets = [0, 24], sizes = [16, 8], strides = [1, 1]} : vector<16x32xf32> to vector<16x8xf32>
    %241 = arith.maximumf %237, %238 : vector<16x8xf32>
    %242 = arith.maximumf %239, %240 : vector<16x8xf32>
    %243 = arith.maximumf %241, %242 : vector<16x8xf32>
    %244 = tpu.concatenate %243, %243, %243, %243 in 1 : vector<16x8xf32>, vector<16x8xf32>, vector<16x8xf32>, vector<16x8xf32> -> vector<16x32xf32>
    %245 = arith.minimumf %237, %238 : vector<16x8xf32>
    %246 = arith.minimumf %239, %240 : vector<16x8xf32>
    %247 = arith.minimumf %245, %246 : vector<16x8xf32>
    %248 = tpu.concatenate %247, %247, %247, %247 in 1 : vector<16x8xf32>, vector<16x8xf32>, vector<16x8xf32>, vector<16x8xf32> -> vector<16x32xf32>
    %cst_140 = arith.constant 0.000000e+00 : f32
    %249 = vector.broadcast %cst_140 : f32 to vector<16x32xf32>
    %250 = arith.cmpf oge, %236, %249 : vector<16x32xf32>
    %251 = arith.mulf %236, %244 : vector<16x32xf32>
    %252 = arith.mulf %236, %248 : vector<16x32xf32>
    %253 = arith.select %250, %251, %252 : vector<16x32xi1>, vector<16x32xf32>
    %c0_141 = arith.constant 0 : index
    %c0_142 = arith.constant 0 : index
    %254 = vector.load %arg5[%c0_141, %c0_142] : memref<224x128xf32, #tpu.memory_space<vmem>>, vector<32x128xf32>
    %cst_143 = arith.constant dense<0.000000e+00> : vector<16x128xf32>
    %255 = tpu.matmul %236, %254, %cst_143 {dimension_numbers = #tpu.dot_dimension_numbers<[1], [0], [0], [1], [0, 0, 1, 1], [], []>} : vector<16x32xf32>, vector<32x128xf32>, vector<16x128xf32> -> vector<16x128xf32>
    %cst_144 = arith.constant dense<0.000000e+00> : vector<16x128xf32>
    %256 = tpu.matmul %253, %254, %cst_144 {dimension_numbers = #tpu.dot_dimension_numbers<[1], [0], [0], [1], [0, 0, 1, 1], [], []>} : vector<16x32xf32>, vector<32x128xf32>, vector<16x128xf32> -> vector<16x128xf32>
    %c32_145 = arith.constant 32 : index
    %c0_146 = arith.constant 0 : index
    %257 = vector.load %arg5[%c32_145, %c0_146] : memref<224x128xf32, #tpu.memory_space<vmem>>, vector<32x128xf32>
    %cst_147 = arith.constant dense<0.000000e+00> : vector<16x128xf32>
    %258 = tpu.matmul %231, %257, %cst_147 {dimension_numbers = #tpu.dot_dimension_numbers<[1], [0], [0], [1], [0, 0, 1, 1], [], []>} : vector<16x32xf32>, vector<32x128xf32>, vector<16x128xf32> -> vector<16x128xf32>
    %cst_148 = arith.constant dense<0.000000e+00> : vector<16x128xf32>
    %259 = tpu.matmul %234, %254, %cst_148 {dimension_numbers = #tpu.dot_dimension_numbers<[1], [0], [0], [1], [0, 0, 1, 1], [], []>} : vector<16x32xf32>, vector<32x128xf32>, vector<16x128xf32> -> vector<16x128xf32>
    %260 = arith.mulf %255, %258 : vector<16x128xf32>
    %261 = arith.subf %260, %256 : vector<16x128xf32>
    %262 = math.exp %261 : vector<16x128xf32>
    %c64_149 = arith.constant 64 : index
    %c0_150 = arith.constant 0 : index
    %263 = vector.load %arg5[%c64_149, %c0_150] : memref<224x128xf32, #tpu.memory_space<vmem>>, vector<128x128xf32>
    %cst_151 = arith.constant dense<0.000000e+00> : vector<16x128xf32>
    %264 = tpu.matmul %262, %263, %cst_151 {dimension_numbers = #tpu.dot_dimension_numbers<[1], [0], [0], [1], [0, 0, 1, 1], [], []>} : vector<16x128xf32>, vector<128x128xf32>, vector<16x128xf32> -> vector<16x128xf32>
    %265 = arith.divf %262, %264 : vector<16x128xf32>
    %266 = arith.mulf %265, %259 : vector<16x128xf32>
    %c192_152 = arith.constant 192 : index
    %c0_153 = arith.constant 0 : index
    %267 = vector.load %arg5[%c192_152, %c0_153] : memref<224x128xf32, #tpu.memory_space<vmem>>, vector<32x128xf32>
    %cst_154 = arith.constant dense<0.000000e+00> : vector<16x32xf32>
    %268 = tpu.matmul %266, %267, %cst_154 {dimension_numbers = #tpu.dot_dimension_numbers<[1], [1], [0], [0], [0, 0, 1, 0], [], []>} : vector<16x128xf32>, vector<32x128xf32>, vector<16x32xf32> -> vector<16x32xf32>
    %cst_155 = arith.constant dense<0.000000e+00> : vector<16x32xf32>
    %269 = tpu.matmul %268, %225, %cst_155 {dimension_numbers = #tpu.dot_dimension_numbers<[1], [0], [0], [1], [0, 0, 1, 1], [], []>} : vector<16x32xf32>, vector<32x32xf32>, vector<16x32xf32> -> vector<16x32xf32>
    %270 = vector.broadcast %193 : vector<1x32xf32> to vector<16x32xf32>
    %271 = arith.addf %269, %270 : vector<16x32xf32>
    %272 = arith.addf %177, %271 : vector<16x32xf32>
    %cst_156 = arith.constant dense<0.000000e+00> : vector<16xf32>
    %273 = vector.multi_reduction <add>, %272, %cst_156 [1] : vector<16x32xf32> to vector<16xf32>
    %274 = vector.shape_cast %273 : vector<16xf32> to vector<16x1xf32>
    %cst_157 = arith.constant 3.200000e+01 : f32
    %275 = vector.broadcast %cst_157 : f32 to vector<16x1xf32>
    %276 = arith.divf %274, %275 : vector<16x1xf32>
    %277 = vector.broadcast %276 : vector<16x1xf32> to vector<16x32xf32>
    %278 = arith.subf %272, %277 : vector<16x32xf32>
    %279 = arith.mulf %278, %278 : vector<16x32xf32>
    %cst_158 = arith.constant dense<0.000000e+00> : vector<16xf32>
    %280 = vector.multi_reduction <add>, %279, %cst_158 [1] : vector<16x32xf32> to vector<16xf32>
    %281 = vector.shape_cast %280 : vector<16xf32> to vector<16x1xf32>
    %cst_159 = arith.constant 3.200000e+01 : f32
    %282 = vector.broadcast %cst_159 : f32 to vector<16x1xf32>
    %283 = arith.divf %281, %282 : vector<16x1xf32>
    %cst_160 = arith.constant 9.99999997E-7 : f32
    %284 = vector.broadcast %cst_160 : f32 to vector<16x1xf32>
    %285 = arith.addf %283, %284 : vector<16x1xf32>
    %286 = math.rsqrt %285 : vector<16x1xf32>
    %287 = vector.broadcast %286 : vector<16x1xf32> to vector<16x32xf32>
    %288 = arith.mulf %278, %287 : vector<16x32xf32>
    %289 = vector.broadcast %183 : vector<1x32xf32> to vector<16x32xf32>
    %290 = arith.mulf %288, %289 : vector<16x32xf32>
    %291 = vector.broadcast %185 : vector<1x32xf32> to vector<16x32xf32>
    %292 = arith.addf %290, %291 : vector<16x32xf32>
    %c1_161 = arith.constant 1 : index
    %c0_162 = arith.constant 0 : index
    %c512_163 = arith.constant 512 : index
    %293 = vector.load %arg6[%c1_161, %c0_162, %c512_163] : memref<2x32x768xf32, #tpu.memory_space<vmem>>, vector<1x32x64xf32>
    %294 = vector.shape_cast %293 : vector<1x32x64xf32> to vector<32x64xf32>
    %c1_164 = arith.constant 1 : index
    %c0_165 = arith.constant 0 : index
    %c640_166 = arith.constant 640 : index
    %295 = vector.load %arg6[%c1_164, %c0_165, %c640_166] : memref<2x32x768xf32, #tpu.memory_space<vmem>>, vector<1x32x64xf32>
    %296 = vector.shape_cast %295 : vector<1x32x64xf32> to vector<32x64xf32>
    %cst_167 = arith.constant dense<0.000000e+00> : vector<16x64xf32>
    %297 = tpu.matmul %292, %294, %cst_167 {dimension_numbers = #tpu.dot_dimension_numbers<[1], [0], [0], [1], [0, 0, 1, 1], [], []>} : vector<16x32xf32>, vector<32x64xf32>, vector<16x64xf32> -> vector<16x64xf32>
    %298 = vector.broadcast %195 : vector<1x64xf32> to vector<16x64xf32>
    %299 = arith.addf %297, %298 : vector<16x64xf32>
    %cst_168 = arith.constant 5.000000e-01 : f32
    %300 = vector.broadcast %cst_168 : f32 to vector<16x64xf32>
    %301 = arith.mulf %300, %299 : vector<16x64xf32>
    %cst_169 = arith.constant 0.707106769 : f32
    %302 = vector.broadcast %cst_169 : f32 to vector<16x64xf32>
    %303 = arith.mulf %299, %302 : vector<16x64xf32>
    %cst_170 = arith.constant 0.000000e+00 : f32
    %304 = vector.broadcast %cst_170 : f32 to vector<16x64xf32>
    %305 = arith.cmpf oge, %303, %304 : vector<16x64xf32>
    %cst_171 = arith.constant 1.000000e+00 : f32
    %cst_172 = arith.constant -1.000000e+00 : f32
    %306 = vector.broadcast %cst_171 : f32 to vector<16x64xf32>
    %307 = vector.broadcast %cst_172 : f32 to vector<16x64xf32>
    %308 = arith.select %305, %306, %307 : vector<16x64xi1>, vector<16x64xf32>
    %309 = math.absf %303 : vector<16x64xf32>
    %cst_173 = arith.constant 0.327591091 : f32
    %310 = vector.broadcast %cst_173 : f32 to vector<16x64xf32>
    %311 = arith.mulf %310, %309 : vector<16x64xf32>
    %cst_174 = arith.constant 1.000000e+00 : f32
    %312 = vector.broadcast %cst_174 : f32 to vector<16x64xf32>
    %313 = arith.addf %312, %311 : vector<16x64xf32>
    %cst_175 = arith.constant 1.000000e+00 : f32
    %314 = vector.broadcast %cst_175 : f32 to vector<16x64xf32>
    %315 = arith.divf %314, %313 : vector<16x64xf32>
    %cst_176 = arith.constant 1.06140542 : f32
    %316 = vector.broadcast %cst_176 : f32 to vector<16x64xf32>
    %317 = arith.mulf %316, %315 : vector<16x64xf32>
    %cst_177 = arith.constant -1.45315206 : f32
    %318 = vector.broadcast %cst_177 : f32 to vector<16x64xf32>
    %319 = arith.addf %317, %318 : vector<16x64xf32>
    %320 = arith.mulf %319, %315 : vector<16x64xf32>
    %cst_178 = arith.constant 1.42141378 : f32
    %321 = vector.broadcast %cst_178 : f32 to vector<16x64xf32>
    %322 = arith.addf %320, %321 : vector<16x64xf32>
    %323 = arith.mulf %322, %315 : vector<16x64xf32>
    %cst_179 = arith.constant -0.284496725 : f32
    %324 = vector.broadcast %cst_179 : f32 to vector<16x64xf32>
    %325 = arith.addf %323, %324 : vector<16x64xf32>
    %326 = arith.mulf %325, %315 : vector<16x64xf32>
    %cst_180 = arith.constant 0.254829586 : f32
    %327 = vector.broadcast %cst_180 : f32 to vector<16x64xf32>
    %328 = arith.addf %326, %327 : vector<16x64xf32>
    %329 = arith.mulf %328, %315 : vector<16x64xf32>
    %cst_181 = arith.constant 0.000000e+00 : f32
    %330 = vector.broadcast %cst_181 : f32 to vector<16x64xf32>
    %331 = arith.subf %330, %309 : vector<16x64xf32>
    %332 = arith.mulf %331, %309 : vector<16x64xf32>
    %333 = math.exp %332 : vector<16x64xf32>
    %334 = arith.mulf %329, %333 : vector<16x64xf32>
    %cst_182 = arith.constant 1.000000e+00 : f32
    %335 = vector.broadcast %cst_182 : f32 to vector<16x64xf32>
    %336 = arith.subf %335, %334 : vector<16x64xf32>
    %337 = arith.mulf %308, %336 : vector<16x64xf32>
    %cst_183 = arith.constant 1.000000e+00 : f32
    %338 = vector.broadcast %cst_183 : f32 to vector<16x64xf32>
    %339 = arith.addf %338, %337 : vector<16x64xf32>
    %340 = arith.mulf %301, %339 : vector<16x64xf32>
    %cst_184 = arith.constant dense<0.000000e+00> : vector<16x32xf32>
    %341 = tpu.matmul %340, %296, %cst_184 {dimension_numbers = #tpu.dot_dimension_numbers<[1], [1], [0], [0], [0, 0, 1, 0], [], []>} : vector<16x64xf32>, vector<32x64xf32>, vector<16x32xf32> -> vector<16x32xf32>
    %342 = vector.broadcast %197 : vector<1x32xf32> to vector<16x32xf32>
    %343 = arith.addf %341, %342 : vector<16x32xf32>
    %344 = arith.addf %272, %343 : vector<16x32xf32>
    %c34 = arith.constant 34 : index
    %c0_185 = arith.constant 0 : index
    %345 = vector.load %arg4[%c34, %c0_185] : memref<72x128xf32, #tpu.memory_space<vmem>>, vector<1x32xf32>
    %c35 = arith.constant 35 : index
    %c0_186 = arith.constant 0 : index
    %346 = vector.load %arg4[%c35, %c0_186] : memref<72x128xf32, #tpu.memory_space<vmem>>, vector<1x32xf32>
    %cst_187 = arith.constant dense<0.000000e+00> : vector<16xf32>
    %347 = vector.multi_reduction <add>, %344, %cst_187 [1] : vector<16x32xf32> to vector<16xf32>
    %348 = vector.shape_cast %347 : vector<16xf32> to vector<16x1xf32>
    %cst_188 = arith.constant 3.200000e+01 : f32
    %349 = vector.broadcast %cst_188 : f32 to vector<16x1xf32>
    %350 = arith.divf %348, %349 : vector<16x1xf32>
    %351 = vector.broadcast %350 : vector<16x1xf32> to vector<16x32xf32>
    %352 = arith.subf %344, %351 : vector<16x32xf32>
    %353 = arith.mulf %352, %352 : vector<16x32xf32>
    %cst_189 = arith.constant dense<0.000000e+00> : vector<16xf32>
    %354 = vector.multi_reduction <add>, %353, %cst_189 [1] : vector<16x32xf32> to vector<16xf32>
    %355 = vector.shape_cast %354 : vector<16xf32> to vector<16x1xf32>
    %cst_190 = arith.constant 3.200000e+01 : f32
    %356 = vector.broadcast %cst_190 : f32 to vector<16x1xf32>
    %357 = arith.divf %355, %356 : vector<16x1xf32>
    %cst_191 = arith.constant 9.99999997E-7 : f32
    %358 = vector.broadcast %cst_191 : f32 to vector<16x1xf32>
    %359 = arith.addf %357, %358 : vector<16x1xf32>
    %360 = math.rsqrt %359 : vector<16x1xf32>
    %361 = vector.broadcast %360 : vector<16x1xf32> to vector<16x32xf32>
    %362 = arith.mulf %352, %361 : vector<16x32xf32>
    %363 = vector.broadcast %345 : vector<1x32xf32> to vector<16x32xf32>
    %364 = arith.mulf %362, %363 : vector<16x32xf32>
    %365 = vector.broadcast %346 : vector<1x32xf32> to vector<16x32xf32>
    %366 = arith.addf %364, %365 : vector<16x32xf32>
    %c32_192 = arith.constant 32 : index
    %c0_193 = arith.constant 0 : index
    %367 = vector.load %arg4[%c32_192, %c0_193] : memref<72x128xf32, #tpu.memory_space<vmem>>, vector<1x32xf32>
    %368 = vector.broadcast %3 : vector<16x1xf32> to vector<16x32xf32>
    %369 = arith.mulf %368, %366 : vector<16x32xf32>
    %cst_194 = arith.constant 1.000000e+00 : f32
    %370 = vector.broadcast %cst_194 : f32 to vector<16x1xf32>
    %371 = arith.subf %370, %3 : vector<16x1xf32>
    %372 = vector.broadcast %371 : vector<16x1xf32> to vector<16x32xf32>
    %373 = vector.broadcast %367 : vector<1x32xf32> to vector<16x32xf32>
    %374 = arith.mulf %372, %373 : vector<16x32xf32>
    %375 = arith.addf %369, %374 : vector<16x32xf32>
    %c16 = arith.constant 16 : index
    %c0_195 = arith.constant 0 : index
    %376 = vector.load %arg4[%c16, %c0_195] : memref<72x128xf32, #tpu.memory_space<vmem>>, vector<16x32xf32>
    %377 = arith.addf %375, %376 : vector<16x32xf32>
    %c0_196 = arith.constant 0 : index
    %c0_197 = arith.constant 0 : index
    %c0_198 = arith.constant 0 : index
    %378 = vector.load %arg9[%c0_196, %c0_197, %c0_198] : memref<2x16x128xf32, #tpu.memory_space<vmem>>, vector<1x1x32xf32>
    %379 = vector.shape_cast %378 : vector<1x1x32xf32> to vector<1x32xf32>
    %c0_199 = arith.constant 0 : index
    %c1_200 = arith.constant 1 : index
    %c0_201 = arith.constant 0 : index
    %380 = vector.load %arg9[%c0_199, %c1_200, %c0_201] : memref<2x16x128xf32, #tpu.memory_space<vmem>>, vector<1x1x32xf32>
    %381 = vector.shape_cast %380 : vector<1x1x32xf32> to vector<1x32xf32>
    %c0_202 = arith.constant 0 : index
    %c2_203 = arith.constant 2 : index
    %c0_204 = arith.constant 0 : index
    %382 = vector.load %arg9[%c0_202, %c2_203, %c0_204] : memref<2x16x128xf32, #tpu.memory_space<vmem>>, vector<1x1x32xf32>
    %383 = vector.shape_cast %382 : vector<1x1x32xf32> to vector<1x32xf32>
    %c0_205 = arith.constant 0 : index
    %c3_206 = arith.constant 3 : index
    %c0_207 = arith.constant 0 : index
    %384 = vector.load %arg9[%c0_205, %c3_206, %c0_207] : memref<2x16x128xf32, #tpu.memory_space<vmem>>, vector<1x1x32xf32>
    %385 = vector.shape_cast %384 : vector<1x1x32xf32> to vector<1x32xf32>
    %c0_208 = arith.constant 0 : index
    %c4_209 = arith.constant 4 : index
    %c0_210 = arith.constant 0 : index
    %386 = vector.load %arg9[%c0_208, %c4_209, %c0_210] : memref<2x16x128xf32, #tpu.memory_space<vmem>>, vector<1x1x32xf32>
    %387 = vector.shape_cast %386 : vector<1x1x32xf32> to vector<1x32xf32>
    %c0_211 = arith.constant 0 : index
    %c5_212 = arith.constant 5 : index
    %c0_213 = arith.constant 0 : index
    %388 = vector.load %arg9[%c0_211, %c5_212, %c0_213] : memref<2x16x128xf32, #tpu.memory_space<vmem>>, vector<1x1x32xf32>
    %389 = vector.shape_cast %388 : vector<1x1x32xf32> to vector<1x32xf32>
    %c0_214 = arith.constant 0 : index
    %c6_215 = arith.constant 6 : index
    %c0_216 = arith.constant 0 : index
    %390 = vector.load %arg9[%c0_214, %c6_215, %c0_216] : memref<2x16x128xf32, #tpu.memory_space<vmem>>, vector<1x1x32xf32>
    %391 = vector.shape_cast %390 : vector<1x1x32xf32> to vector<1x32xf32>
    %c0_217 = arith.constant 0 : index
    %c7_218 = arith.constant 7 : index
    %c0_219 = arith.constant 0 : index
    %392 = vector.load %arg9[%c0_217, %c7_218, %c0_219] : memref<2x16x128xf32, #tpu.memory_space<vmem>>, vector<1x1x32xf32>
    %393 = vector.shape_cast %392 : vector<1x1x32xf32> to vector<1x32xf32>
    %c0_220 = arith.constant 0 : index
    %c8_221 = arith.constant 8 : index
    %c0_222 = arith.constant 0 : index
    %394 = vector.load %arg9[%c0_220, %c8_221, %c0_222] : memref<2x16x128xf32, #tpu.memory_space<vmem>>, vector<1x1x32xf32>
    %395 = vector.shape_cast %394 : vector<1x1x32xf32> to vector<1x32xf32>
    %c0_223 = arith.constant 0 : index
    %c9_224 = arith.constant 9 : index
    %c0_225 = arith.constant 0 : index
    %396 = vector.load %arg9[%c0_223, %c9_224, %c0_225] : memref<2x16x128xf32, #tpu.memory_space<vmem>>, vector<1x1x32xf32>
    %397 = vector.shape_cast %396 : vector<1x1x32xf32> to vector<1x32xf32>
    %c0_226 = arith.constant 0 : index
    %c10 = arith.constant 10 : index
    %c0_227 = arith.constant 0 : index
    %398 = vector.load %arg9[%c0_226, %c10, %c0_227] : memref<2x16x128xf32, #tpu.memory_space<vmem>>, vector<1x1x32xf32>
    %399 = vector.shape_cast %398 : vector<1x1x32xf32> to vector<1x32xf32>
    %c0_228 = arith.constant 0 : index
    %c11 = arith.constant 11 : index
    %c0_229 = arith.constant 0 : index
    %400 = vector.load %arg9[%c0_228, %c11, %c0_229] : memref<2x16x128xf32, #tpu.memory_space<vmem>>, vector<1x1x32xf32>
    %401 = vector.shape_cast %400 : vector<1x1x32xf32> to vector<1x32xf32>
    %c0_230 = arith.constant 0 : index
    %c12 = arith.constant 12 : index
    %c0_231 = arith.constant 0 : index
    %402 = vector.load %arg9[%c0_230, %c12, %c0_231] : memref<2x16x128xf32, #tpu.memory_space<vmem>>, vector<1x1x32xf32>
    %403 = vector.shape_cast %402 : vector<1x1x32xf32> to vector<1x32xf32>
    %c0_232 = arith.constant 0 : index
    %c13 = arith.constant 13 : index
    %c0_233 = arith.constant 0 : index
    %404 = vector.load %arg9[%c0_232, %c13, %c0_233] : memref<2x16x128xf32, #tpu.memory_space<vmem>>, vector<1x1x32xf32>
    %405 = vector.shape_cast %404 : vector<1x1x32xf32> to vector<1x32xf32>
    %c0_234 = arith.constant 0 : index
    %c14 = arith.constant 14 : index
    %c0_235 = arith.constant 0 : index
    %406 = vector.load %arg9[%c0_234, %c14, %c0_235] : memref<2x16x128xf32, #tpu.memory_space<vmem>>, vector<1x1x64xf32>
    %407 = vector.shape_cast %406 : vector<1x1x64xf32> to vector<1x64xf32>
    %c0_236 = arith.constant 0 : index
    %c15 = arith.constant 15 : index
    %c0_237 = arith.constant 0 : index
    %408 = vector.load %arg9[%c0_236, %c15, %c0_237] : memref<2x16x128xf32, #tpu.memory_space<vmem>>, vector<1x1x32xf32>
    %409 = vector.shape_cast %408 : vector<1x1x32xf32> to vector<1x32xf32>
    %cst_238 = arith.constant dense<0.000000e+00> : vector<16xf32>
    %410 = vector.multi_reduction <add>, %8, %cst_238 [1] : vector<16x32xf32> to vector<16xf32>
    %411 = vector.shape_cast %410 : vector<16xf32> to vector<16x1xf32>
    %cst_239 = arith.constant 3.200000e+01 : f32
    %412 = vector.broadcast %cst_239 : f32 to vector<16x1xf32>
    %413 = arith.divf %411, %412 : vector<16x1xf32>
    %414 = vector.broadcast %413 : vector<16x1xf32> to vector<16x32xf32>
    %415 = arith.subf %8, %414 : vector<16x32xf32>
    %416 = arith.mulf %415, %415 : vector<16x32xf32>
    %cst_240 = arith.constant dense<0.000000e+00> : vector<16xf32>
    %417 = vector.multi_reduction <add>, %416, %cst_240 [1] : vector<16x32xf32> to vector<16xf32>
    %418 = vector.shape_cast %417 : vector<16xf32> to vector<16x1xf32>
    %cst_241 = arith.constant 3.200000e+01 : f32
    %419 = vector.broadcast %cst_241 : f32 to vector<16x1xf32>
    %420 = arith.divf %418, %419 : vector<16x1xf32>
    %cst_242 = arith.constant 9.99999997E-7 : f32
    %421 = vector.broadcast %cst_242 : f32 to vector<16x1xf32>
    %422 = arith.addf %420, %421 : vector<16x1xf32>
    %423 = math.rsqrt %422 : vector<16x1xf32>
    %424 = vector.broadcast %423 : vector<16x1xf32> to vector<16x32xf32>
    %425 = arith.mulf %415, %424 : vector<16x32xf32>
    %426 = vector.broadcast %379 : vector<1x32xf32> to vector<16x32xf32>
    %427 = arith.mulf %425, %426 : vector<16x32xf32>
    %428 = vector.broadcast %381 : vector<1x32xf32> to vector<16x32xf32>
    %429 = arith.addf %427, %428 : vector<16x32xf32>
    %c0_243 = arith.constant 0 : index
    %c0_244 = arith.constant 0 : index
    %c0_245 = arith.constant 0 : index
    %430 = vector.load %arg8[%c0_243, %c0_244, %c0_245] : memref<2x32x1280xf32, #tpu.memory_space<vmem>>, vector<1x32x32xf32>
    %431 = vector.shape_cast %430 : vector<1x32x32xf32> to vector<32x32xf32>
    %c0_246 = arith.constant 0 : index
    %c0_247 = arith.constant 0 : index
    %c128_248 = arith.constant 128 : index
    %432 = vector.load %arg8[%c0_246, %c0_247, %c128_248] : memref<2x32x1280xf32, #tpu.memory_space<vmem>>, vector<1x32x32xf32>
    %433 = vector.shape_cast %432 : vector<1x32x32xf32> to vector<32x32xf32>
    %c0_249 = arith.constant 0 : index
    %c0_250 = arith.constant 0 : index
    %c256_251 = arith.constant 256 : index
    %434 = vector.load %arg8[%c0_249, %c0_250, %c256_251] : memref<2x32x1280xf32, #tpu.memory_space<vmem>>, vector<1x32x32xf32>
    %435 = vector.shape_cast %434 : vector<1x32x32xf32> to vector<32x32xf32>
    %c0_252 = arith.constant 0 : index
    %c0_253 = arith.constant 0 : index
    %c384_254 = arith.constant 384 : index
    %436 = vector.load %arg8[%c0_252, %c0_253, %c384_254] : memref<2x32x1280xf32, #tpu.memory_space<vmem>>, vector<1x32x32xf32>
    %437 = vector.shape_cast %436 : vector<1x32x32xf32> to vector<32x32xf32>
    %cst_255 = arith.constant dense<0.000000e+00> : vector<16x32xf32>
    %438 = tpu.matmul %429, %431, %cst_255 {dimension_numbers = #tpu.dot_dimension_numbers<[1], [0], [0], [1], [0, 0, 1, 1], [], []>} : vector<16x32xf32>, vector<32x32xf32>, vector<16x32xf32> -> vector<16x32xf32>
    %439 = vector.broadcast %391 : vector<1x32xf32> to vector<16x32xf32>
    %440 = arith.addf %438, %439 : vector<16x32xf32>
    %cst_256 = arith.constant dense<0.000000e+00> : vector<16x32xf32>
    %441 = tpu.matmul %429, %433, %cst_256 {dimension_numbers = #tpu.dot_dimension_numbers<[1], [0], [0], [1], [0, 0, 1, 1], [], []>} : vector<16x32xf32>, vector<32x32xf32>, vector<16x32xf32> -> vector<16x32xf32>
    %442 = vector.broadcast %393 : vector<1x32xf32> to vector<16x32xf32>
    %443 = arith.addf %441, %442 : vector<16x32xf32>
    %cst_257 = arith.constant dense<0.000000e+00> : vector<16x32xf32>
    %444 = tpu.matmul %429, %435, %cst_257 {dimension_numbers = #tpu.dot_dimension_numbers<[1], [0], [0], [1], [0, 0, 1, 1], [], []>} : vector<16x32xf32>, vector<32x32xf32>, vector<16x32xf32> -> vector<16x32xf32>
    %445 = vector.broadcast %395 : vector<1x32xf32> to vector<16x32xf32>
    %446 = arith.addf %444, %445 : vector<16x32xf32>
    %cst_258 = arith.constant 0.353553385 : f32
    %447 = vector.broadcast %cst_258 : f32 to vector<16x32xf32>
    %448 = arith.mulf %440, %447 : vector<16x32xf32>
    %449 = vector.extract_strided_slice %443 {offsets = [0, 0], sizes = [16, 8], strides = [1, 1]} : vector<16x32xf32> to vector<16x8xf32>
    %450 = vector.extract_strided_slice %443 {offsets = [0, 8], sizes = [16, 8], strides = [1, 1]} : vector<16x32xf32> to vector<16x8xf32>
    %451 = vector.extract_strided_slice %443 {offsets = [0, 16], sizes = [16, 8], strides = [1, 1]} : vector<16x32xf32> to vector<16x8xf32>
    %452 = vector.extract_strided_slice %443 {offsets = [0, 24], sizes = [16, 8], strides = [1, 1]} : vector<16x32xf32> to vector<16x8xf32>
    %453 = arith.maximumf %449, %450 : vector<16x8xf32>
    %454 = arith.maximumf %451, %452 : vector<16x8xf32>
    %455 = arith.maximumf %453, %454 : vector<16x8xf32>
    %456 = tpu.concatenate %455, %455, %455, %455 in 1 : vector<16x8xf32>, vector<16x8xf32>, vector<16x8xf32>, vector<16x8xf32> -> vector<16x32xf32>
    %457 = arith.minimumf %449, %450 : vector<16x8xf32>
    %458 = arith.minimumf %451, %452 : vector<16x8xf32>
    %459 = arith.minimumf %457, %458 : vector<16x8xf32>
    %460 = tpu.concatenate %459, %459, %459, %459 in 1 : vector<16x8xf32>, vector<16x8xf32>, vector<16x8xf32>, vector<16x8xf32> -> vector<16x32xf32>
    %cst_259 = arith.constant 0.000000e+00 : f32
    %461 = vector.broadcast %cst_259 : f32 to vector<16x32xf32>
    %462 = arith.cmpf oge, %448, %461 : vector<16x32xf32>
    %463 = arith.mulf %448, %456 : vector<16x32xf32>
    %464 = arith.mulf %448, %460 : vector<16x32xf32>
    %465 = arith.select %462, %463, %464 : vector<16x32xi1>, vector<16x32xf32>
    %c0_260 = arith.constant 0 : index
    %c0_261 = arith.constant 0 : index
    %466 = vector.load %arg5[%c0_260, %c0_261] : memref<224x128xf32, #tpu.memory_space<vmem>>, vector<32x128xf32>
    %cst_262 = arith.constant dense<0.000000e+00> : vector<16x128xf32>
    %467 = tpu.matmul %448, %466, %cst_262 {dimension_numbers = #tpu.dot_dimension_numbers<[1], [0], [0], [1], [0, 0, 1, 1], [], []>} : vector<16x32xf32>, vector<32x128xf32>, vector<16x128xf32> -> vector<16x128xf32>
    %cst_263 = arith.constant dense<0.000000e+00> : vector<16x128xf32>
    %468 = tpu.matmul %465, %466, %cst_263 {dimension_numbers = #tpu.dot_dimension_numbers<[1], [0], [0], [1], [0, 0, 1, 1], [], []>} : vector<16x32xf32>, vector<32x128xf32>, vector<16x128xf32> -> vector<16x128xf32>
    %c32_264 = arith.constant 32 : index
    %c0_265 = arith.constant 0 : index
    %469 = vector.load %arg5[%c32_264, %c0_265] : memref<224x128xf32, #tpu.memory_space<vmem>>, vector<32x128xf32>
    %cst_266 = arith.constant dense<0.000000e+00> : vector<16x128xf32>
    %470 = tpu.matmul %443, %469, %cst_266 {dimension_numbers = #tpu.dot_dimension_numbers<[1], [0], [0], [1], [0, 0, 1, 1], [], []>} : vector<16x32xf32>, vector<32x128xf32>, vector<16x128xf32> -> vector<16x128xf32>
    %cst_267 = arith.constant dense<0.000000e+00> : vector<16x128xf32>
    %471 = tpu.matmul %446, %466, %cst_267 {dimension_numbers = #tpu.dot_dimension_numbers<[1], [0], [0], [1], [0, 0, 1, 1], [], []>} : vector<16x32xf32>, vector<32x128xf32>, vector<16x128xf32> -> vector<16x128xf32>
    %472 = arith.mulf %467, %470 : vector<16x128xf32>
    %473 = arith.subf %472, %468 : vector<16x128xf32>
    %474 = math.exp %473 : vector<16x128xf32>
    %c64_268 = arith.constant 64 : index
    %c0_269 = arith.constant 0 : index
    %475 = vector.load %arg5[%c64_268, %c0_269] : memref<224x128xf32, #tpu.memory_space<vmem>>, vector<128x128xf32>
    %cst_270 = arith.constant dense<0.000000e+00> : vector<16x128xf32>
    %476 = tpu.matmul %474, %475, %cst_270 {dimension_numbers = #tpu.dot_dimension_numbers<[1], [0], [0], [1], [0, 0, 1, 1], [], []>} : vector<16x128xf32>, vector<128x128xf32>, vector<16x128xf32> -> vector<16x128xf32>
    %477 = arith.divf %474, %476 : vector<16x128xf32>
    %478 = arith.mulf %477, %471 : vector<16x128xf32>
    %c192_271 = arith.constant 192 : index
    %c0_272 = arith.constant 0 : index
    %479 = vector.load %arg5[%c192_271, %c0_272] : memref<224x128xf32, #tpu.memory_space<vmem>>, vector<32x128xf32>
    %cst_273 = arith.constant dense<0.000000e+00> : vector<16x32xf32>
    %480 = tpu.matmul %478, %479, %cst_273 {dimension_numbers = #tpu.dot_dimension_numbers<[1], [1], [0], [0], [0, 0, 1, 0], [], []>} : vector<16x128xf32>, vector<32x128xf32>, vector<16x32xf32> -> vector<16x32xf32>
    %cst_274 = arith.constant dense<0.000000e+00> : vector<16x32xf32>
    %481 = tpu.matmul %480, %437, %cst_274 {dimension_numbers = #tpu.dot_dimension_numbers<[1], [0], [0], [1], [0, 0, 1, 1], [], []>} : vector<16x32xf32>, vector<32x32xf32>, vector<16x32xf32> -> vector<16x32xf32>
    %482 = vector.broadcast %397 : vector<1x32xf32> to vector<16x32xf32>
    %483 = arith.addf %481, %482 : vector<16x32xf32>
    %484 = arith.addf %429, %483 : vector<16x32xf32>
    %cst_275 = arith.constant dense<0.000000e+00> : vector<16xf32>
    %485 = vector.multi_reduction <add>, %484, %cst_275 [1] : vector<16x32xf32> to vector<16xf32>
    %486 = vector.shape_cast %485 : vector<16xf32> to vector<16x1xf32>
    %cst_276 = arith.constant 3.200000e+01 : f32
    %487 = vector.broadcast %cst_276 : f32 to vector<16x1xf32>
    %488 = arith.divf %486, %487 : vector<16x1xf32>
    %489 = vector.broadcast %488 : vector<16x1xf32> to vector<16x32xf32>
    %490 = arith.subf %484, %489 : vector<16x32xf32>
    %491 = arith.mulf %490, %490 : vector<16x32xf32>
    %cst_277 = arith.constant dense<0.000000e+00> : vector<16xf32>
    %492 = vector.multi_reduction <add>, %491, %cst_277 [1] : vector<16x32xf32> to vector<16xf32>
    %493 = vector.shape_cast %492 : vector<16xf32> to vector<16x1xf32>
    %cst_278 = arith.constant 3.200000e+01 : f32
    %494 = vector.broadcast %cst_278 : f32 to vector<16x1xf32>
    %495 = arith.divf %493, %494 : vector<16x1xf32>
    %cst_279 = arith.constant 9.99999997E-7 : f32
    %496 = vector.broadcast %cst_279 : f32 to vector<16x1xf32>
    %497 = arith.addf %495, %496 : vector<16x1xf32>
    %498 = math.rsqrt %497 : vector<16x1xf32>
    %499 = vector.broadcast %498 : vector<16x1xf32> to vector<16x32xf32>
    %500 = arith.mulf %490, %499 : vector<16x32xf32>
    %501 = vector.broadcast %383 : vector<1x32xf32> to vector<16x32xf32>
    %502 = arith.mulf %500, %501 : vector<16x32xf32>
    %503 = vector.broadcast %385 : vector<1x32xf32> to vector<16x32xf32>
    %504 = arith.addf %502, %503 : vector<16x32xf32>
    %c0_280 = arith.constant 0 : index
    %c0_281 = arith.constant 0 : index
    %c512_282 = arith.constant 512 : index
    %505 = vector.load %arg8[%c0_280, %c0_281, %c512_282] : memref<2x32x1280xf32, #tpu.memory_space<vmem>>, vector<1x32x32xf32>
    %506 = vector.shape_cast %505 : vector<1x32x32xf32> to vector<32x32xf32>
    %c0_283 = arith.constant 0 : index
    %c0_284 = arith.constant 0 : index
    %c640_285 = arith.constant 640 : index
    %507 = vector.load %arg8[%c0_283, %c0_284, %c640_285] : memref<2x32x1280xf32, #tpu.memory_space<vmem>>, vector<1x32x32xf32>
    %508 = vector.shape_cast %507 : vector<1x32x32xf32> to vector<32x32xf32>
    %c0_286 = arith.constant 0 : index
    %c0_287 = arith.constant 0 : index
    %c768 = arith.constant 768 : index
    %509 = vector.load %arg8[%c0_286, %c0_287, %c768] : memref<2x32x1280xf32, #tpu.memory_space<vmem>>, vector<1x32x32xf32>
    %510 = vector.shape_cast %509 : vector<1x32x32xf32> to vector<32x32xf32>
    %c0_288 = arith.constant 0 : index
    %c0_289 = arith.constant 0 : index
    %c896 = arith.constant 896 : index
    %511 = vector.load %arg8[%c0_288, %c0_289, %c896] : memref<2x32x1280xf32, #tpu.memory_space<vmem>>, vector<1x32x32xf32>
    %512 = vector.shape_cast %511 : vector<1x32x32xf32> to vector<32x32xf32>
    %cst_290 = arith.constant dense<0.000000e+00> : vector<16x32xf32>
    %513 = tpu.matmul %504, %506, %cst_290 {dimension_numbers = #tpu.dot_dimension_numbers<[1], [0], [0], [1], [0, 0, 1, 1], [], []>} : vector<16x32xf32>, vector<32x32xf32>, vector<16x32xf32> -> vector<16x32xf32>
    %514 = vector.broadcast %399 : vector<1x32xf32> to vector<16x32xf32>
    %515 = arith.addf %513, %514 : vector<16x32xf32>
    %cst_291 = arith.constant dense<0.000000e+00> : vector<16x32xf32>
    %516 = tpu.matmul %377, %508, %cst_291 {dimension_numbers = #tpu.dot_dimension_numbers<[1], [0], [0], [1], [0, 0, 1, 1], [], []>} : vector<16x32xf32>, vector<32x32xf32>, vector<16x32xf32> -> vector<16x32xf32>
    %517 = vector.broadcast %401 : vector<1x32xf32> to vector<16x32xf32>
    %518 = arith.addf %516, %517 : vector<16x32xf32>
    %cst_292 = arith.constant dense<0.000000e+00> : vector<16x32xf32>
    %519 = tpu.matmul %377, %510, %cst_292 {dimension_numbers = #tpu.dot_dimension_numbers<[1], [0], [0], [1], [0, 0, 1, 1], [], []>} : vector<16x32xf32>, vector<32x32xf32>, vector<16x32xf32> -> vector<16x32xf32>
    %520 = vector.broadcast %403 : vector<1x32xf32> to vector<16x32xf32>
    %521 = arith.addf %519, %520 : vector<16x32xf32>
    %cst_293 = arith.constant 0.353553385 : f32
    %522 = vector.broadcast %cst_293 : f32 to vector<16x32xf32>
    %523 = arith.mulf %515, %522 : vector<16x32xf32>
    %524 = vector.extract_strided_slice %518 {offsets = [0, 0], sizes = [16, 8], strides = [1, 1]} : vector<16x32xf32> to vector<16x8xf32>
    %525 = vector.extract_strided_slice %518 {offsets = [0, 8], sizes = [16, 8], strides = [1, 1]} : vector<16x32xf32> to vector<16x8xf32>
    %526 = vector.extract_strided_slice %518 {offsets = [0, 16], sizes = [16, 8], strides = [1, 1]} : vector<16x32xf32> to vector<16x8xf32>
    %527 = vector.extract_strided_slice %518 {offsets = [0, 24], sizes = [16, 8], strides = [1, 1]} : vector<16x32xf32> to vector<16x8xf32>
    %528 = arith.maximumf %524, %525 : vector<16x8xf32>
    %529 = arith.maximumf %526, %527 : vector<16x8xf32>
    %530 = arith.maximumf %528, %529 : vector<16x8xf32>
    %531 = tpu.concatenate %530, %530, %530, %530 in 1 : vector<16x8xf32>, vector<16x8xf32>, vector<16x8xf32>, vector<16x8xf32> -> vector<16x32xf32>
    %532 = arith.minimumf %524, %525 : vector<16x8xf32>
    %533 = arith.minimumf %526, %527 : vector<16x8xf32>
    %534 = arith.minimumf %532, %533 : vector<16x8xf32>
    %535 = tpu.concatenate %534, %534, %534, %534 in 1 : vector<16x8xf32>, vector<16x8xf32>, vector<16x8xf32>, vector<16x8xf32> -> vector<16x32xf32>
    %cst_294 = arith.constant 0.000000e+00 : f32
    %536 = vector.broadcast %cst_294 : f32 to vector<16x32xf32>
    %537 = arith.cmpf oge, %523, %536 : vector<16x32xf32>
    %538 = arith.mulf %523, %531 : vector<16x32xf32>
    %539 = arith.mulf %523, %535 : vector<16x32xf32>
    %540 = arith.select %537, %538, %539 : vector<16x32xi1>, vector<16x32xf32>
    %c0_295 = arith.constant 0 : index
    %c0_296 = arith.constant 0 : index
    %541 = vector.load %arg5[%c0_295, %c0_296] : memref<224x128xf32, #tpu.memory_space<vmem>>, vector<32x128xf32>
    %cst_297 = arith.constant dense<0.000000e+00> : vector<16x128xf32>
    %542 = tpu.matmul %523, %541, %cst_297 {dimension_numbers = #tpu.dot_dimension_numbers<[1], [0], [0], [1], [0, 0, 1, 1], [], []>} : vector<16x32xf32>, vector<32x128xf32>, vector<16x128xf32> -> vector<16x128xf32>
    %cst_298 = arith.constant dense<0.000000e+00> : vector<16x128xf32>
    %543 = tpu.matmul %540, %541, %cst_298 {dimension_numbers = #tpu.dot_dimension_numbers<[1], [0], [0], [1], [0, 0, 1, 1], [], []>} : vector<16x32xf32>, vector<32x128xf32>, vector<16x128xf32> -> vector<16x128xf32>
    %c32_299 = arith.constant 32 : index
    %c0_300 = arith.constant 0 : index
    %544 = vector.load %arg5[%c32_299, %c0_300] : memref<224x128xf32, #tpu.memory_space<vmem>>, vector<32x128xf32>
    %cst_301 = arith.constant dense<0.000000e+00> : vector<16x128xf32>
    %545 = tpu.matmul %518, %544, %cst_301 {dimension_numbers = #tpu.dot_dimension_numbers<[1], [0], [0], [1], [0, 0, 1, 1], [], []>} : vector<16x32xf32>, vector<32x128xf32>, vector<16x128xf32> -> vector<16x128xf32>
    %cst_302 = arith.constant dense<0.000000e+00> : vector<16x128xf32>
    %546 = tpu.matmul %521, %541, %cst_302 {dimension_numbers = #tpu.dot_dimension_numbers<[1], [0], [0], [1], [0, 0, 1, 1], [], []>} : vector<16x32xf32>, vector<32x128xf32>, vector<16x128xf32> -> vector<16x128xf32>
    %547 = arith.mulf %542, %545 : vector<16x128xf32>
    %548 = arith.subf %547, %543 : vector<16x128xf32>
    %549 = math.exp %548 : vector<16x128xf32>
    %c64_303 = arith.constant 64 : index
    %c0_304 = arith.constant 0 : index
    %550 = vector.load %arg5[%c64_303, %c0_304] : memref<224x128xf32, #tpu.memory_space<vmem>>, vector<128x128xf32>
    %cst_305 = arith.constant dense<0.000000e+00> : vector<16x128xf32>
    %551 = tpu.matmul %549, %550, %cst_305 {dimension_numbers = #tpu.dot_dimension_numbers<[1], [0], [0], [1], [0, 0, 1, 1], [], []>} : vector<16x128xf32>, vector<128x128xf32>, vector<16x128xf32> -> vector<16x128xf32>
    %552 = arith.divf %549, %551 : vector<16x128xf32>
    %553 = arith.mulf %552, %546 : vector<16x128xf32>
    %c192_306 = arith.constant 192 : index
    %c0_307 = arith.constant 0 : index
    %554 = vector.load %arg5[%c192_306, %c0_307] : memref<224x128xf32, #tpu.memory_space<vmem>>, vector<32x128xf32>
    %cst_308 = arith.constant dense<0.000000e+00> : vector<16x32xf32>
    %555 = tpu.matmul %553, %554, %cst_308 {dimension_numbers = #tpu.dot_dimension_numbers<[1], [1], [0], [0], [0, 0, 1, 0], [], []>} : vector<16x128xf32>, vector<32x128xf32>, vector<16x32xf32> -> vector<16x32xf32>
    %cst_309 = arith.constant dense<0.000000e+00> : vector<16x32xf32>
    %556 = tpu.matmul %555, %512, %cst_309 {dimension_numbers = #tpu.dot_dimension_numbers<[1], [0], [0], [1], [0, 0, 1, 1], [], []>} : vector<16x32xf32>, vector<32x32xf32>, vector<16x32xf32> -> vector<16x32xf32>
    %557 = vector.broadcast %405 : vector<1x32xf32> to vector<16x32xf32>
    %558 = arith.addf %556, %557 : vector<16x32xf32>
    %cst_310 = arith.constant dense<0.000000e+00> : vector<16xf32>
    %559 = vector.multi_reduction <add>, %558, %cst_310 [1] : vector<16x32xf32> to vector<16xf32>
    %560 = vector.shape_cast %559 : vector<16xf32> to vector<16x1xf32>
    %cst_311 = arith.constant 3.200000e+01 : f32
    %561 = vector.broadcast %cst_311 : f32 to vector<16x1xf32>
    %562 = arith.divf %560, %561 : vector<16x1xf32>
    %563 = vector.broadcast %562 : vector<16x1xf32> to vector<16x32xf32>
    %564 = arith.subf %558, %563 : vector<16x32xf32>
    %565 = arith.mulf %564, %564 : vector<16x32xf32>
    %cst_312 = arith.constant dense<0.000000e+00> : vector<16xf32>
    %566 = vector.multi_reduction <add>, %565, %cst_312 [1] : vector<16x32xf32> to vector<16xf32>
    %567 = vector.shape_cast %566 : vector<16xf32> to vector<16x1xf32>
    %cst_313 = arith.constant 3.200000e+01 : f32
    %568 = vector.broadcast %cst_313 : f32 to vector<16x1xf32>
    %569 = arith.divf %567, %568 : vector<16x1xf32>
    %cst_314 = arith.constant 9.99999997E-7 : f32
    %570 = vector.broadcast %cst_314 : f32 to vector<16x1xf32>
    %571 = arith.addf %569, %570 : vector<16x1xf32>
    %572 = math.rsqrt %571 : vector<16x1xf32>
    %573 = vector.broadcast %572 : vector<16x1xf32> to vector<16x32xf32>
    %574 = arith.mulf %564, %573 : vector<16x32xf32>
    %575 = vector.broadcast %387 : vector<1x32xf32> to vector<16x32xf32>
    %576 = arith.mulf %574, %575 : vector<16x32xf32>
    %577 = vector.broadcast %389 : vector<1x32xf32> to vector<16x32xf32>
    %578 = arith.addf %576, %577 : vector<16x32xf32>
    %c0_315 = arith.constant 0 : index
    %c0_316 = arith.constant 0 : index
    %c1024 = arith.constant 1024 : index
    %579 = vector.load %arg8[%c0_315, %c0_316, %c1024] : memref<2x32x1280xf32, #tpu.memory_space<vmem>>, vector<1x32x64xf32>
    %580 = vector.shape_cast %579 : vector<1x32x64xf32> to vector<32x64xf32>
    %c0_317 = arith.constant 0 : index
    %c0_318 = arith.constant 0 : index
    %c1152 = arith.constant 1152 : index
    %581 = vector.load %arg8[%c0_317, %c0_318, %c1152] : memref<2x32x1280xf32, #tpu.memory_space<vmem>>, vector<1x32x64xf32>
    %582 = vector.shape_cast %581 : vector<1x32x64xf32> to vector<32x64xf32>
    %cst_319 = arith.constant dense<0.000000e+00> : vector<16x64xf32>
    %583 = tpu.matmul %578, %580, %cst_319 {dimension_numbers = #tpu.dot_dimension_numbers<[1], [0], [0], [1], [0, 0, 1, 1], [], []>} : vector<16x32xf32>, vector<32x64xf32>, vector<16x64xf32> -> vector<16x64xf32>
    %584 = vector.broadcast %407 : vector<1x64xf32> to vector<16x64xf32>
    %585 = arith.addf %583, %584 : vector<16x64xf32>
    %cst_320 = arith.constant 5.000000e-01 : f32
    %586 = vector.broadcast %cst_320 : f32 to vector<16x64xf32>
    %587 = arith.mulf %586, %585 : vector<16x64xf32>
    %cst_321 = arith.constant 0.707106769 : f32
    %588 = vector.broadcast %cst_321 : f32 to vector<16x64xf32>
    %589 = arith.mulf %585, %588 : vector<16x64xf32>
    %cst_322 = arith.constant 0.000000e+00 : f32
    %590 = vector.broadcast %cst_322 : f32 to vector<16x64xf32>
    %591 = arith.cmpf oge, %589, %590 : vector<16x64xf32>
    %cst_323 = arith.constant 1.000000e+00 : f32
    %cst_324 = arith.constant -1.000000e+00 : f32
    %592 = vector.broadcast %cst_323 : f32 to vector<16x64xf32>
    %593 = vector.broadcast %cst_324 : f32 to vector<16x64xf32>
    %594 = arith.select %591, %592, %593 : vector<16x64xi1>, vector<16x64xf32>
    %595 = math.absf %589 : vector<16x64xf32>
    %cst_325 = arith.constant 0.327591091 : f32
    %596 = vector.broadcast %cst_325 : f32 to vector<16x64xf32>
    %597 = arith.mulf %596, %595 : vector<16x64xf32>
    %cst_326 = arith.constant 1.000000e+00 : f32
    %598 = vector.broadcast %cst_326 : f32 to vector<16x64xf32>
    %599 = arith.addf %598, %597 : vector<16x64xf32>
    %cst_327 = arith.constant 1.000000e+00 : f32
    %600 = vector.broadcast %cst_327 : f32 to vector<16x64xf32>
    %601 = arith.divf %600, %599 : vector<16x64xf32>
    %cst_328 = arith.constant 1.06140542 : f32
    %602 = vector.broadcast %cst_328 : f32 to vector<16x64xf32>
    %603 = arith.mulf %602, %601 : vector<16x64xf32>
    %cst_329 = arith.constant -1.45315206 : f32
    %604 = vector.broadcast %cst_329 : f32 to vector<16x64xf32>
    %605 = arith.addf %603, %604 : vector<16x64xf32>
    %606 = arith.mulf %605, %601 : vector<16x64xf32>
    %cst_330 = arith.constant 1.42141378 : f32
    %607 = vector.broadcast %cst_330 : f32 to vector<16x64xf32>
    %608 = arith.addf %606, %607 : vector<16x64xf32>
    %609 = arith.mulf %608, %601 : vector<16x64xf32>
    %cst_331 = arith.constant -0.284496725 : f32
    %610 = vector.broadcast %cst_331 : f32 to vector<16x64xf32>
    %611 = arith.addf %609, %610 : vector<16x64xf32>
    %612 = arith.mulf %611, %601 : vector<16x64xf32>
    %cst_332 = arith.constant 0.254829586 : f32
    %613 = vector.broadcast %cst_332 : f32 to vector<16x64xf32>
    %614 = arith.addf %612, %613 : vector<16x64xf32>
    %615 = arith.mulf %614, %601 : vector<16x64xf32>
    %cst_333 = arith.constant 0.000000e+00 : f32
    %616 = vector.broadcast %cst_333 : f32 to vector<16x64xf32>
    %617 = arith.subf %616, %595 : vector<16x64xf32>
    %618 = arith.mulf %617, %595 : vector<16x64xf32>
    %619 = math.exp %618 : vector<16x64xf32>
    %620 = arith.mulf %615, %619 : vector<16x64xf32>
    %cst_334 = arith.constant 1.000000e+00 : f32
    %621 = vector.broadcast %cst_334 : f32 to vector<16x64xf32>
    %622 = arith.subf %621, %620 : vector<16x64xf32>
    %623 = arith.mulf %594, %622 : vector<16x64xf32>
    %cst_335 = arith.constant 1.000000e+00 : f32
    %624 = vector.broadcast %cst_335 : f32 to vector<16x64xf32>
    %625 = arith.addf %624, %623 : vector<16x64xf32>
    %626 = arith.mulf %587, %625 : vector<16x64xf32>
    %cst_336 = arith.constant dense<0.000000e+00> : vector<16x32xf32>
    %627 = tpu.matmul %626, %582, %cst_336 {dimension_numbers = #tpu.dot_dimension_numbers<[1], [1], [0], [0], [0, 0, 1, 0], [], []>} : vector<16x64xf32>, vector<32x64xf32>, vector<16x32xf32> -> vector<16x32xf32>
    %628 = vector.broadcast %409 : vector<1x32xf32> to vector<16x32xf32>
    %629 = arith.addf %627, %628 : vector<16x32xf32>
    %630 = arith.addf %558, %629 : vector<16x32xf32>
    %c1_337 = arith.constant 1 : index
    %c0_338 = arith.constant 0 : index
    %c0_339 = arith.constant 0 : index
    %631 = vector.load %arg9[%c1_337, %c0_338, %c0_339] : memref<2x16x128xf32, #tpu.memory_space<vmem>>, vector<1x1x32xf32>
    %632 = vector.shape_cast %631 : vector<1x1x32xf32> to vector<1x32xf32>
    %c1_340 = arith.constant 1 : index
    %c1_341 = arith.constant 1 : index
    %c0_342 = arith.constant 0 : index
    %633 = vector.load %arg9[%c1_340, %c1_341, %c0_342] : memref<2x16x128xf32, #tpu.memory_space<vmem>>, vector<1x1x32xf32>
    %634 = vector.shape_cast %633 : vector<1x1x32xf32> to vector<1x32xf32>
    %c1_343 = arith.constant 1 : index
    %c2_344 = arith.constant 2 : index
    %c0_345 = arith.constant 0 : index
    %635 = vector.load %arg9[%c1_343, %c2_344, %c0_345] : memref<2x16x128xf32, #tpu.memory_space<vmem>>, vector<1x1x32xf32>
    %636 = vector.shape_cast %635 : vector<1x1x32xf32> to vector<1x32xf32>
    %c1_346 = arith.constant 1 : index
    %c3_347 = arith.constant 3 : index
    %c0_348 = arith.constant 0 : index
    %637 = vector.load %arg9[%c1_346, %c3_347, %c0_348] : memref<2x16x128xf32, #tpu.memory_space<vmem>>, vector<1x1x32xf32>
    %638 = vector.shape_cast %637 : vector<1x1x32xf32> to vector<1x32xf32>
    %c1_349 = arith.constant 1 : index
    %c4_350 = arith.constant 4 : index
    %c0_351 = arith.constant 0 : index
    %639 = vector.load %arg9[%c1_349, %c4_350, %c0_351] : memref<2x16x128xf32, #tpu.memory_space<vmem>>, vector<1x1x32xf32>
    %640 = vector.shape_cast %639 : vector<1x1x32xf32> to vector<1x32xf32>
    %c1_352 = arith.constant 1 : index
    %c5_353 = arith.constant 5 : index
    %c0_354 = arith.constant 0 : index
    %641 = vector.load %arg9[%c1_352, %c5_353, %c0_354] : memref<2x16x128xf32, #tpu.memory_space<vmem>>, vector<1x1x32xf32>
    %642 = vector.shape_cast %641 : vector<1x1x32xf32> to vector<1x32xf32>
    %c1_355 = arith.constant 1 : index
    %c6_356 = arith.constant 6 : index
    %c0_357 = arith.constant 0 : index
    %643 = vector.load %arg9[%c1_355, %c6_356, %c0_357] : memref<2x16x128xf32, #tpu.memory_space<vmem>>, vector<1x1x32xf32>
    %644 = vector.shape_cast %643 : vector<1x1x32xf32> to vector<1x32xf32>
    %c1_358 = arith.constant 1 : index
    %c7_359 = arith.constant 7 : index
    %c0_360 = arith.constant 0 : index
    %645 = vector.load %arg9[%c1_358, %c7_359, %c0_360] : memref<2x16x128xf32, #tpu.memory_space<vmem>>, vector<1x1x32xf32>
    %646 = vector.shape_cast %645 : vector<1x1x32xf32> to vector<1x32xf32>
    %c1_361 = arith.constant 1 : index
    %c8_362 = arith.constant 8 : index
    %c0_363 = arith.constant 0 : index
    %647 = vector.load %arg9[%c1_361, %c8_362, %c0_363] : memref<2x16x128xf32, #tpu.memory_space<vmem>>, vector<1x1x32xf32>
    %648 = vector.shape_cast %647 : vector<1x1x32xf32> to vector<1x32xf32>
    %c1_364 = arith.constant 1 : index
    %c9_365 = arith.constant 9 : index
    %c0_366 = arith.constant 0 : index
    %649 = vector.load %arg9[%c1_364, %c9_365, %c0_366] : memref<2x16x128xf32, #tpu.memory_space<vmem>>, vector<1x1x32xf32>
    %650 = vector.shape_cast %649 : vector<1x1x32xf32> to vector<1x32xf32>
    %c1_367 = arith.constant 1 : index
    %c10_368 = arith.constant 10 : index
    %c0_369 = arith.constant 0 : index
    %651 = vector.load %arg9[%c1_367, %c10_368, %c0_369] : memref<2x16x128xf32, #tpu.memory_space<vmem>>, vector<1x1x32xf32>
    %652 = vector.shape_cast %651 : vector<1x1x32xf32> to vector<1x32xf32>
    %c1_370 = arith.constant 1 : index
    %c11_371 = arith.constant 11 : index
    %c0_372 = arith.constant 0 : index
    %653 = vector.load %arg9[%c1_370, %c11_371, %c0_372] : memref<2x16x128xf32, #tpu.memory_space<vmem>>, vector<1x1x32xf32>
    %654 = vector.shape_cast %653 : vector<1x1x32xf32> to vector<1x32xf32>
    %c1_373 = arith.constant 1 : index
    %c12_374 = arith.constant 12 : index
    %c0_375 = arith.constant 0 : index
    %655 = vector.load %arg9[%c1_373, %c12_374, %c0_375] : memref<2x16x128xf32, #tpu.memory_space<vmem>>, vector<1x1x32xf32>
    %656 = vector.shape_cast %655 : vector<1x1x32xf32> to vector<1x32xf32>
    %c1_376 = arith.constant 1 : index
    %c13_377 = arith.constant 13 : index
    %c0_378 = arith.constant 0 : index
    %657 = vector.load %arg9[%c1_376, %c13_377, %c0_378] : memref<2x16x128xf32, #tpu.memory_space<vmem>>, vector<1x1x32xf32>
    %658 = vector.shape_cast %657 : vector<1x1x32xf32> to vector<1x32xf32>
    %c1_379 = arith.constant 1 : index
    %c14_380 = arith.constant 14 : index
    %c0_381 = arith.constant 0 : index
    %659 = vector.load %arg9[%c1_379, %c14_380, %c0_381] : memref<2x16x128xf32, #tpu.memory_space<vmem>>, vector<1x1x64xf32>
    %660 = vector.shape_cast %659 : vector<1x1x64xf32> to vector<1x64xf32>
    %c1_382 = arith.constant 1 : index
    %c15_383 = arith.constant 15 : index
    %c0_384 = arith.constant 0 : index
    %661 = vector.load %arg9[%c1_382, %c15_383, %c0_384] : memref<2x16x128xf32, #tpu.memory_space<vmem>>, vector<1x1x32xf32>
    %662 = vector.shape_cast %661 : vector<1x1x32xf32> to vector<1x32xf32>
    %cst_385 = arith.constant dense<0.000000e+00> : vector<16xf32>
    %663 = vector.multi_reduction <add>, %630, %cst_385 [1] : vector<16x32xf32> to vector<16xf32>
    %664 = vector.shape_cast %663 : vector<16xf32> to vector<16x1xf32>
    %cst_386 = arith.constant 3.200000e+01 : f32
    %665 = vector.broadcast %cst_386 : f32 to vector<16x1xf32>
    %666 = arith.divf %664, %665 : vector<16x1xf32>
    %667 = vector.broadcast %666 : vector<16x1xf32> to vector<16x32xf32>
    %668 = arith.subf %630, %667 : vector<16x32xf32>
    %669 = arith.mulf %668, %668 : vector<16x32xf32>
    %cst_387 = arith.constant dense<0.000000e+00> : vector<16xf32>
    %670 = vector.multi_reduction <add>, %669, %cst_387 [1] : vector<16x32xf32> to vector<16xf32>
    %671 = vector.shape_cast %670 : vector<16xf32> to vector<16x1xf32>
    %cst_388 = arith.constant 3.200000e+01 : f32
    %672 = vector.broadcast %cst_388 : f32 to vector<16x1xf32>
    %673 = arith.divf %671, %672 : vector<16x1xf32>
    %cst_389 = arith.constant 9.99999997E-7 : f32
    %674 = vector.broadcast %cst_389 : f32 to vector<16x1xf32>
    %675 = arith.addf %673, %674 : vector<16x1xf32>
    %676 = math.rsqrt %675 : vector<16x1xf32>
    %677 = vector.broadcast %676 : vector<16x1xf32> to vector<16x32xf32>
    %678 = arith.mulf %668, %677 : vector<16x32xf32>
    %679 = vector.broadcast %632 : vector<1x32xf32> to vector<16x32xf32>
    %680 = arith.mulf %678, %679 : vector<16x32xf32>
    %681 = vector.broadcast %634 : vector<1x32xf32> to vector<16x32xf32>
    %682 = arith.addf %680, %681 : vector<16x32xf32>
    %c1_390 = arith.constant 1 : index
    %c0_391 = arith.constant 0 : index
    %c0_392 = arith.constant 0 : index
    %683 = vector.load %arg8[%c1_390, %c0_391, %c0_392] : memref<2x32x1280xf32, #tpu.memory_space<vmem>>, vector<1x32x32xf32>
    %684 = vector.shape_cast %683 : vector<1x32x32xf32> to vector<32x32xf32>
    %c1_393 = arith.constant 1 : index
    %c0_394 = arith.constant 0 : index
    %c128_395 = arith.constant 128 : index
    %685 = vector.load %arg8[%c1_393, %c0_394, %c128_395] : memref<2x32x1280xf32, #tpu.memory_space<vmem>>, vector<1x32x32xf32>
    %686 = vector.shape_cast %685 : vector<1x32x32xf32> to vector<32x32xf32>
    %c1_396 = arith.constant 1 : index
    %c0_397 = arith.constant 0 : index
    %c256_398 = arith.constant 256 : index
    %687 = vector.load %arg8[%c1_396, %c0_397, %c256_398] : memref<2x32x1280xf32, #tpu.memory_space<vmem>>, vector<1x32x32xf32>
    %688 = vector.shape_cast %687 : vector<1x32x32xf32> to vector<32x32xf32>
    %c1_399 = arith.constant 1 : index
    %c0_400 = arith.constant 0 : index
    %c384_401 = arith.constant 384 : index
    %689 = vector.load %arg8[%c1_399, %c0_400, %c384_401] : memref<2x32x1280xf32, #tpu.memory_space<vmem>>, vector<1x32x32xf32>
    %690 = vector.shape_cast %689 : vector<1x32x32xf32> to vector<32x32xf32>
    %cst_402 = arith.constant dense<0.000000e+00> : vector<16x32xf32>
    %691 = tpu.matmul %682, %684, %cst_402 {dimension_numbers = #tpu.dot_dimension_numbers<[1], [0], [0], [1], [0, 0, 1, 1], [], []>} : vector<16x32xf32>, vector<32x32xf32>, vector<16x32xf32> -> vector<16x32xf32>
    %692 = vector.broadcast %644 : vector<1x32xf32> to vector<16x32xf32>
    %693 = arith.addf %691, %692 : vector<16x32xf32>
    %cst_403 = arith.constant dense<0.000000e+00> : vector<16x32xf32>
    %694 = tpu.matmul %682, %686, %cst_403 {dimension_numbers = #tpu.dot_dimension_numbers<[1], [0], [0], [1], [0, 0, 1, 1], [], []>} : vector<16x32xf32>, vector<32x32xf32>, vector<16x32xf32> -> vector<16x32xf32>
    %695 = vector.broadcast %646 : vector<1x32xf32> to vector<16x32xf32>
    %696 = arith.addf %694, %695 : vector<16x32xf32>
    %cst_404 = arith.constant dense<0.000000e+00> : vector<16x32xf32>
    %697 = tpu.matmul %682, %688, %cst_404 {dimension_numbers = #tpu.dot_dimension_numbers<[1], [0], [0], [1], [0, 0, 1, 1], [], []>} : vector<16x32xf32>, vector<32x32xf32>, vector<16x32xf32> -> vector<16x32xf32>
    %698 = vector.broadcast %648 : vector<1x32xf32> to vector<16x32xf32>
    %699 = arith.addf %697, %698 : vector<16x32xf32>
    %cst_405 = arith.constant 0.353553385 : f32
    %700 = vector.broadcast %cst_405 : f32 to vector<16x32xf32>
    %701 = arith.mulf %693, %700 : vector<16x32xf32>
    %702 = vector.extract_strided_slice %696 {offsets = [0, 0], sizes = [16, 8], strides = [1, 1]} : vector<16x32xf32> to vector<16x8xf32>
    %703 = vector.extract_strided_slice %696 {offsets = [0, 8], sizes = [16, 8], strides = [1, 1]} : vector<16x32xf32> to vector<16x8xf32>
    %704 = vector.extract_strided_slice %696 {offsets = [0, 16], sizes = [16, 8], strides = [1, 1]} : vector<16x32xf32> to vector<16x8xf32>
    %705 = vector.extract_strided_slice %696 {offsets = [0, 24], sizes = [16, 8], strides = [1, 1]} : vector<16x32xf32> to vector<16x8xf32>
    %706 = arith.maximumf %702, %703 : vector<16x8xf32>
    %707 = arith.maximumf %704, %705 : vector<16x8xf32>
    %708 = arith.maximumf %706, %707 : vector<16x8xf32>
    %709 = tpu.concatenate %708, %708, %708, %708 in 1 : vector<16x8xf32>, vector<16x8xf32>, vector<16x8xf32>, vector<16x8xf32> -> vector<16x32xf32>
    %710 = arith.minimumf %702, %703 : vector<16x8xf32>
    %711 = arith.minimumf %704, %705 : vector<16x8xf32>
    %712 = arith.minimumf %710, %711 : vector<16x8xf32>
    %713 = tpu.concatenate %712, %712, %712, %712 in 1 : vector<16x8xf32>, vector<16x8xf32>, vector<16x8xf32>, vector<16x8xf32> -> vector<16x32xf32>
    %cst_406 = arith.constant 0.000000e+00 : f32
    %714 = vector.broadcast %cst_406 : f32 to vector<16x32xf32>
    %715 = arith.cmpf oge, %701, %714 : vector<16x32xf32>
    %716 = arith.mulf %701, %709 : vector<16x32xf32>
    %717 = arith.mulf %701, %713 : vector<16x32xf32>
    %718 = arith.select %715, %716, %717 : vector<16x32xi1>, vector<16x32xf32>
    %c0_407 = arith.constant 0 : index
    %c0_408 = arith.constant 0 : index
    %719 = vector.load %arg5[%c0_407, %c0_408] : memref<224x128xf32, #tpu.memory_space<vmem>>, vector<32x128xf32>
    %cst_409 = arith.constant dense<0.000000e+00> : vector<16x128xf32>
    %720 = tpu.matmul %701, %719, %cst_409 {dimension_numbers = #tpu.dot_dimension_numbers<[1], [0], [0], [1], [0, 0, 1, 1], [], []>} : vector<16x32xf32>, vector<32x128xf32>, vector<16x128xf32> -> vector<16x128xf32>
    %cst_410 = arith.constant dense<0.000000e+00> : vector<16x128xf32>
    %721 = tpu.matmul %718, %719, %cst_410 {dimension_numbers = #tpu.dot_dimension_numbers<[1], [0], [0], [1], [0, 0, 1, 1], [], []>} : vector<16x32xf32>, vector<32x128xf32>, vector<16x128xf32> -> vector<16x128xf32>
    %c32_411 = arith.constant 32 : index
    %c0_412 = arith.constant 0 : index
    %722 = vector.load %arg5[%c32_411, %c0_412] : memref<224x128xf32, #tpu.memory_space<vmem>>, vector<32x128xf32>
    %cst_413 = arith.constant dense<0.000000e+00> : vector<16x128xf32>
    %723 = tpu.matmul %696, %722, %cst_413 {dimension_numbers = #tpu.dot_dimension_numbers<[1], [0], [0], [1], [0, 0, 1, 1], [], []>} : vector<16x32xf32>, vector<32x128xf32>, vector<16x128xf32> -> vector<16x128xf32>
    %cst_414 = arith.constant dense<0.000000e+00> : vector<16x128xf32>
    %724 = tpu.matmul %699, %719, %cst_414 {dimension_numbers = #tpu.dot_dimension_numbers<[1], [0], [0], [1], [0, 0, 1, 1], [], []>} : vector<16x32xf32>, vector<32x128xf32>, vector<16x128xf32> -> vector<16x128xf32>
    %725 = arith.mulf %720, %723 : vector<16x128xf32>
    %726 = arith.subf %725, %721 : vector<16x128xf32>
    %727 = math.exp %726 : vector<16x128xf32>
    %c64_415 = arith.constant 64 : index
    %c0_416 = arith.constant 0 : index
    %728 = vector.load %arg5[%c64_415, %c0_416] : memref<224x128xf32, #tpu.memory_space<vmem>>, vector<128x128xf32>
    %cst_417 = arith.constant dense<0.000000e+00> : vector<16x128xf32>
    %729 = tpu.matmul %727, %728, %cst_417 {dimension_numbers = #tpu.dot_dimension_numbers<[1], [0], [0], [1], [0, 0, 1, 1], [], []>} : vector<16x128xf32>, vector<128x128xf32>, vector<16x128xf32> -> vector<16x128xf32>
    %730 = arith.divf %727, %729 : vector<16x128xf32>
    %731 = arith.mulf %730, %724 : vector<16x128xf32>
    %c192_418 = arith.constant 192 : index
    %c0_419 = arith.constant 0 : index
    %732 = vector.load %arg5[%c192_418, %c0_419] : memref<224x128xf32, #tpu.memory_space<vmem>>, vector<32x128xf32>
    %cst_420 = arith.constant dense<0.000000e+00> : vector<16x32xf32>
    %733 = tpu.matmul %731, %732, %cst_420 {dimension_numbers = #tpu.dot_dimension_numbers<[1], [1], [0], [0], [0, 0, 1, 0], [], []>} : vector<16x128xf32>, vector<32x128xf32>, vector<16x32xf32> -> vector<16x32xf32>
    %cst_421 = arith.constant dense<0.000000e+00> : vector<16x32xf32>
    %734 = tpu.matmul %733, %690, %cst_421 {dimension_numbers = #tpu.dot_dimension_numbers<[1], [0], [0], [1], [0, 0, 1, 1], [], []>} : vector<16x32xf32>, vector<32x32xf32>, vector<16x32xf32> -> vector<16x32xf32>
    %735 = vector.broadcast %650 : vector<1x32xf32> to vector<16x32xf32>
    %736 = arith.addf %734, %735 : vector<16x32xf32>
    %737 = arith.addf %682, %736 : vector<16x32xf32>
    %cst_422 = arith.constant dense<0.000000e+00> : vector<16xf32>
    %738 = vector.multi_reduction <add>, %737, %cst_422 [1] : vector<16x32xf32> to vector<16xf32>
    %739 = vector.shape_cast %738 : vector<16xf32> to vector<16x1xf32>
    %cst_423 = arith.constant 3.200000e+01 : f32
    %740 = vector.broadcast %cst_423 : f32 to vector<16x1xf32>
    %741 = arith.divf %739, %740 : vector<16x1xf32>
    %742 = vector.broadcast %741 : vector<16x1xf32> to vector<16x32xf32>
    %743 = arith.subf %737, %742 : vector<16x32xf32>
    %744 = arith.mulf %743, %743 : vector<16x32xf32>
    %cst_424 = arith.constant dense<0.000000e+00> : vector<16xf32>
    %745 = vector.multi_reduction <add>, %744, %cst_424 [1] : vector<16x32xf32> to vector<16xf32>
    %746 = vector.shape_cast %745 : vector<16xf32> to vector<16x1xf32>
    %cst_425 = arith.constant 3.200000e+01 : f32
    %747 = vector.broadcast %cst_425 : f32 to vector<16x1xf32>
    %748 = arith.divf %746, %747 : vector<16x1xf32>
    %cst_426 = arith.constant 9.99999997E-7 : f32
    %749 = vector.broadcast %cst_426 : f32 to vector<16x1xf32>
    %750 = arith.addf %748, %749 : vector<16x1xf32>
    %751 = math.rsqrt %750 : vector<16x1xf32>
    %752 = vector.broadcast %751 : vector<16x1xf32> to vector<16x32xf32>
    %753 = arith.mulf %743, %752 : vector<16x32xf32>
    %754 = vector.broadcast %636 : vector<1x32xf32> to vector<16x32xf32>
    %755 = arith.mulf %753, %754 : vector<16x32xf32>
    %756 = vector.broadcast %638 : vector<1x32xf32> to vector<16x32xf32>
    %757 = arith.addf %755, %756 : vector<16x32xf32>
    %c1_427 = arith.constant 1 : index
    %c0_428 = arith.constant 0 : index
    %c512_429 = arith.constant 512 : index
    %758 = vector.load %arg8[%c1_427, %c0_428, %c512_429] : memref<2x32x1280xf32, #tpu.memory_space<vmem>>, vector<1x32x32xf32>
    %759 = vector.shape_cast %758 : vector<1x32x32xf32> to vector<32x32xf32>
    %c1_430 = arith.constant 1 : index
    %c0_431 = arith.constant 0 : index
    %c640_432 = arith.constant 640 : index
    %760 = vector.load %arg8[%c1_430, %c0_431, %c640_432] : memref<2x32x1280xf32, #tpu.memory_space<vmem>>, vector<1x32x32xf32>
    %761 = vector.shape_cast %760 : vector<1x32x32xf32> to vector<32x32xf32>
    %c1_433 = arith.constant 1 : index
    %c0_434 = arith.constant 0 : index
    %c768_435 = arith.constant 768 : index
    %762 = vector.load %arg8[%c1_433, %c0_434, %c768_435] : memref<2x32x1280xf32, #tpu.memory_space<vmem>>, vector<1x32x32xf32>
    %763 = vector.shape_cast %762 : vector<1x32x32xf32> to vector<32x32xf32>
    %c1_436 = arith.constant 1 : index
    %c0_437 = arith.constant 0 : index
    %c896_438 = arith.constant 896 : index
    %764 = vector.load %arg8[%c1_436, %c0_437, %c896_438] : memref<2x32x1280xf32, #tpu.memory_space<vmem>>, vector<1x32x32xf32>
    %765 = vector.shape_cast %764 : vector<1x32x32xf32> to vector<32x32xf32>
    %cst_439 = arith.constant dense<0.000000e+00> : vector<16x32xf32>
    %766 = tpu.matmul %757, %759, %cst_439 {dimension_numbers = #tpu.dot_dimension_numbers<[1], [0], [0], [1], [0, 0, 1, 1], [], []>} : vector<16x32xf32>, vector<32x32xf32>, vector<16x32xf32> -> vector<16x32xf32>
    %767 = vector.broadcast %652 : vector<1x32xf32> to vector<16x32xf32>
    %768 = arith.addf %766, %767 : vector<16x32xf32>
    %cst_440 = arith.constant dense<0.000000e+00> : vector<16x32xf32>
    %769 = tpu.matmul %377, %761, %cst_440 {dimension_numbers = #tpu.dot_dimension_numbers<[1], [0], [0], [1], [0, 0, 1, 1], [], []>} : vector<16x32xf32>, vector<32x32xf32>, vector<16x32xf32> -> vector<16x32xf32>
    %770 = vector.broadcast %654 : vector<1x32xf32> to vector<16x32xf32>
    %771 = arith.addf %769, %770 : vector<16x32xf32>
    %cst_441 = arith.constant dense<0.000000e+00> : vector<16x32xf32>
    %772 = tpu.matmul %377, %763, %cst_441 {dimension_numbers = #tpu.dot_dimension_numbers<[1], [0], [0], [1], [0, 0, 1, 1], [], []>} : vector<16x32xf32>, vector<32x32xf32>, vector<16x32xf32> -> vector<16x32xf32>
    %773 = vector.broadcast %656 : vector<1x32xf32> to vector<16x32xf32>
    %774 = arith.addf %772, %773 : vector<16x32xf32>
    %cst_442 = arith.constant 0.353553385 : f32
    %775 = vector.broadcast %cst_442 : f32 to vector<16x32xf32>
    %776 = arith.mulf %768, %775 : vector<16x32xf32>
    %777 = vector.extract_strided_slice %771 {offsets = [0, 0], sizes = [16, 8], strides = [1, 1]} : vector<16x32xf32> to vector<16x8xf32>
    %778 = vector.extract_strided_slice %771 {offsets = [0, 8], sizes = [16, 8], strides = [1, 1]} : vector<16x32xf32> to vector<16x8xf32>
    %779 = vector.extract_strided_slice %771 {offsets = [0, 16], sizes = [16, 8], strides = [1, 1]} : vector<16x32xf32> to vector<16x8xf32>
    %780 = vector.extract_strided_slice %771 {offsets = [0, 24], sizes = [16, 8], strides = [1, 1]} : vector<16x32xf32> to vector<16x8xf32>
    %781 = arith.maximumf %777, %778 : vector<16x8xf32>
    %782 = arith.maximumf %779, %780 : vector<16x8xf32>
    %783 = arith.maximumf %781, %782 : vector<16x8xf32>
    %784 = tpu.concatenate %783, %783, %783, %783 in 1 : vector<16x8xf32>, vector<16x8xf32>, vector<16x8xf32>, vector<16x8xf32> -> vector<16x32xf32>
    %785 = arith.minimumf %777, %778 : vector<16x8xf32>
    %786 = arith.minimumf %779, %780 : vector<16x8xf32>
    %787 = arith.minimumf %785, %786 : vector<16x8xf32>
    %788 = tpu.concatenate %787, %787, %787, %787 in 1 : vector<16x8xf32>, vector<16x8xf32>, vector<16x8xf32>, vector<16x8xf32> -> vector<16x32xf32>
    %cst_443 = arith.constant 0.000000e+00 : f32
    %789 = vector.broadcast %cst_443 : f32 to vector<16x32xf32>
    %790 = arith.cmpf oge, %776, %789 : vector<16x32xf32>
    %791 = arith.mulf %776, %784 : vector<16x32xf32>
    %792 = arith.mulf %776, %788 : vector<16x32xf32>
    %793 = arith.select %790, %791, %792 : vector<16x32xi1>, vector<16x32xf32>
    %c0_444 = arith.constant 0 : index
    %c0_445 = arith.constant 0 : index
    %794 = vector.load %arg5[%c0_444, %c0_445] : memref<224x128xf32, #tpu.memory_space<vmem>>, vector<32x128xf32>
    %cst_446 = arith.constant dense<0.000000e+00> : vector<16x128xf32>
    %795 = tpu.matmul %776, %794, %cst_446 {dimension_numbers = #tpu.dot_dimension_numbers<[1], [0], [0], [1], [0, 0, 1, 1], [], []>} : vector<16x32xf32>, vector<32x128xf32>, vector<16x128xf32> -> vector<16x128xf32>
    %cst_447 = arith.constant dense<0.000000e+00> : vector<16x128xf32>
    %796 = tpu.matmul %793, %794, %cst_447 {dimension_numbers = #tpu.dot_dimension_numbers<[1], [0], [0], [1], [0, 0, 1, 1], [], []>} : vector<16x32xf32>, vector<32x128xf32>, vector<16x128xf32> -> vector<16x128xf32>
    %c32_448 = arith.constant 32 : index
    %c0_449 = arith.constant 0 : index
    %797 = vector.load %arg5[%c32_448, %c0_449] : memref<224x128xf32, #tpu.memory_space<vmem>>, vector<32x128xf32>
    %cst_450 = arith.constant dense<0.000000e+00> : vector<16x128xf32>
    %798 = tpu.matmul %771, %797, %cst_450 {dimension_numbers = #tpu.dot_dimension_numbers<[1], [0], [0], [1], [0, 0, 1, 1], [], []>} : vector<16x32xf32>, vector<32x128xf32>, vector<16x128xf32> -> vector<16x128xf32>
    %cst_451 = arith.constant dense<0.000000e+00> : vector<16x128xf32>
    %799 = tpu.matmul %774, %794, %cst_451 {dimension_numbers = #tpu.dot_dimension_numbers<[1], [0], [0], [1], [0, 0, 1, 1], [], []>} : vector<16x32xf32>, vector<32x128xf32>, vector<16x128xf32> -> vector<16x128xf32>
    %800 = arith.mulf %795, %798 : vector<16x128xf32>
    %801 = arith.subf %800, %796 : vector<16x128xf32>
    %802 = math.exp %801 : vector<16x128xf32>
    %c64_452 = arith.constant 64 : index
    %c0_453 = arith.constant 0 : index
    %803 = vector.load %arg5[%c64_452, %c0_453] : memref<224x128xf32, #tpu.memory_space<vmem>>, vector<128x128xf32>
    %cst_454 = arith.constant dense<0.000000e+00> : vector<16x128xf32>
    %804 = tpu.matmul %802, %803, %cst_454 {dimension_numbers = #tpu.dot_dimension_numbers<[1], [0], [0], [1], [0, 0, 1, 1], [], []>} : vector<16x128xf32>, vector<128x128xf32>, vector<16x128xf32> -> vector<16x128xf32>
    %805 = arith.divf %802, %804 : vector<16x128xf32>
    %806 = arith.mulf %805, %799 : vector<16x128xf32>
    %c192_455 = arith.constant 192 : index
    %c0_456 = arith.constant 0 : index
    %807 = vector.load %arg5[%c192_455, %c0_456] : memref<224x128xf32, #tpu.memory_space<vmem>>, vector<32x128xf32>
    %cst_457 = arith.constant dense<0.000000e+00> : vector<16x32xf32>
    %808 = tpu.matmul %806, %807, %cst_457 {dimension_numbers = #tpu.dot_dimension_numbers<[1], [1], [0], [0], [0, 0, 1, 0], [], []>} : vector<16x128xf32>, vector<32x128xf32>, vector<16x32xf32> -> vector<16x32xf32>
    %cst_458 = arith.constant dense<0.000000e+00> : vector<16x32xf32>
    %809 = tpu.matmul %808, %765, %cst_458 {dimension_numbers = #tpu.dot_dimension_numbers<[1], [0], [0], [1], [0, 0, 1, 1], [], []>} : vector<16x32xf32>, vector<32x32xf32>, vector<16x32xf32> -> vector<16x32xf32>
    %810 = vector.broadcast %658 : vector<1x32xf32> to vector<16x32xf32>
    %811 = arith.addf %809, %810 : vector<16x32xf32>
    %cst_459 = arith.constant dense<0.000000e+00> : vector<16xf32>
    %812 = vector.multi_reduction <add>, %811, %cst_459 [1] : vector<16x32xf32> to vector<16xf32>
    %813 = vector.shape_cast %812 : vector<16xf32> to vector<16x1xf32>
    %cst_460 = arith.constant 3.200000e+01 : f32
    %814 = vector.broadcast %cst_460 : f32 to vector<16x1xf32>
    %815 = arith.divf %813, %814 : vector<16x1xf32>
    %816 = vector.broadcast %815 : vector<16x1xf32> to vector<16x32xf32>
    %817 = arith.subf %811, %816 : vector<16x32xf32>
    %818 = arith.mulf %817, %817 : vector<16x32xf32>
    %cst_461 = arith.constant dense<0.000000e+00> : vector<16xf32>
    %819 = vector.multi_reduction <add>, %818, %cst_461 [1] : vector<16x32xf32> to vector<16xf32>
    %820 = vector.shape_cast %819 : vector<16xf32> to vector<16x1xf32>
    %cst_462 = arith.constant 3.200000e+01 : f32
    %821 = vector.broadcast %cst_462 : f32 to vector<16x1xf32>
    %822 = arith.divf %820, %821 : vector<16x1xf32>
    %cst_463 = arith.constant 9.99999997E-7 : f32
    %823 = vector.broadcast %cst_463 : f32 to vector<16x1xf32>
    %824 = arith.addf %822, %823 : vector<16x1xf32>
    %825 = math.rsqrt %824 : vector<16x1xf32>
    %826 = vector.broadcast %825 : vector<16x1xf32> to vector<16x32xf32>
    %827 = arith.mulf %817, %826 : vector<16x32xf32>
    %828 = vector.broadcast %640 : vector<1x32xf32> to vector<16x32xf32>
    %829 = arith.mulf %827, %828 : vector<16x32xf32>
    %830 = vector.broadcast %642 : vector<1x32xf32> to vector<16x32xf32>
    %831 = arith.addf %829, %830 : vector<16x32xf32>
    %c1_464 = arith.constant 1 : index
    %c0_465 = arith.constant 0 : index
    %c1024_466 = arith.constant 1024 : index
    %832 = vector.load %arg8[%c1_464, %c0_465, %c1024_466] : memref<2x32x1280xf32, #tpu.memory_space<vmem>>, vector<1x32x64xf32>
    %833 = vector.shape_cast %832 : vector<1x32x64xf32> to vector<32x64xf32>
    %c1_467 = arith.constant 1 : index
    %c0_468 = arith.constant 0 : index
    %c1152_469 = arith.constant 1152 : index
    %834 = vector.load %arg8[%c1_467, %c0_468, %c1152_469] : memref<2x32x1280xf32, #tpu.memory_space<vmem>>, vector<1x32x64xf32>
    %835 = vector.shape_cast %834 : vector<1x32x64xf32> to vector<32x64xf32>
    %cst_470 = arith.constant dense<0.000000e+00> : vector<16x64xf32>
    %836 = tpu.matmul %831, %833, %cst_470 {dimension_numbers = #tpu.dot_dimension_numbers<[1], [0], [0], [1], [0, 0, 1, 1], [], []>} : vector<16x32xf32>, vector<32x64xf32>, vector<16x64xf32> -> vector<16x64xf32>
    %837 = vector.broadcast %660 : vector<1x64xf32> to vector<16x64xf32>
    %838 = arith.addf %836, %837 : vector<16x64xf32>
    %cst_471 = arith.constant 5.000000e-01 : f32
    %839 = vector.broadcast %cst_471 : f32 to vector<16x64xf32>
    %840 = arith.mulf %839, %838 : vector<16x64xf32>
    %cst_472 = arith.constant 0.707106769 : f32
    %841 = vector.broadcast %cst_472 : f32 to vector<16x64xf32>
    %842 = arith.mulf %838, %841 : vector<16x64xf32>
    %cst_473 = arith.constant 0.000000e+00 : f32
    %843 = vector.broadcast %cst_473 : f32 to vector<16x64xf32>
    %844 = arith.cmpf oge, %842, %843 : vector<16x64xf32>
    %cst_474 = arith.constant 1.000000e+00 : f32
    %cst_475 = arith.constant -1.000000e+00 : f32
    %845 = vector.broadcast %cst_474 : f32 to vector<16x64xf32>
    %846 = vector.broadcast %cst_475 : f32 to vector<16x64xf32>
    %847 = arith.select %844, %845, %846 : vector<16x64xi1>, vector<16x64xf32>
    %848 = math.absf %842 : vector<16x64xf32>
    %cst_476 = arith.constant 0.327591091 : f32
    %849 = vector.broadcast %cst_476 : f32 to vector<16x64xf32>
    %850 = arith.mulf %849, %848 : vector<16x64xf32>
    %cst_477 = arith.constant 1.000000e+00 : f32
    %851 = vector.broadcast %cst_477 : f32 to vector<16x64xf32>
    %852 = arith.addf %851, %850 : vector<16x64xf32>
    %cst_478 = arith.constant 1.000000e+00 : f32
    %853 = vector.broadcast %cst_478 : f32 to vector<16x64xf32>
    %854 = arith.divf %853, %852 : vector<16x64xf32>
    %cst_479 = arith.constant 1.06140542 : f32
    %855 = vector.broadcast %cst_479 : f32 to vector<16x64xf32>
    %856 = arith.mulf %855, %854 : vector<16x64xf32>
    %cst_480 = arith.constant -1.45315206 : f32
    %857 = vector.broadcast %cst_480 : f32 to vector<16x64xf32>
    %858 = arith.addf %856, %857 : vector<16x64xf32>
    %859 = arith.mulf %858, %854 : vector<16x64xf32>
    %cst_481 = arith.constant 1.42141378 : f32
    %860 = vector.broadcast %cst_481 : f32 to vector<16x64xf32>
    %861 = arith.addf %859, %860 : vector<16x64xf32>
    %862 = arith.mulf %861, %854 : vector<16x64xf32>
    %cst_482 = arith.constant -0.284496725 : f32
    %863 = vector.broadcast %cst_482 : f32 to vector<16x64xf32>
    %864 = arith.addf %862, %863 : vector<16x64xf32>
    %865 = arith.mulf %864, %854 : vector<16x64xf32>
    %cst_483 = arith.constant 0.254829586 : f32
    %866 = vector.broadcast %cst_483 : f32 to vector<16x64xf32>
    %867 = arith.addf %865, %866 : vector<16x64xf32>
    %868 = arith.mulf %867, %854 : vector<16x64xf32>
    %cst_484 = arith.constant 0.000000e+00 : f32
    %869 = vector.broadcast %cst_484 : f32 to vector<16x64xf32>
    %870 = arith.subf %869, %848 : vector<16x64xf32>
    %871 = arith.mulf %870, %848 : vector<16x64xf32>
    %872 = math.exp %871 : vector<16x64xf32>
    %873 = arith.mulf %868, %872 : vector<16x64xf32>
    %cst_485 = arith.constant 1.000000e+00 : f32
    %874 = vector.broadcast %cst_485 : f32 to vector<16x64xf32>
    %875 = arith.subf %874, %873 : vector<16x64xf32>
    %876 = arith.mulf %847, %875 : vector<16x64xf32>
    %cst_486 = arith.constant 1.000000e+00 : f32
    %877 = vector.broadcast %cst_486 : f32 to vector<16x64xf32>
    %878 = arith.addf %877, %876 : vector<16x64xf32>
    %879 = arith.mulf %840, %878 : vector<16x64xf32>
    %cst_487 = arith.constant dense<0.000000e+00> : vector<16x32xf32>
    %880 = tpu.matmul %879, %835, %cst_487 {dimension_numbers = #tpu.dot_dimension_numbers<[1], [1], [0], [0], [0, 0, 1, 0], [], []>} : vector<16x64xf32>, vector<32x64xf32>, vector<16x32xf32> -> vector<16x32xf32>
    %881 = vector.broadcast %662 : vector<1x32xf32> to vector<16x32xf32>
    %882 = arith.addf %880, %881 : vector<16x32xf32>
    %883 = arith.addf %811, %882 : vector<16x32xf32>
    %c36 = arith.constant 36 : index
    %c0_488 = arith.constant 0 : index
    %884 = vector.load %arg4[%c36, %c0_488] : memref<72x128xf32, #tpu.memory_space<vmem>>, vector<1x32xf32>
    %c37 = arith.constant 37 : index
    %c0_489 = arith.constant 0 : index
    %885 = vector.load %arg4[%c37, %c0_489] : memref<72x128xf32, #tpu.memory_space<vmem>>, vector<1x32xf32>
    %cst_490 = arith.constant dense<0.000000e+00> : vector<16xf32>
    %886 = vector.multi_reduction <add>, %883, %cst_490 [1] : vector<16x32xf32> to vector<16xf32>
    %887 = vector.shape_cast %886 : vector<16xf32> to vector<16x1xf32>
    %cst_491 = arith.constant 3.200000e+01 : f32
    %888 = vector.broadcast %cst_491 : f32 to vector<16x1xf32>
    %889 = arith.divf %887, %888 : vector<16x1xf32>
    %890 = vector.broadcast %889 : vector<16x1xf32> to vector<16x32xf32>
    %891 = arith.subf %883, %890 : vector<16x32xf32>
    %892 = arith.mulf %891, %891 : vector<16x32xf32>
    %cst_492 = arith.constant dense<0.000000e+00> : vector<16xf32>
    %893 = vector.multi_reduction <add>, %892, %cst_492 [1] : vector<16x32xf32> to vector<16xf32>
    %894 = vector.shape_cast %893 : vector<16xf32> to vector<16x1xf32>
    %cst_493 = arith.constant 3.200000e+01 : f32
    %895 = vector.broadcast %cst_493 : f32 to vector<16x1xf32>
    %896 = arith.divf %894, %895 : vector<16x1xf32>
    %cst_494 = arith.constant 9.99999997E-7 : f32
    %897 = vector.broadcast %cst_494 : f32 to vector<16x1xf32>
    %898 = arith.addf %896, %897 : vector<16x1xf32>
    %899 = math.rsqrt %898 : vector<16x1xf32>
    %900 = vector.broadcast %899 : vector<16x1xf32> to vector<16x32xf32>
    %901 = arith.mulf %891, %900 : vector<16x32xf32>
    %902 = vector.broadcast %884 : vector<1x32xf32> to vector<16x32xf32>
    %903 = arith.mulf %901, %902 : vector<16x32xf32>
    %904 = vector.broadcast %885 : vector<1x32xf32> to vector<16x32xf32>
    %905 = arith.addf %903, %904 : vector<16x32xf32>
    %c40 = arith.constant 40 : index
    %c0_495 = arith.constant 0 : index
    %906 = vector.load %arg4[%c40, %c0_495] : memref<72x128xf32, #tpu.memory_space<vmem>>, vector<32x128xf32>
    %cst_496 = arith.constant dense<0.000000e+00> : vector<16x128xf32>
    %907 = tpu.matmul %905, %906, %cst_496 {dimension_numbers = #tpu.dot_dimension_numbers<[1], [0], [0], [1], [0, 0, 1, 1], [], []>} : vector<16x32xf32>, vector<32x128xf32>, vector<16x128xf32> -> vector<16x128xf32>
    %c38 = arith.constant 38 : index
    %c0_497 = arith.constant 0 : index
    %908 = vector.load %arg4[%c38, %c0_497] : memref<72x128xf32, #tpu.memory_space<vmem>>, vector<1x128xf32>
    %909 = vector.broadcast %908 : vector<1x128xf32> to vector<16x128xf32>
    %910 = arith.addf %907, %909 : vector<16x128xf32>
    %c0_498 = arith.constant 0 : index
    %c0_499 = arith.constant 0 : index
    %c0_500 = arith.constant 0 : index
    %911 = vector.load %arg10[%c0_498, %c0_499, %c0_500] : memref<1x16x128xf32, #tpu.memory_space<vmem>>, vector<1x16x128xf32>
    %912 = vector.shape_cast %911 : vector<1x16x128xf32> to vector<16x128xf32>
    %913 = vector.shape_cast %910 : vector<16x128xf32> to vector<1x16x128xf32>
    tpu.vector_store %arg10[%c0_498, %c0_499, %c0_500], %913 {strides = array<i32>} : memref<1x16x128xf32, #tpu.memory_space<vmem>>, vector<1x16x128xf32>,
    return
  }
  func.func @transform_0(%arg0: i32) -> (i32, i32, i32) {
    %c0_i32 = arith.constant 0 : i32
    %c0_i32_0 = arith.constant 0 : i32
    %c0_i32_1 = arith.constant 0 : i32
    return %arg0, %c0_i32, %c0_i32_0 : i32, i32, i32
  }
  func.func @transform_1(%arg0: i32) -> (i32, i32, i32) {
    %c0_i32 = arith.constant 0 : i32
    %c0_i32_0 = arith.constant 0 : i32
    %c0_i32_1 = arith.constant 0 : i32
    return %arg0, %c0_i32, %c0_i32_0 : i32, i32, i32
  }
  func.func @transform_2(%arg0: i32) -> (i32, i32) {
    %c0_i32 = arith.constant 0 : i32
    %c0_i32_0 = arith.constant 0 : i32
    %c0_i32_1 = arith.constant 0 : i32
    return %c0_i32, %c0_i32_0 : i32, i32
  }
  func.func @transform_3(%arg0: i32) -> (i32, i32) {
    %c0_i32 = arith.constant 0 : i32
    %c0_i32_0 = arith.constant 0 : i32
    %c0_i32_1 = arith.constant 0 : i32
    return %c0_i32, %c0_i32_0 : i32, i32
  }
  func.func @transform_4(%arg0: i32) -> (i32, i32) {
    %c0_i32 = arith.constant 0 : i32
    %c0_i32_0 = arith.constant 0 : i32
    %c0_i32_1 = arith.constant 0 : i32
    return %c0_i32, %c0_i32_0 : i32, i32
  }
  func.func @transform_5(%arg0: i32) -> (i32, i32, i32) {
    %c0_i32 = arith.constant 0 : i32
    %c0_i32_0 = arith.constant 0 : i32
    %c0_i32_1 = arith.constant 0 : i32
    %c0_i32_2 = arith.constant 0 : i32
    return %c0_i32, %c0_i32_0, %c0_i32_1 : i32, i32, i32
  }
  func.func @transform_6(%arg0: i32) -> (i32, i32, i32) {
    %c0_i32 = arith.constant 0 : i32
    %c0_i32_0 = arith.constant 0 : i32
    %c0_i32_1 = arith.constant 0 : i32
    %c0_i32_2 = arith.constant 0 : i32
    return %c0_i32, %c0_i32_0, %c0_i32_1 : i32, i32, i32
  }
  func.func @transform_7(%arg0: i32) -> (i32, i32, i32) {
    %c0_i32 = arith.constant 0 : i32
    %c0_i32_0 = arith.constant 0 : i32
    %c0_i32_1 = arith.constant 0 : i32
    %c0_i32_2 = arith.constant 0 : i32
    return %c0_i32, %c0_i32_0, %c0_i32_1 : i32, i32, i32
  }
  func.func @transform_8(%arg0: i32) -> (i32, i32, i32) {
    %c0_i32 = arith.constant 0 : i32
    %c0_i32_0 = arith.constant 0 : i32
    %c0_i32_1 = arith.constant 0 : i32
    %c0_i32_2 = arith.constant 0 : i32
    return %c0_i32, %c0_i32_0, %c0_i32_1 : i32, i32, i32
  }
  func.func @transform_9(%arg0: i32) -> (i32, i32, i32) {
    %c0_i32 = arith.constant 0 : i32
    %c0_i32_0 = arith.constant 0 : i32
    %c0_i32_1 = arith.constant 0 : i32
    return %arg0, %c0_i32, %c0_i32_0 : i32, i32, i32
  }
}

</mosaic_0001>

<llo_original>
// kernel: forward.1
$region0: #{forward.1}
  #allocation0 [shape = 'u32[]', space=smem, size = 0x4, offset = 0x4, fixed_abs, tag = 'smem constant byte address 0x4 - core index']
  #allocation1 [shape = 'u32[72,128]{1,0:T(1,128)}', space=vmem, size = 0x9000, scoped, tag = 'internal scratch']
  %s0 = inlined_call_operand.vmem [shape: f32[2,16,64], index: 0, kind: input, shape index: {}]
  %s1 = inlined_call_operand.vmem [shape: f32[2,16,1], index: 1, kind: input, shape index: {}]
  %s2 = inlined_call_operand.vmem [shape: f32[64,32], index: 2, kind: input, shape index: {}]
  %s3 = inlined_call_operand.vmem [shape: f32[72,128], index: 3, kind: input, shape index: {}]
  %s4 = inlined_call_operand.vmem [shape: f32[224,128], index: 4, kind: input, shape index: {}]
  %s5 = inlined_call_operand.vmem [shape: f32[2,32,768], index: 5, kind: input, shape index: {}]
  %s6 = inlined_call_operand.vmem [shape: f32[2,16,128], index: 6, kind: input, shape index: {}]
  %s7 = inlined_call_operand.vmem [shape: f32[2,32,1280], index: 7, kind: input, shape index: {}]
  %s8 = inlined_call_operand.vmem [shape: f32[2,16,128], index: 8, kind: input, shape index: {}]
  %s9 = inlined_call_operand.vmem [shape: f32[2,16,128], index: 9, kind: output, shape index: {}]
  %s10 = sld [smem:[#allocation0]]
  $region69: #{forward.1} parent=0
    _
  %s12 = ssub.s32 1, %s10
  %s13 = scalar_select 0, %s12, %s10
  loop: start=0, step=1, limit=4
  $region2: #{forward.1} parent=0 // loop_pre_header
    _
  $region3: #{forward.1} parent=0 // loop_header
    %s15 = sphi 0, %s19
    %p16 = scmp.ge.s32.totalorder %s15, 4
    %s25 = sphi 0, %s27
    %s28 = sphi 0, %s25
    %s29 = sphi 0, %s28
    %s45 = sphi 0, %s29
    %s51 = sphi 0, %s53
    %s54 = sphi 0, %s51
    %s55 = sphi 0, %s54
    %s71 = sphi 0, %s55
    %s75 = sphi 0, %s75
    %s77 = sphi 0, %s75
    %s78 = sphi 0, %s77
    %s92 = sphi 0, %s78
    %s96 = sphi 0, %s96
    %s98 = sphi 0, %s96
    %s99 = sphi 0, %s98
    %s113 = sphi 0, %s99
    %s117 = sphi 0, %s117
    %s119 = sphi 0, %s117
    %s120 = sphi 0, %s119
    %s134 = sphi 0, %s120
    %s138 = sphi 0, %s138
    %s140 = sphi 0, %s138
    %s141 = sphi 0, %s140
    %s155 = sphi 0, %s141
    %s159 = sphi 0, %s159
    %s161 = sphi 0, %s159
    %s162 = sphi 0, %s161
    %s176 = sphi 0, %s162
    %s180 = sphi 0, %s180
    %s182 = sphi 0, %s180
    %s183 = sphi 0, %s182
    %s197 = sphi 0, %s183
    %s201 = sphi 0, %s201
    %s203 = sphi 0, %s201
    %s204 = sphi 0, %s203
    %s218 = sphi 0, %s204
    %s224 = sphi 0, %s226
    %s227 = sphi 0, %s224
    %s228 = sphi 0, %s227
    %s244 = sphi 0, %s228
  $region4: #{forward.1} parent=0 // loop_header_branch
    %18 = sbr.rel (%p16) target = $region8
  $region5: #{forward.1} parent=0 // loop_body
    %s20 = ssub.s32 %s15, 1
    %s21 = ssub.s32 %s15, 2
    %s22 = sadd.s32 %s15, 1
    %s23 = ssub.s32 %s15, %s22
    %p24 = scmp.eq.s32.totalorder %s23, 0
    %s26 = sadd.s32 %s25, 1
    %s27 = scalar_select %p24, %s25, %s26
    %p30 = pneg %p24
    %p31 = scmp.eq.s32.totalorder %s15, 1
    %p32 = por %p30, %p31
    %p33 = scmp.ne.s32.totalorder %s25, %s28
    %p34 = scmp.eq.s32.totalorder %s15, 0
    %p35 = por %p33, %p34
    %p36 = scmp.ne.s32.totalorder %s25, %s28
    %p37 = scmp.eq.s32.totalorder %s20, 1
    %p38 = por %p36, %p37
    %p39 = scmp.ne.s32.totalorder %s28, %s29
    %p40 = scmp.eq.s32.totalorder %s20, 0
    %p41 = por %p39, %p40
    %p42 = scmp.ne.s32.totalorder %s28, %s29
    %p43 = scmp.eq.s32.totalorder %s21, 1
    %p44 = por %p42, %p43
    %p46 = scmp.ne.s32.totalorder %s29, %s45
    %p47 = scmp.eq.s32.totalorder %s21, 0
    %p48 = por %p46, %p47
    %s49 = ssub.s32 %s15, %s22
    %p50 = scmp.eq.s32.totalorder %s49, 0
    %s52 = sadd.s32 %s51, 1
    %s53 = scalar_select %p50, %s51, %s52
    %p56 = pneg %p50
    %p57 = scmp.eq.s32.totalorder %s15, 1
    %p58 = por %p56, %p57
    %p59 = scmp.ne.s32.totalorder %s51, %s54
    %p60 = scmp.eq.s32.totalorder %s15, 0
    %p61 = por %p59, %p60
    %p62 = scmp.ne.s32.totalorder %s51, %s54
    %p63 = scmp.eq.s32.totalorder %s20, 1
    %p64 = por %p62, %p63
    %p65 = scmp.ne.s32.totalorder %s54, %s55
    %p66 = scmp.eq.s32.totalorder %s20, 0
    %p67 = por %p65, %p66
    %p68 = scmp.ne.s32.totalorder %s54, %s55
    %p69 = scmp.eq.s32.totalorder %s21, 1
    %p70 = por %p68, %p69
    %p72 = scmp.ne.s32.totalorder %s55, %s71
    %p73 = scmp.eq.s32.totalorder %s21, 0
    %p74 = por %p72, %p73
    %s76 = sadd.s32 %s75, 1
    %p79 = scmp.eq.s32.totalorder %s15, 1
    %p80 = scmp.ne.s32.totalorder %s75, %s77
    %p81 = scmp.eq.s32.totalorder %s15, 0
    %p82 = por %p80, %p81
    %p83 = scmp.ne.s32.totalorder %s75, %s77
    %p84 = scmp.eq.s32.totalorder %s20, 1
    %p85 = por %p83, %p84
    %p86 = scmp.ne.s32.totalorder %s77, %s78
    %p87 = scmp.eq.s32.totalorder %s20, 0
    %p88 = por %p86, %p87
    %p89 = scmp.ne.s32.totalorder %s77, %s78
    %p90 = scmp.eq.s32.totalorder %s21, 1
    %p91 = por %p89, %p90
    %p93 = scmp.ne.s32.totalorder %s78, %s92
    %p94 = scmp.eq.s32.totalorder %s21, 0
    %p95 = por %p93, %p94
    %s97 = sadd.s32 %s96, 1
    %p100 = scmp.eq.s32.totalorder %s15, 1
    %p101 = scmp.ne.s32.totalorder %s96, %s98
    %p102 = scmp.eq.s32.totalorder %s15, 0
    %p103 = por %p101, %p102
    %p104 = scmp.ne.s32.totalorder %s96, %s98
    %p105 = scmp.eq.s32.totalorder %s20, 1
    %p106 = por %p104, %p105
    %p107 = scmp.ne.s32.totalorder %s98, %s99
    %p108 = scmp.eq.s32.totalorder %s20, 0
    %p109 = por %p107, %p108
    %p110 = scmp.ne.s32.totalorder %s98, %s99
    %p111 = scmp.eq.s32.totalorder %s21, 1
    %p112 = por %p110, %p111
    %p114 = scmp.ne.s32.totalorder %s99, %s113
    %p115 = scmp.eq.s32.totalorder %s21, 0
    %p116 = por %p114, %p115
    %s118 = sadd.s32 %s117, 1
    %p121 = scmp.eq.s32.totalorder %s15, 1
    %p122 = scmp.ne.s32.totalorder %s117, %s119
    %p123 = scmp.eq.s32.totalorder %s15, 0
    %p124 = por %p122, %p123
    %p125 = scmp.ne.s32.totalorder %s117, %s119
    %p126 = scmp.eq.s32.totalorder %s20, 1
    %p127 = por %p125, %p126
    %p128 = scmp.ne.s32.totalorder %s119, %s120
    %p129 = scmp.eq.s32.totalorder %s20, 0
    %p130 = por %p128, %p129
    %p131 = scmp.ne.s32.totalorder %s119, %s120
    %p132 = scmp.eq.s32.totalorder %s21, 1
    %p133 = por %p131, %p132
    %p135 = scmp.ne.s32.totalorder %s120, %s134
    %p136 = scmp.eq.s32.totalorder %s21, 0
    %p137 = por %p135, %p136
    %s139 = sadd.s32 %s138, 1
    %p142 = scmp.eq.s32.totalorder %s15, 1
    %p143 = scmp.ne.s32.totalorder %s138, %s140
    %p144 = scmp.eq.s32.totalorder %s15, 0
    %p145 = por %p143, %p144
    %p146 = scmp.ne.s32.totalorder %s138, %s140
    %p147 = scmp.eq.s32.totalorder %s20, 1
    %p148 = por %p146, %p147
    %p149 = scmp.ne.s32.totalorder %s140, %s141
    %p150 = scmp.eq.s32.totalorder %s20, 0
    %p151 = por %p149, %p150
    %p152 = scmp.ne.s32.totalorder %s140, %s141
    %p153 = scmp.eq.s32.totalorder %s21, 1
    %p154 = por %p152, %p153
    %p156 = scmp.ne.s32.totalorder %s141, %s155
    %p157 = scmp.eq.s32.totalorder %s21, 0
    %p158 = por %p156, %p157
    %s160 = sadd.s32 %s159, 1
    %p163 = scmp.eq.s32.totalorder %s15, 1
    %p164 = scmp.ne.s32.totalorder %s159, %s161
    %p165 = scmp.eq.s32.totalorder %s15, 0
    %p166 = por %p164, %p165
    %p167 = scmp.ne.s32.totalorder %s159, %s161
    %p168 = scmp.eq.s32.totalorder %s20, 1
    %p169 = por %p167, %p168
    %p170 = scmp.ne.s32.totalorder %s161, %s162
    %p171 = scmp.eq.s32.totalorder %s20, 0
    %p172 = por %p170, %p171
    %p173 = scmp.ne.s32.totalorder %s161, %s162
    %p174 = scmp.eq.s32.totalorder %s21, 1
    %p175 = por %p173, %p174
    %p177 = scmp.ne.s32.totalorder %s162, %s176
    %p178 = scmp.eq.s32.totalorder %s21, 0
    %p179 = por %p177, %p178
    %s181 = sadd.s32 %s180, 1
    %p184 = scmp.eq.s32.totalorder %s15, 1
    %p185 = scmp.ne.s32.totalorder %s180, %s182
    %p186 = scmp.eq.s32.totalorder %s15, 0
    %p187 = por %p185, %p186
    %p188 = scmp.ne.s32.totalorder %s180, %s182
    %p189 = scmp.eq.s32.totalorder %s20, 1
    %p190 = por %p188, %p189
    %p191 = scmp.ne.s32.totalorder %s182, %s183
    %p192 = scmp.eq.s32.totalorder %s20, 0
    %p193 = por %p191, %p192
    %p194 = scmp.ne.s32.totalorder %s182, %s183
    %p195 = scmp.eq.s32.totalorder %s21, 1
    %p196 = por %p194, %p195
    %p198 = scmp.ne.s32.totalorder %s183, %s197
    %p199 = scmp.eq.s32.totalorder %s21, 0
    %p200 = por %p198, %p199
    %s202 = sadd.s32 %s201, 1
    %p205 = scmp.eq.s32.totalorder %s15, 1
    %p206 = scmp.ne.s32.totalorder %s201, %s203
    %p207 = scmp.eq.s32.totalorder %s15, 0
    %p208 = por %p206, %p207
    %p209 = scmp.ne.s32.totalorder %s201, %s203
    %p210 = scmp.eq.s32.totalorder %s20, 1
    %p211 = por %p209, %p210
    %p212 = scmp.ne.s32.totalorder %s203, %s204
    %p213 = scmp.eq.s32.totalorder %s20, 0
    %p214 = por %p212, %p213
    %p215 = scmp.ne.s32.totalorder %s203, %s204
    %p216 = scmp.eq.s32.totalorder %s21, 1
    %p217 = por %p215, %p216
    %p219 = scmp.ne.s32.totalorder %s204, %s218
    %p220 = scmp.eq.s32.totalorder %s21, 0
    %p221 = por %p219, %p220
    %s222 = ssub.s32 %s15, %s22
    %p223 = scmp.eq.s32.totalorder %s222, 0
    %s225 = sadd.s32 %s224, 1
    %s226 = scalar_select %p223, %s224, %s225
    %p229 = pneg %p223
    %p230 = scmp.eq.s32.totalorder %s15, 1
    %p231 = por %p229, %p230
    %p232 = scmp.ne.s32.totalorder %s224, %s227
    %p233 = scmp.eq.s32.totalorder %s15, 0
    %p234 = por %p232, %p233
    %p235 = scmp.ne.s32.totalorder %s224, %s227
    %p236 = scmp.eq.s32.totalorder %s20, 1
    %p237 = por %p235, %p236
    %p238 = scmp.ne.s32.totalorder %s227, %s228
    %p239 = scmp.eq.s32.totalorder %s20, 0
    %p240 = por %p238, %p239
    %p241 = scmp.ne.s32.totalorder %s227, %s228
    %p242 = scmp.eq.s32.totalorder %s21, 1
    %p243 = por %p241, %p242
    %p245 = scmp.ne.s32.totalorder %s228, %s244
    %p246 = scmp.eq.s32.totalorder %s21, 0
    %p247 = por %p245, %p246
    %p248 = scmp.le.s32.totalorder 1, %s15
    %p249 = scmp.lt.s32.totalorder %s15, 3
    %p250 = pnand %p248, %p249
    %p251 = pneg %p250
    // Predicated region
    $region9: #{forward.1} parent=5 // pred_check
      _
    $region10: #{forward.1} parent=5 // pred_check_branch
      %253 = sbr.rel (%p250) target = $region12
    $region11: #{forward.1} parent=5 // pred_region
      %s254 = ssub.s32 %s15, 1
      // Predicated region
      $region13: #{forward.1} parent=11 // pred_check
        %p255 = pneg %p88
      $region14: #{forward.1} parent=11 // pred_check_branch
        %257 = sbr.rel (%p255) target = $region16
      $region15: #{forward.1} parent=11 // pred_region
        _
      $region16: #{forward.1} parent=11 // pred_fallthru
        _
      // Predicated region
      $region17: #{forward.1} parent=11 // pred_check
        %p258 = pneg %p109
      $region18: #{forward.1} parent=11 // pred_check_branch
        %260 = sbr.rel (%p258) target = $region20
      $region19: #{forward.1} parent=11 // pred_region
        _
      $region20: #{forward.1} parent=11 // pred_fallthru
        _
      // Predicated region
      $region21: #{forward.1} parent=11 // pred_check
        %p261 = pneg %p130
      $region22: #{forward.1} parent=11 // pred_check_branch
        %263 = sbr.rel (%p261) target = $region24
      $region23: #{forward.1} parent=11 // pred_region
        _
      $region24: #{forward.1} parent=11 // pred_fallthru
        _
      // Predicated region
      $region25: #{forward.1} parent=11 // pred_check
        %p264 = pneg %p151
      $region26: #{forward.1} parent=11 // pred_check_branch
        %266 = sbr.rel (%p264) target = $region28
      $region27: #{forward.1} parent=11 // pred_region
        _
      $region28: #{forward.1} parent=11 // pred_fallthru
        _
      // Predicated region
      $region29: #{forward.1} parent=11 // pred_check
        %p267 = pneg %p172
      $region30: #{forward.1} parent=11 // pred_check_branch
        %269 = sbr.rel (%p267) target = $region32
      $region31: #{forward.1} parent=11 // pred_region
        _
      $region32: #{forward.1} parent=11 // pred_fallthru
        _
      // Predicated region
      $region33: #{forward.1} parent=11 // pred_check
        %p270 = pneg %p193
      $region34: #{forward.1} parent=11 // pred_check_branch
        %272 = sbr.rel (%p270) target = $region36
      $region35: #{forward.1} parent=11 // pred_region
        _
      $region36: #{forward.1} parent=11 // pred_fallthru
        _
      // Predicated region
      $region37: #{forward.1} parent=11 // pred_check
        %p273 = pneg %p214
      $region38: #{forward.1} parent=11 // pred_check_branch
        %275 = sbr.rel (%p273) target = $region40
      $region39: #{forward.1} parent=11 // pred_region
        _
      $region40: #{forward.1} parent=11 // pred_fallthru
        _
    $region12: #{forward.1} parent=5 // pred_fallthru
      _
    %p276 = scmp.lt.s32.totalorder %s15, 2
    // Predicated region
    $region41: #{forward.1} parent=5 // pred_check
      %p277 = pneg %p276
    $region42: #{forward.1} parent=5 // pred_check_branch
      %279 = sbr.rel (%p277) target = $region44
    $region43: #{forward.1} parent=5 // pred_region
      // Predicated region
      $region45: #{forward.1} parent=43 // pred_check
        %p280 = pneg %p35
      $region46: #{forward.1} parent=43 // pred_check_branch
        %282 = sbr.rel (%p280) target = $region48
      $region47: #{forward.1} parent=43 // pred_region
        %p283 = scmp.lt.s32.totalorder %s15, 1
        %s284 = scalar_select %p283, %s15, 1
        %s285 = smul.addr %s284, 2
        %s286 = smul.addr %s285, 8
        %s287 = scalar_lea.vmem %s0, %s286
      $region48: #{forward.1} parent=43 // pred_fallthru
        _
      // Predicated region
      $region49: #{forward.1} parent=43 // pred_check
        %p288 = pneg %p61
      $region50: #{forward.1} parent=43 // pred_check_branch
        %290 = sbr.rel (%p288) target = $region52
      $region51: #{forward.1} parent=43 // pred_region
        %p291 = scmp.lt.s32.totalorder %s15, 1
        %s292 = scalar_select %p291, %s15, 1
        %s293 = smul.addr %s292, 2
        %s294 = smul.addr %s293, 8
        %s295 = scalar_lea.vmem %s1, %s294
      $region52: #{forward.1} parent=43 // pred_fallthru
        _
    $region44: #{forward.1} parent=5 // pred_fallthru
      _
    %p296 = scmp.le.s32.totalorder 1, %s15
    %p297 = scmp.lt.s32.totalorder %s15, 3
    %p298 = pnand %p296, %p297
    %p299 = pneg %p298
    // Predicated region
    $region53: #{forward.1} parent=5 // pred_check
      _
    $region54: #{forward.1} parent=5 // pred_check_branch
      %301 = sbr.rel (%p298) target = $region56
    $region55: #{forward.1} parent=5 // pred_region
      %s302 = ssub.s32 %s15, 1
      %p303 = scmp.lt.s32.totalorder %s20, 1
      %s304 = scalar_select %p303, %s20, 1
      %s305 = smul.addr %s304, 2
      %s306 = smul.addr %s305, 8
      %s307 = scalar_lea.vmem %s0, %s306
      %p308 = pneg %p41
      %p309 = pneg %p38
      %p310 = scmp.lt.s32.totalorder %s20, 1
      %s311 = scalar_select %p310, %s20, 1
      %s312 = smul.addr %s311, 2
      %s313 = smul.addr %s312, 8
      %s314 = scalar_lea.vmem %s1, %s313
      %p315 = pneg %p67
      %p316 = pneg %p64
      %p317 = pneg %p88
      %p318 = pneg %p85
      %p319 = pneg %p109
      %p320 = pneg %p106
      %p321 = pneg %p130
      %p322 = pneg %p127
      %p323 = pneg %p151
      %p324 = pneg %p148
      %p325 = pneg %p172
      %p326 = pneg %p169
      %p327 = pneg %p193
      %p328 = pneg %p190
      %p329 = pneg %p214
      %p330 = pneg %p211
      %p331 = pneg %p240
      %p332 = pneg %p237
      %p333 = scmp.lt.s32.totalorder %s20, 1
      %s334 = scalar_select %p333, %s20, 1
      %s335 = smul.addr %s334, 2
      %s336 = smul.addr %s335, 8
      %s337 = scalar_lea.vmem %s9, %s336
      %p338 = scmp.lt.s32.totalorder %s20, 1
      %s339 = scalar_select %p338, %s20, 1
      %s340 = smul.addr %s339, 2
      %s341 = smul.addr %s340, 8
      %s342 = scalar_lea.vmem %s0, %s341
      %p343 = scmp.lt.s32.totalorder %s20, 1
      %s344 = scalar_select %p343, %s20, 1
      %s345 = smul.addr %s344, 2
      %s346 = smul.addr %s345, 8
      %s347 = scalar_lea.vmem %s1, %s346
      %p348 = scmp.lt.s32.totalorder %s20, 1
      %s349 = scalar_select %p348, %s20, 1
      %s350 = smul.addr %s349, 2
      %s351 = smul.addr %s350, 8
      %s352 = scalar_lea.vmem %s9, %s351
      %v353 = vld [vmem:[%s342] sm:$0xff]
      %v354 = vld [vmem:[%s342 + $0x8] sm:$0xff]
      %v355 = vld [vmem:[%s347] sm:$0xff]
      %v356 = vld [vmem:[%s347 + $0x8] sm:$0xff]
      %v357 = vld [vmem:[%s2] sm:$0xff]
      %v358 = vld [vmem:[%s2 + $0x8] sm:$0xff]
      %v359 = vld [vmem:[%s2 + $0x10] sm:$0xff]
      %v360 = vld [vmem:[%s2 + $0x18] sm:$0xff]
      %v361 = vld [vmem:[%s2 + $0x20] sm:$0xff]
      %v362 = vld [vmem:[%s2 + $0x28] sm:$0xff]
      %v363 = vld [vmem:[%s2 + $0x30] sm:$0xff]
      %v364 = vld [vmem:[%s2 + $0x38] sm:$0xff]
      %v365 = vld [vmem:[%s3 + $0x21] sm:$0x1]
      %v366 = vperm.slane %v365, 0
      %vm367 = vcmask 523264
      %v369 = vsel %vm367, %v353, 0
      %v372 = vsel %vm367, %v354, 0
      %374 = vmatpush.msra.mxu0 0.0
      %375 = vmatpush.msra.mxu0 0.0
      %376 = vmatpush.msra.mxu0 0.0
      %377 = vmatpush.msra.mxu0 0.0
      %378 = vmatpush.msra.mxu0 0.0
      %379 = vmatpush.msra.mxu0 0.0
      %380 = vmatpush.msra.mxu0 0.0
      %381 = vmatpush.msra.mxu0 0.0
      %382 = vmatpush.msra.mxu0 %v364
      %383 = vmatpush.msra.mxu0 %v363
      %384 = vmatpush.msra.mxu0 %v362
      %385 = vmatpush.msra.mxu0 %v361
      %386 = vmatpush.msra.mxu0 %v360
      %387 = vmatpush.msra.mxu0 %v359
      %388 = vmatpush.msra.mxu0 %v358
      %389 = vmatpush.msra.mxu0 %v357
      %390 = vmatmul.f32.gmra.mxu0 %v369
      %v391 = vpop.f32.mrf.mxu0
      %v392 = vadd.f32 %v366, %v391
      %393 = vmatmul.f32.gmra.mxu0 %v372
      %v394 = vpop.f32.mrf.mxu0
      %v395 = vadd.f32 %v366, %v394
      %396 = vdwg.mxu0
      %v397 = vld [vmem:[%s3] sm:$0xff]
      %v398 = vld [vmem:[%s3 + $0x8] sm:$0xff]
      %v399 = vadd.f32 %v392, %v397
      %v400 = vadd.f32 %v395, %v398
      %v401 = vld [vmem:[%s6] sm:$0x1]
      %v402 = vld [vmem:[%s6 + $0x1] sm:$0x1]
      %v403 = vld [vmem:[%s6 + $0x2] sm:$0x1]
      %v404 = vld [vmem:[%s6 + $0x3] sm:$0x1]
      %v405 = vld [vmem:[%s6 + $0x4] sm:$0x1]
      %v406 = vld [vmem:[%s6 + $0x5] sm:$0x1]
      %v407 = vld [vmem:[%s6 + $0x6] sm:$0x1]
      %v408 = vld [vmem:[%s6 + $0x7] sm:$0x1]
      %v409 = vld [vmem:[%s6 + $0x8] sm:$0x1]
      %v410 = vld [vmem:[%s6 + $0x9] sm:$0x1]
      %vm411 = vcmask 261120
      %v412 = vsel %vm411, %v399, 0.0
      %413 = vadd.xlane.f32.xlu0 %v412
      %v414 = vpop.xlane.xlu0 %413
      %v415 = vsel %vm411, %v400, 0.0
      %416 = vadd.xlane.f32.xlu0 %v415
      %v417 = vpop.xlane.xlu0 %416
      %v418 = vrcp.pop 32.0
      %v419 = vmul.f32 32.0, %v418
      %v420 = vsub.f32 1.0, %v419
      %v421 = vmul.f32 %v418, %v420
      %v422 = vadd.f32 %v418, %v421
      %vm423 = vweird.f32 %v418
      %v424 = vsel %vm423, %v418, %v422
      %v425 = vmul.f32 %v414, %v424
      %v426 = vmul.f32 %v417, %v424
      %v427 = vsub.f32 %v399, %v425
      %v428 = vsub.f32 %v400, %v426
      %v429 = vmul.f32 %v427, %v427
      %v430 = vmul.f32 %v428, %v428
      %v431 = vsel %vm411, %v429, 0.0
      %432 = vadd.xlane.f32.xlu0 %v431
      %v433 = vpop.xlane.xlu0 %432
      %v434 = vsel %vm411, %v430, 0.0
      %435 = vadd.xlane.f32.xlu0 %v434
      %v436 = vpop.xlane.xlu0 %435
      %v437 = vmul.f32 %v433, %v424
      %v438 = vmul.f32 %v436, %v424
      %v439 = vadd.f32 %v437, 1e-06
      %v440 = vadd.f32 %v438, 1e-06
      %v441 = vrsqrt.pop %v439
      %v442 = vmul.f32 %v441, %v439
      %v443 = vmul.f32 %v442, %v441
      %v444 = vmul.f32 0.5, %v443
      %v445 = vsub.f32 1.5, %v444
      %v446 = vmul.f32 %v441, %v445
      %vm447 = vweird.f32 %v439
      %vm448 = vweird.f32 %v441
      %vm449 = vmor %vm447, %vm448
      %v450 = vsel %vm449, %v441, %v446
      %v451 = vrsqrt.pop %v440
      %v452 = vmul.f32 %v451, %v440
      %v453 = vmul.f32 %v452, %v451
      %v454 = vmul.f32 0.5, %v453
      %v455 = vsub.f32 1.5, %v454
      %v456 = vmul.f32 %v451, %v455
      %vm457 = vweird.f32 %v440
      %vm458 = vweird.f32 %v451
      %vm459 = vmor %vm457, %vm458
      %v460 = vsel %vm459, %v451, %v456
      %v461 = vmul.f32 %v427, %v450
      %v462 = vmul.f32 %v428, %v460
      %v463 = vperm.slane %v401, 0
      %v464 = vmul.f32 %v461, %v463
      %v465 = vmul.f32 %v462, %v463
      %v466 = vperm.slane %v402, 0
      %v467 = vadd.f32 %v464, %v466
      %v468 = vadd.f32 %v465, %v466
      %v469 = vld [vmem:[%s5] sm:$0xff]
      %v470 = vld [vmem:[%s5 + $0x30] sm:$0xff]
      %v471 = vld [vmem:[%s5 + $0x60] sm:$0xff]
      %v472 = vld [vmem:[%s5 + $0x90] sm:$0xff]
      %v473 = vld [vmem:[%s5 + $0x8] sm:$0xff]
      %v474 = vld [vmem:[%s5 + $0x38] sm:$0xff]
      %v475 = vld [vmem:[%s5 + $0x68] sm:$0xff]
      %v476 = vld [vmem:[%s5 + $0x98] sm:$0xff]
      %v477 = vld [vmem:[%s5 + $0x10] sm:$0xff]
      %v478 = vld [vmem:[%s5 + $0x40] sm:$0xff]
      %v479 = vld [vmem:[%s5 + $0x70] sm:$0xff]
      %v480 = vld [vmem:[%s5 + $0xa0] sm:$0xff]
      %v481 = vld [vmem:[%s5 + $0x18] sm:$0xff]
      %v482 = vld [vmem:[%s5 + $0x48] sm:$0xff]
      %v483 = vld [vmem:[%s5 + $0x78] sm:$0xff]
      %v484 = vld [vmem:[%s5 + $0xa8] sm:$0xff]
      %v485 = vperm.slane %v405, 0
      %v487 = vsel %vm411, %v467, 0
      %v490 = vsel %vm411, %v468, 0
      %492 = vmatpush.msra.mxu0 0.0
      %493 = vmatpush.msra.mxu0 0.0
      %494 = vmatpush.msra.mxu0 0.0
      %495 = vmatpush.msra.mxu0 0.0
      %496 = vmatpush.msra.mxu0 0.0
      %497 = vmatpush.msra.mxu0 0.0
      %498 = vmatpush.msra.mxu0 0.0
      %499 = vmatpush.msra.mxu0 0.0
      %500 = vmatpush.msra.mxu0 0.0
      %501 = vmatpush.msra.mxu0 0.0
      %502 = vmatpush.msra.mxu0 0.0
      %503 = vmatpush.msra.mxu0 0.0
      %504 = vmatpush.msra.mxu0 %v472
      %505 = vmatpush.msra.mxu0 %v471
      %506 = vmatpush.msra.mxu0 %v470
      %507 = vmatpush.msra.mxu0 %v469
      %508 = vmatmul.f32.gmra.mxu0 %v487
      %v509 = vpop.f32.mrf.mxu0
      %v510 = vadd.f32 %v485, %v509
      %511 = vmatmul.f32.gmra.mxu0 %v490
      %v512 = vpop.f32.mrf.mxu0
      %v513 = vadd.f32 %v485, %v512
      %514 = vdwg.mxu0
      %v515 = vperm.slane %v406, 0
      %516 = vmatpush.msra.mxu0 0.0
      %517 = vmatpush.msra.mxu0 0.0
      %518 = vmatpush.msra.mxu0 0.0
      %519 = vmatpush.msra.mxu0 0.0
      %520 = vmatpush.msra.mxu0 0.0
      %521 = vmatpush.msra.mxu0 0.0
      %522 = vmatpush.msra.mxu0 0.0
      %523 = vmatpush.msra.mxu0 0.0
      %524 = vmatpush.msra.mxu0 0.0
      %525 = vmatpush.msra.mxu0 0.0
      %526 = vmatpush.msra.mxu0 0.0
      %527 = vmatpush.msra.mxu0 0.0
      %528 = vmatpush.msra.mxu0 %v476
      %529 = vmatpush.msra.mxu0 %v475
      %530 = vmatpush.msra.mxu0 %v474
      %531 = vmatpush.msra.mxu0 %v473
      %532 = vmatmul.f32.gmra.mxu0 %v487
      %v533 = vpop.f32.mrf.mxu0
      %v534 = vadd.f32 %v515, %v533
      %535 = vmatmul.f32.gmra.mxu0 %v490
      %v536 = vpop.f32.mrf.mxu0
      %v537 = vadd.f32 %v515, %v536
      %538 = vdwg.mxu0
      %v539 = vperm.slane %v407, 0
      %540 = vmatpush.msra.mxu0 0.0
      %541 = vmatpush.msra.mxu0 0.0
      %542 = vmatpush.msra.mxu0 0.0
      %543 = vmatpush.msra.mxu0 0.0
      %544 = vmatpush.msra.mxu0 0.0
      %545 = vmatpush.msra.mxu0 0.0
      %546 = vmatpush.msra.mxu0 0.0
      %547 = vmatpush.msra.mxu0 0.0
      %548 = vmatpush.msra.mxu0 0.0
      %549 = vmatpush.msra.mxu0 0.0
      %550 = vmatpush.msra.mxu0 0.0
      %551 = vmatpush.msra.mxu0 0.0
      %552 = vmatpush.msra.mxu0 %v480
      %553 = vmatpush.msra.mxu0 %v479
      %554 = vmatpush.msra.mxu0 %v478
      %555 = vmatpush.msra.mxu0 %v477
      %556 = vmatmul.f32.gmra.mxu0 %v487
      %v557 = vpop.f32.mrf.mxu0
      %v558 = vadd.f32 %v539, %v557
      %559 = vmatmul.f32.gmra.mxu0 %v490
      %v560 = vpop.f32.mrf.mxu0
      %v561 = vadd.f32 %v539, %v560
      %562 = vdwg.mxu0
      %v563 = vmul.f32 %v510, 0.35355338
      %v564 = vmul.f32 %v513, 0.35355338
      %567 = vrot.lane.b32.xlu0 %v534, 120
      %v568 = vpop.permute.xlu0 %567
      %569 = vrot.lane.b32.xlu0 %v537, 120
      %v570 = vpop.permute.xlu0 %569
      %v573 = vmax.f32 %v534, %v568
      %v574 = vmax.f32 %v537, %v570
      %577 = vrot.lane.b32.xlu0 %v573, 112
      %v578 = vpop.permute.xlu0 %577
      %579 = vrot.lane.b32.xlu0 %v574, 112
      %v580 = vpop.permute.xlu0 %579
      %v583 = vmax.f32 %v573, %v578
      %v584 = vmax.f32 %v574, %v580
      %587 = vrot.lane.b32.xlu0 %v583, 8
      %v588 = vpop.permute.xlu0 %587
      %589 = vrot.lane.b32.xlu0 %v584, 8
      %v590 = vpop.permute.xlu0 %589
      %593 = vrot.lane.b32.xlu0 %v583, 16
      %v594 = vpop.permute.xlu0 %593
      %595 = vrot.lane.b32.xlu0 %v584, 16
      %v596 = vpop.permute.xlu0 %595
      %599 = vrot.lane.b32.xlu0 %v583, 24
      %v600 = vpop.permute.xlu0 %599
      %601 = vrot.lane.b32.xlu0 %v584, 24
      %v602 = vpop.permute.xlu0 %601
      %vm605 = vcmask 64512
      %v606 = vsel %vm605, %v583, %v588
      %v607 = vsel %vm605, %v584, %v590
      %vm608 = vcmask 130048
      %v609 = vsel %vm608, %v606, %v594
      %v610 = vsel %vm608, %v607, %v596
      %vm611 = vcmask 195584
      %v612 = vsel %vm611, %v609, %v600
      %v613 = vsel %vm611, %v610, %v602
      %v614 = vmin.f32 %v534, %v568
      %v615 = vmin.f32 %v537, %v570
      %618 = vrot.lane.b32.xlu0 %v614, 112
      %v619 = vpop.permute.xlu0 %618
      %620 = vrot.lane.b32.xlu0 %v615, 112
      %v621 = vpop.permute.xlu0 %620
      %v624 = vmin.f32 %v614, %v619
      %v625 = vmin.f32 %v615, %v621
      %628 = vrot.lane.b32.xlu0 %v624, 8
      %v629 = vpop.permute.xlu0 %628
      %630 = vrot.lane.b32.xlu0 %v625, 8
      %v631 = vpop.permute.xlu0 %630
      %634 = vrot.lane.b32.xlu0 %v624, 16
      %v635 = vpop.permute.xlu0 %634
      %636 = vrot.lane.b32.xlu0 %v625, 16
      %v637 = vpop.permute.xlu0 %636
      %640 = vrot.lane.b32.xlu0 %v624, 24
      %v641 = vpop.permute.xlu0 %640
      %642 = vrot.lane.b32.xlu0 %v625, 24
      %v643 = vpop.permute.xlu0 %642
      %v646 = vsel %vm605, %v624, %v629
      %v647 = vsel %vm605, %v625, %v631
      %v648 = vsel %vm608, %v646, %v635
      %v649 = vsel %vm608, %v647, %v637
      %v650 = vsel %vm611, %v648, %v641
      %v651 = vsel %vm611, %v649, %v643
      %vm652 = vcmp.ge.f32.partialorder %v563, 0.0
      %vm653 = vcmp.ge.f32.partialorder %v564, 0.0
      %v654 = vmul.f32 %v563, %v612
      %v655 = vmul.f32 %v564, %v613
      %v656 = vmul.f32 %v563, %v650
      %v657 = vmul.f32 %v564, %v651
      %v658 = vsel %vm652, %v654, %v656
      %v659 = vsel %vm653, %v655, %v657
      %v660 = vld [vmem:[%s4] sm:$0xff]
      %v661 = vld [vmem:[%s4 + $0x8] sm:$0xff]
      %v662 = vld [vmem:[%s4 + $0x10] sm:$0xff]
      %v663 = vld [vmem:[%s4 + $0x18] sm:$0xff]
      %v665 = vsel %vm411, %v563, 0
      %v668 = vsel %vm411, %v564, 0
      %670 = vmatpush.msra.mxu0 0.0
      %671 = vmatpush.msra.mxu0 0.0
      %672 = vmatpush.msra.mxu0 0.0
      %673 = vmatpush.msra.mxu0 0.0
      %674 = vmatpush.msra.mxu0 0.0
      %675 = vmatpush.msra.mxu0 0.0
      %676 = vmatpush.msra.mxu0 0.0
      %677 = vmatpush.msra.mxu0 0.0
      %678 = vmatpush.msra.mxu0 0.0
      %679 = vmatpush.msra.mxu0 0.0
      %680 = vmatpush.msra.mxu0 0.0
      %681 = vmatpush.msra.mxu0 0.0
      %682 = vmatpush.msra.mxu0 %v663
      %683 = vmatpush.msra.mxu0 %v662
      %684 = vmatpush.msra.mxu0 %v661
      %685 = vmatpush.msra.mxu0 %v660
      %686 = vmatmul.f32.gmra.mxu0 %v665
      %v687 = vpop.f32.mrf.mxu0
      %v688 = vadd.f32 0.0, %v687
      %689 = vmatmul.f32.gmra.mxu0 %v668
      %v690 = vpop.f32.mrf.mxu0
      %v691 = vadd.f32 0.0, %v690
      %692 = vdwg.mxu0
      %v694 = vsel %vm411, %v658, 0
      %v697 = vsel %vm411, %v659, 0
      %699 = vmatpush.msra.mxu0 0.0
      %700 = vmatpush.msra.mxu0 0.0
      %701 = vmatpush.msra.mxu0 0.0
      %702 = vmatpush.msra.mxu0 0.0
      %703 = vmatpush.msra.mxu0 0.0
      %704 = vmatpush.msra.mxu0 0.0
      %705 = vmatpush.msra.mxu0 0.0
      %706 = vmatpush.msra.mxu0 0.0
      %707 = vmatpush.msra.mxu0 0.0
      %708 = vmatpush.msra.mxu0 0.0
      %709 = vmatpush.msra.mxu0 0.0
      %710 = vmatpush.msra.mxu0 0.0
      %711 = vmatpush.msra.mxu0 %v663
      %712 = vmatpush.msra.mxu0 %v662
      %713 = vmatpush.msra.mxu0 %v661
      %714 = vmatpush.msra.mxu0 %v660
      %715 = vmatmul.f32.gmra.mxu0 %v694
      %v716 = vpop.f32.mrf.mxu0
      %v717 = vadd.f32 0.0, %v716
      %718 = vmatmul.f32.gmra.mxu0 %v697
      %v719 = vpop.f32.mrf.mxu0
      %v720 = vadd.f32 0.0, %v719
      %721 = vdwg.mxu0
      %v722 = vld [vmem:[%s4 + $0x20] sm:$0xff]
      %v723 = vld [vmem:[%s4 + $0x28] sm:$0xff]
      %v724 = vld [vmem:[%s4 + $0x30] sm:$0xff]
      %v725 = vld [vmem:[%s4 + $0x38] sm:$0xff]
      %v726 = vsel %vm411, %v534, 0
      %v728 = vsel %vm411, %v537, 0
      %730 = vmatpush.msra.mxu0 0.0
      %731 = vmatpush.msra.mxu0 0.0
      %732 = vmatpush.msra.mxu0 0.0
      %733 = vmatpush.msra.mxu0 0.0
      %734 = vmatpush.msra.mxu0 0.0
      %735 = vmatpush.msra.mxu0 0.0
      %736 = vmatpush.msra.mxu0 0.0
      %737 = vmatpush.msra.mxu0 0.0
      %738 = vmatpush.msra.mxu0 0.0
      %739 = vmatpush.msra.mxu0 0.0
      %740 = vmatpush.msra.mxu0 0.0
      %741 = vmatpush.msra.mxu0 0.0
      %742 = vmatpush.msra.mxu0 %v725
      %743 = vmatpush.msra.mxu0 %v724
      %744 = vmatpush.msra.mxu0 %v723
      %745 = vmatpush.msra.mxu0 %v722
      %746 = vmatmul.f32.gmra.mxu0 %v726
      %v747 = vpop.f32.mrf.mxu0
      %v748 = vadd.f32 0.0, %v747
      %749 = vmatmul.f32.gmra.mxu0 %v728
      %v750 = vpop.f32.mrf.mxu0
      %v751 = vadd.f32 0.0, %v750
      %752 = vdwg.mxu0
      %v754 = vsel %vm411, %v558, 0
      %v757 = vsel %vm411, %v561, 0
      %759 = vmatpush.msra.mxu0 0.0
      %760 = vmatpush.msra.mxu0 0.0
      %761 = vmatpush.msra.mxu0 0.0
      %762 = vmatpush.msra.mxu0 0.0
      %763 = vmatpush.msra.mxu0 0.0
      %764 = vmatpush.msra.mxu0 0.0
      %765 = vmatpush.msra.mxu0 0.0
      %766 = vmatpush.msra.mxu0 0.0
      %767 = vmatpush.msra.mxu0 0.0
      %768 = vmatpush.msra.mxu0 0.0
      %769 = vmatpush.msra.mxu0 0.0
      %770 = vmatpush.msra.mxu0 0.0
      %771 = vmatpush.msra.mxu0 %v663
      %772 = vmatpush.msra.mxu0 %v662
      %773 = vmatpush.msra.mxu0 %v661
      %774 = vmatpush.msra.mxu0 %v660
      %775 = vmatmul.f32.gmra.mxu0 %v754
      %v776 = vpop.f32.mrf.mxu0
      %v777 = vadd.f32 0.0, %v776
      %778 = vmatmul.f32.gmra.mxu0 %v757
      %v779 = vpop.f32.mrf.mxu0
      %v780 = vadd.f32 0.0, %v779
      %781 = vdwg.mxu0
      %v782 = vmul.f32 %v688, %v748
      %v783 = vmul.f32 %v691, %v751
      %v784 = vsub.f32 %v782, %v717
      %v785 = vsub.f32 %v783, %v720
      %v786 = vmul.f32 %v784, 1.442695
      %v787 = vpow.pop %v786
      %v788 = vmul.f32 %v785, 1.442695
      %v789 = vpow.pop %v788
      %v790 = vld [vmem:[%s4 + $0x40] sm:$0xff]
      %v791 = vld [vmem:[%s4 + $0x48] sm:$0xff]
      %v792 = vld [vmem:[%s4 + $0x50] sm:$0xff]
      %v793 = vld [vmem:[%s4 + $0x58] sm:$0xff]
      %v794 = vld [vmem:[%s4 + $0x60] sm:$0xff]
      %v795 = vld [vmem:[%s4 + $0x68] sm:$0xff]
      %v796 = vld [vmem:[%s4 + $0x70] sm:$0xff]
      %v797 = vld [vmem:[%s4 + $0x78] sm:$0xff]
      %v798 = vld [vmem:[%s4 + $0x80] sm:$0xff]
      %v799 = vld [vmem:[%s4 + $0x88] sm:$0xff]
      %v800 = vld [vmem:[%s4 + $0x90] sm:$0xff]
      %v801 = vld [vmem:[%s4 + $0x98] sm:$0xff]
      %v802 = vld [vmem:[%s4 + $0xa0] sm:$0xff]
      %v803 = vld [vmem:[%s4 + $0xa8] sm:$0xff]
      %v804 = vld [vmem:[%s4 + $0xb0] sm:$0xff]
      %v805 = vld [vmem:[%s4 + $0xb8] sm:$0xff]
      %806 = vmatpush.msra.mxu0 %v805
      %807 = vmatpush.msra.mxu0 %v804
      %808 = vmatpush.msra.mxu0 %v803
      %809 = vmatpush.msra.mxu0 %v802
      %810 = vmatpush.msra.mxu0 %v801
      %811 = vmatpush.msra.mxu0 %v800
      %812 = vmatpush.msra.mxu0 %v799
      %813 = vmatpush.msra.mxu0 %v798
      %814 = vmatpush.msra.mxu0 %v797
      %815 = vmatpush.msra.mxu0 %v796
      %816 = vmatpush.msra.mxu0 %v795
      %817 = vmatpush.msra.mxu0 %v794
      %818 = vmatpush.msra.mxu0 %v793
      %819 = vmatpush.msra.mxu0 %v792
      %820 = vmatpush.msra.mxu0 %v791
      %821 = vmatpush.msra.mxu0 %v790
      %822 = vmatmul.f32.gmra.mxu0 %v787
      %v823 = vpop.f32.mrf.mxu0
      %v824 = vadd.f32 0.0, %v823
      %825 = vmatmul.f32.gmra.mxu0 %v789
      %v826 = vpop.f32.mrf.mxu0
      %v827 = vadd.f32 0.0, %v826
      %828 = vdwg.mxu0
      %v829 = vrcp.pop %v824
      %v830 = vmul.f32 %v824, %v829
      %v831 = vsub.f32 1.0, %v830
      %v832 = vmul.f32 %v829, %v831
      %v833 = vadd.f32 %v829, %v832
      %vm834 = vweird.f32 %v824
      %vm835 = vweird.f32 %v829
      %vm836 = vmor %vm834, %vm835
      %v837 = vsel %vm836, %v829, %v833
      %v838 = vand.u32 2147483647, %v824
      %vm839 = vcmp.eq.f32.partialorder %v838, 8.507059e+37
      %v840 = vand.u32 %v824, 2147483648
      %v841 = vor.u32 1.1754944e-38, %v840
      %v842 = vsel %vm839, %v841, %v837
      %v843 = vmul.f32 %v787, %v842
      %v844 = vrcp.pop %v827
      %v845 = vmul.f32 %v827, %v844
      %v846 = vsub.f32 1.0, %v845
      %v847 = vmul.f32 %v844, %v846
      %v848 = vadd.f32 %v844, %v847
      %vm849 = vweird.f32 %v827
      %vm850 = vweird.f32 %v844
      %vm851 = vmor %vm849, %vm850
      %v852 = vsel %vm851, %v844, %v848
      %v853 = vand.u32 2147483647, %v827
      %vm854 = vcmp.eq.f32.partialorder %v853, 8.507059e+37
      %v855 = vand.u32 %v827, 2147483648
      %v856 = vor.u32 1.1754944e-38, %v855
      %v857 = vsel %vm854, %v856, %v852
      %v858 = vmul.f32 %v789, %v857
      %v859 = vmul.f32 %v843, %v777
      %v860 = vmul.f32 %v858, %v780
      %v861 = vld [vmem:[%s4 + $0xc0] sm:$0xff]
      %v862 = vld [vmem:[%s4 + $0xc8] sm:$0xff]
      %v863 = vld [vmem:[%s4 + $0xd0] sm:$0xff]
      %v864 = vld [vmem:[%s4 + $0xd8] sm:$0xff]
      %865 = vmatpush.xpose.msra.mxu0 0.0
      %866 = vmatpush.xpose.msra.mxu0 0.0
      %867 = vmatpush.xpose.msra.mxu0 0.0
      %868 = vmatpush.xpose.msra.mxu0 0.0
      %869 = vmatpush.xpose.msra.mxu0 0.0
      %870 = vmatpush.xpose.msra.mxu0 0.0
      %871 = vmatpush.xpose.msra.mxu0 0.0
      %872 = vmatpush.xpose.msra.mxu0 0.0
      %873 = vmatpush.xpose.msra.mxu0 0.0
      %874 = vmatpush.xpose.msra.mxu0 0.0
      %875 = vmatpush.xpose.msra.mxu0 0.0
      %876 = vmatpush.xpose.msra.mxu0 0.0
      %877 = vmatpush.xpose.msra.mxu0 %v864
      %878 = vmatpush.xpose.msra.mxu0 %v863
      %879 = vmatpush.xpose.msra.mxu0 %v862
      %880 = vmatpush.xpose.msra.mxu0 %v861
      %881 = vmatmul.f32.gmra.mxu0 %v859
      %v882 = vpop.f32.mrf.mxu0
      %v883 = vadd.f32 0.0, %v882
      %884 = vmatmul.f32.gmra.mxu0 %v860
      %v885 = vpop.f32.mrf.mxu0
      %v886 = vadd.f32 0.0, %v885
      %887 = vdwg.mxu0
      %v888 = vperm.slane %v408, 0
      %v890 = vsel %vm411, %v883, 0
      %v893 = vsel %vm411, %v886, 0
      %895 = vmatpush.msra.mxu0 0.0
      %896 = vmatpush.msra.mxu0 0.0
      %897 = vmatpush.msra.mxu0 0.0
      %898 = vmatpush.msra.mxu0 0.0
      %899 = vmatpush.msra.mxu0 0.0
      %900 = vmatpush.msra.mxu0 0.0
      %901 = vmatpush.msra.mxu0 0.0
      %902 = vmatpush.msra.mxu0 0.0
      %903 = vmatpush.msra.mxu0 0.0
      %904 = vmatpush.msra.mxu0 0.0
      %905 = vmatpush.msra.mxu0 0.0
      %906 = vmatpush.msra.mxu0 0.0
      %907 = vmatpush.msra.mxu0 %v484
      %908 = vmatpush.msra.mxu0 %v483
      %909 = vmatpush.msra.mxu0 %v482
      %910 = vmatpush.msra.mxu0 %v481
      %911 = vmatmul.f32.gmra.mxu0 %v890
      %v912 = vpop.f32.mrf.mxu0
      %v913 = vadd.f32 %v888, %v912
      %914 = vmatmul.f32.gmra.mxu0 %v893
      %v915 = vpop.f32.mrf.mxu0
      %v916 = vadd.f32 %v888, %v915
      %917 = vdwg.mxu0
      %v918 = vadd.f32 %v399, %v913
      %v919 = vadd.f32 %v400, %v916
      %v920 = vsel %vm411, %v918, 0.0
      %921 = vadd.xlane.f32.xlu0 %v920
      %v922 = vpop.xlane.xlu0 %921
      %v923 = vsel %vm411, %v919, 0.0
      %924 = vadd.xlane.f32.xlu0 %v923
      %v925 = vpop.xlane.xlu0 %924
      %v926 = vmul.f32 %v922, %v424
      %v927 = vmul.f32 %v925, %v424
      %v928 = vsub.f32 %v918, %v926
      %v929 = vsub.f32 %v919, %v927
      %v930 = vmul.f32 %v928, %v928
      %v931 = vmul.f32 %v929, %v929
      %v932 = vsel %vm411, %v930, 0.0
      %933 = vadd.xlane.f32.xlu0 %v932
      %v934 = vpop.xlane.xlu0 %933
      %v935 = vsel %vm411, %v931, 0.0
      %936 = vadd.xlane.f32.xlu0 %v935
      %v937 = vpop.xlane.xlu0 %936
      %v938 = vmul.f32 %v934, %v424
      %v939 = vmul.f32 %v937, %v424
      %v940 = vadd.f32 %v938, 1e-06
      %v941 = vadd.f32 %v939, 1e-06
      %v942 = vrsqrt.pop %v940
      %v943 = vmul.f32 %v942, %v940
      %v944 = vmul.f32 %v943, %v942
      %v945 = vmul.f32 0.5, %v944
      %v946 = vsub.f32 1.5, %v945
      %v947 = vmul.f32 %v942, %v946
      %vm948 = vweird.f32 %v940
      %vm949 = vweird.f32 %v942
      %vm950 = vmor %vm948, %vm949
      %v951 = vsel %vm950, %v942, %v947
      %v952 = vrsqrt.pop %v941
      %v953 = vmul.f32 %v952, %v941
      %v954 = vmul.f32 %v953, %v952
      %v955 = vmul.f32 0.5, %v954
      %v956 = vsub.f32 1.5, %v955
      %v957 = vmul.f32 %v952, %v956
      %vm958 = vweird.f32 %v941
      %vm959 = vweird.f32 %v952
      %vm960 = vmor %vm958, %vm959
      %v961 = vsel %vm960, %v952, %v957
      %v962 = vmul.f32 %v928, %v951
      %v963 = vmul.f32 %v929, %v961
      %v964 = vperm.slane %v403, 0
      %v965 = vmul.f32 %v962, %v964
      %v966 = vmul.f32 %v963, %v964
      %v967 = vperm.slane %v404, 0
      %v968 = vadd.f32 %v965, %v967
      %v969 = vadd.f32 %v966, %v967
      %v970 = vld [vmem:[%s5 + $0x20] sm:$0xff]
      %v971 = vld [vmem:[%s5 + $0x50] sm:$0xff]
      %v972 = vld [vmem:[%s5 + $0x80] sm:$0xff]
      %v973 = vld [vmem:[%s5 + $0xb0] sm:$0xff]
      %v974 = vld [vmem:[%s5 + $0x28] sm:$0xff]
      %v975 = vld [vmem:[%s5 + $0x58] sm:$0xff]
      %v976 = vld [vmem:[%s5 + $0x88] sm:$0xff]
      %v977 = vld [vmem:[%s5 + $0xb8] sm:$0xff]
      %v978 = vperm.slane %v409, 0
      %v980 = vsel %vm411, %v968, 0
      %v983 = vsel %vm411, %v969, 0
      %985 = vmatpush.msra.mxu0 0.0
      %986 = vmatpush.msra.mxu0 0.0
      %987 = vmatpush.msra.mxu0 0.0
      %988 = vmatpush.msra.mxu0 0.0
      %989 = vmatpush.msra.mxu0 0.0
      %990 = vmatpush.msra.mxu0 0.0
      %991 = vmatpush.msra.mxu0 0.0
      %992 = vmatpush.msra.mxu0 0.0
      %993 = vmatpush.msra.mxu0 0.0
      %994 = vmatpush.msra.mxu0 0.0
      %995 = vmatpush.msra.mxu0 0.0
      %996 = vmatpush.msra.mxu0 0.0
      %997 = vmatpush.msra.mxu0 %v973
      %998 = vmatpush.msra.mxu0 %v972
      %999 = vmatpush.msra.mxu0 %v971
      %1000 = vmatpush.msra.mxu0 %v970
      %1001 = vmatmul.f32.gmra.mxu0 %v980
      %v1002 = vpop.f32.mrf.mxu0
      %v1003 = vadd.f32 %v978, %v1002
      %1004 = vmatmul.f32.gmra.mxu0 %v983
      %v1005 = vpop.f32.mrf.mxu0
      %v1006 = vadd.f32 %v978, %v1005
      %1007 = vdwg.mxu0
      %v1008 = vmul.f32 %v1003, 0.5
      %v1009 = vmul.f32 %v1006, 0.5
      %v1010 = vmul.f32 %v1003, 0.70710677
      %v1011 = vmul.f32 %v1006, 0.70710677
      %vm1012 = vcmp.ge.f32.partialorder %v1010, 0.0
      %vm1013 = vcmp.ge.f32.partialorder %v1011, 0.0
      %v1014 = vsel %vm1012, 1.0, -1.0
      %v1015 = vsel %vm1013, 1.0, -1.0
      %v1016 = vand.u32 2147483647, %v1010
      %v1017 = vand.u32 2147483647, %v1011
      %v1018 = vmul.f32 %v1016, 0.3275911
      %v1019 = vmul.f32 %v1017, 0.3275911
      %v1020 = vadd.f32 %v1018, 1.0
      %v1021 = vadd.f32 %v1019, 1.0
      %v1022 = vrcp.pop %v1020
      %v1023 = vmul.f32 %v1020, %v1022
      %v1024 = vsub.f32 1.0, %v1023
      %v1025 = vmul.f32 %v1022, %v1024
      %v1026 = vadd.f32 %v1022, %v1025
      %vm1027 = vweird.f32 %v1020
      %vm1028 = vweird.f32 %v1022
      %vm1029 = vmor %vm1027, %vm1028
      %v1030 = vsel %vm1029, %v1022, %v1026
      %v1031 = vand.u32 2147483647, %v1020
      %vm1032 = vcmp.eq.f32.partialorder %v1031, 8.507059e+37
      %v1033 = vand.u32 %v1020, 2147483648
      %v1034 = vor.u32 1.1754944e-38, %v1033
      %v1035 = vsel %vm1032, %v1034, %v1030
      %v1036 = vmul.f32 1.0, %v1035
      %v1037 = vrcp.pop %v1021
      %v1038 = vmul.f32 %v1021, %v1037
      %v1039 = vsub.f32 1.0, %v1038
      %v1040 = vmul.f32 %v1037, %v1039
      %v1041 = vadd.f32 %v1037, %v1040
      %vm1042 = vweird.f32 %v1021
      %vm1043 = vweird.f32 %v1037
      %vm1044 = vmor %vm1042, %vm1043
      %v1045 = vsel %vm1044, %v1037, %v1041
      %v1046 = vand.u32 2147483647, %v1021
      %vm1047 = vcmp.eq.f32.partialorder %v1046, 8.507059e+37
      %v1048 = vand.u32 %v1021, 2147483648
      %v1049 = vor.u32 1.1754944e-38, %v1048
      %v1050 = vsel %vm1047, %v1049, %v1045
      %v1051 = vmul.f32 1.0, %v1050
      %v1052 = vmul.f32 %v1036, 1.0614054
      %v1053 = vmul.f32 %v1051, 1.0614054
      %v1054 = vadd.f32 %v1052, -1.4531521
      %v1055 = vadd.f32 %v1053, -1.4531521
      %v1056 = vmul.f32 %v1054, %v1036
      %v1057 = vmul.f32 %v1055, %v1051
      %v1058 = vadd.f32 %v1056, 1.4214138
      %v1059 = vadd.f32 %v1057, 1.4214138
      %v1060 = vmul.f32 %v1058, %v1036
      %v1061 = vmul.f32 %v1059, %v1051
      %v1062 = vadd.f32 %v1060, -0.28449672
      %v1063 = vadd.f32 %v1061, -0.28449672
      %v1064 = vmul.f32 %v1062, %v1036
      %v1065 = vmul.f32 %v1063, %v1051
      %v1066 = vadd.f32 %v1064, 0.2548296
      %v1067 = vadd.f32 %v1065, 0.2548296
      %v1068 = vmul.f32 %v1066, %v1036
      %v1069 = vmul.f32 %v1067, %v1051
      %v1070 = vsub.f32 0.0, %v1016
      %v1071 = vsub.f32 0.0, %v1017
      %v1072 = vmul.f32 %v1070, %v1016
      %v1073 = vmul.f32 %v1071, %v1017
      %v1074 = vmul.f32 %v1072, 1.442695
      %v1075 = vpow.pop %v1074
      %v1076 = vmul.f32 %v1073, 1.442695
      %v1077 = vpow.pop %v1076
      %v1078 = vmul.f32 %v1068, %v1075
      %v1079 = vmul.f32 %v1069, %v1077
      %v1080 = vsub.f32 1.0, %v1078
      %v1081 = vsub.f32 1.0, %v1079
      %v1082 = vmul.f32 %v1014, %v1080
      %v1083 = vmul.f32 %v1015, %v1081
      %v1084 = vadd.f32 %v1082, 1.0
      %v1085 = vadd.f32 %v1083, 1.0
      %v1086 = vmul.f32 %v1008, %v1084
      %v1087 = vmul.f32 %v1009, %v1085
      %v1088 = vperm.slane %v410, 0
      %v1090 = vsel %vm367, %v1086, 0
      %v1093 = vsel %vm367, %v1087, 0
      %v1096 = vsel %vm367, %v974, 0
      %v1099 = vsel %vm367, %v975, 0
      %v1102 = vsel %vm367, %v976, 0
      %v1105 = vsel %vm367, %v977, 0
      %1107 = vmatpush.xpose.msra.mxu0 0.0
      %1108 = vmatpush.xpose.msra.mxu0 0.0
      %1109 = vmatpush.xpose.msra.mxu0 0.0
      %1110 = vmatpush.xpose.msra.mxu0 0.0
      %1111 = vmatpush.xpose.msra.mxu0 0.0
      %1112 = vmatpush.xpose.msra.mxu0 0.0
      %1113 = vmatpush.xpose.msra.mxu0 0.0
      %1114 = vmatpush.xpose.msra.mxu0 0.0
      %1115 = vmatpush.xpose.msra.mxu0 0.0
      %1116 = vmatpush.xpose.msra.mxu0 0.0
      %1117 = vmatpush.xpose.msra.mxu0 0.0
      %1118 = vmatpush.xpose.msra.mxu0 0.0
      %1119 = vmatpush.xpose.msra.mxu0 %v1105
      %1120 = vmatpush.xpose.msra.mxu0 %v1102
      %1121 = vmatpush.xpose.msra.mxu0 %v1099
      %1122 = vmatpush.xpose.msra.mxu0 %v1096
      %1123 = vmatmul.f32.gmra.mxu0 %v1090
      %v1124 = vpop.f32.mrf.mxu0
      %v1125 = vadd.f32 %v1088, %v1124
      %1126 = vmatmul.f32.gmra.mxu0 %v1093
      %v1127 = vpop.f32.mrf.mxu0
      %v1128 = vadd.f32 %v1088, %v1127
      %1129 = vdwg.mxu0
      %v1130 = vadd.f32 %v918, %v1125
      %v1131 = vadd.f32 %v919, %v1128
      %s1132 = scalar_lea.vmem %s6, 16
      %v1133 = vld [vmem:[%s1132] sm:$0x1]
      %v1134 = vld [vmem:[%s1132 + $0x1] sm:$0x1]
      %v1135 = vld [vmem:[%s1132 + $0x2] sm:$0x1]
      %v1136 = vld [vmem:[%s1132 + $0x3] sm:$0x1]
      %v1137 = vld [vmem:[%s1132 + $0x4] sm:$0x1]
      %v1138 = vld [vmem:[%s1132 + $0x5] sm:$0x1]
      %v1139 = vld [vmem:[%s1132 + $0x6] sm:$0x1]
      %v1140 = vld [vmem:[%s1132 + $0x7] sm:$0x1]
      %v1141 = vld [vmem:[%s1132 + $0x8] sm:$0x1]
      %v1142 = vld [vmem:[%s1132 + $0x9] sm:$0x1]
      %v1143 = vsel %vm411, %v1130, 0.0
      %1144 = vadd.xlane.f32.xlu0 %v1143
      %v1145 = vpop.xlane.xlu0 %1144
      %v1146 = vsel %vm411, %v1131, 0.0
      %1147 = vadd.xlane.f32.xlu0 %v1146
      %v1148 = vpop.xlane.xlu0 %1147
      %v1149 = vmul.f32 %v1145, %v424
      %v1150 = vmul.f32 %v1148, %v424
      %v1151 = vsub.f32 %v1130, %v1149
      %v1152 = vsub.f32 %v1131, %v1150
      %v1153 = vmul.f32 %v1151, %v1151
      %v1154 = vmul.f32 %v1152, %v1152
      %v1155 = vsel %vm411, %v1153, 0.0
      %1156 = vadd.xlane.f32.xlu0 %v1155
      %v1157 = vpop.xlane.xlu0 %1156
      %v1158 = vsel %vm411, %v1154, 0.0
      %1159 = vadd.xlane.f32.xlu0 %v1158
      %v1160 = vpop.xlane.xlu0 %1159
      %v1161 = vmul.f32 %v1157, %v424
      %v1162 = vmul.f32 %v1160, %v424
      %v1163 = vadd.f32 %v1161, 1e-06
      %v1164 = vadd.f32 %v1162, 1e-06
      %v1165 = vrsqrt.pop %v1163
      %v1166 = vmul.f32 %v1165, %v1163
      %v1167 = vmul.f32 %v1166, %v1165
      %v1168 = vmul.f32 0.5, %v1167
      %v1169 = vsub.f32 1.5, %v1168
      %v1170 = vmul.f32 %v1165, %v1169
      %vm1171 = vweird.f32 %v1163
      %vm1172 = vweird.f32 %v1165
      %vm1173 = vmor %vm1171, %vm1172
      %v1174 = vsel %vm1173, %v1165, %v1170
      %v1175 = vrsqrt.pop %v1164
      %v1176 = vmul.f32 %v1175, %v1164
      %v1177 = vmul.f32 %v1176, %v1175
      %v1178 = vmul.f32 0.5, %v1177
      %v1179 = vsub.f32 1.5, %v1178
      %v1180 = vmul.f32 %v1175, %v1179
      %vm1181 = vweird.f32 %v1164
      %vm1182 = vweird.f32 %v1175
      %vm1183 = vmor %vm1181, %vm1182
      %v1184 = vsel %vm1183, %v1175, %v1180
      %v1185 = vmul.f32 %v1151, %v1174
      %v1186 = vmul.f32 %v1152, %v1184
      %v1187 = vperm.slane %v1133, 0
      %v1188 = vmul.f32 %v1185, %v1187
      %v1189 = vmul.f32 %v1186, %v1187
      %v1190 = vperm.slane %v1134, 0
      %v1191 = vadd.f32 %v1188, %v1190
      %v1192 = vadd.f32 %v1189, %v1190
      %s1193 = scalar_lea.vmem %s5, 192
      %v1194 = vld [vmem:[%s1193] sm:$0xff]
      %v1195 = vld [vmem:[%s1193 + $0x30] sm:$0xff]
      %v1196 = vld [vmem:[%s1193 + $0x60] sm:$0xff]
      %v1197 = vld [vmem:[%s1193 + $0x90] sm:$0xff]
      %v1198 = vld [vmem:[%s1193 + $0x8] sm:$0xff]
      %v1199 = vld [vmem:[%s1193 + $0x38] sm:$0xff]
      %v1200 = vld [vmem:[%s1193 + $0x68] sm:$0xff]
      %v1201 = vld [vmem:[%s1193 + $0x98] sm:$0xff]
      %v1202 = vld [vmem:[%s1193 + $0x10] sm:$0xff]
      %v1203 = vld [vmem:[%s1193 + $0x40] sm:$0xff]
      %v1204 = vld [vmem:[%s1193 + $0x70] sm:$0xff]
      %v1205 = vld [vmem:[%s1193 + $0xa0] sm:$0xff]
      %v1206 = vld [vmem:[%s1193 + $0x18] sm:$0xff]
      %v1207 = vld [vmem:[%s1193 + $0x48] sm:$0xff]
      %v1208 = vld [vmem:[%s1193 + $0x78] sm:$0xff]
      %v1209 = vld [vmem:[%s1193 + $0xa8] sm:$0xff]
      %v1210 = vperm.slane %v1137, 0
      %v1212 = vsel %vm411, %v1191, 0
      %v1215 = vsel %vm411, %v1192, 0
      %1217 = vmatpush.msra.mxu0 0.0
      %1218 = vmatpush.msra.mxu0 0.0
      %1219 = vmatpush.msra.mxu0 0.0
      %1220 = vmatpush.msra.mxu0 0.0
      %1221 = vmatpush.msra.mxu0 0.0
      %1222 = vmatpush.msra.mxu0 0.0
      %1223 = vmatpush.msra.mxu0 0.0
      %1224 = vmatpush.msra.mxu0 0.0
      %1225 = vmatpush.msra.mxu0 0.0
      %1226 = vmatpush.msra.mxu0 0.0
      %1227 = vmatpush.msra.mxu0 0.0
      %1228 = vmatpush.msra.mxu0 0.0
      %1229 = vmatpush.msra.mxu0 %v1197
      %1230 = vmatpush.msra.mxu0 %v1196
      %1231 = vmatpush.msra.mxu0 %v1195
      %1232 = vmatpush.msra.mxu0 %v1194
      %1233 = vmatmul.f32.gmra.mxu0 %v1212
      %v1234 = vpop.f32.mrf.mxu0
      %v1235 = vadd.f32 %v1210, %v1234
      %1236 = vmatmul.f32.gmra.mxu0 %v1215
      %v1237 = vpop.f32.mrf.mxu0
      %v1238 = vadd.f32 %v1210, %v1237
      %1239 = vdwg.mxu0
      %v1240 = vperm.slane %v1138, 0
      %1241 = vmatpush.msra.mxu0 0.0
      %1242 = vmatpush.msra.mxu0 0.0
      %1243 = vmatpush.msra.mxu0 0.0
      %1244 = vmatpush.msra.mxu0 0.0
      %1245 = vmatpush.msra.mxu0 0.0
      %1246 = vmatpush.msra.mxu0 0.0
      %1247 = vmatpush.msra.mxu0 0.0
      %1248 = vmatpush.msra.mxu0 0.0
      %1249 = vmatpush.msra.mxu0 0.0
      %1250 = vmatpush.msra.mxu0 0.0
      %1251 = vmatpush.msra.mxu0 0.0
      %1252 = vmatpush.msra.mxu0 0.0
      %1253 = vmatpush.msra.mxu0 %v1201
      %1254 = vmatpush.msra.mxu0 %v1200
      %1255 = vmatpush.msra.mxu0 %v1199
      %1256 = vmatpush.msra.mxu0 %v1198
      %1257 = vmatmul.f32.gmra.mxu0 %v1212
      %v1258 = vpop.f32.mrf.mxu0
      %v1259 = vadd.f32 %v1240, %v1258
      %1260 = vmatmul.f32.gmra.mxu0 %v1215
      %v1261 = vpop.f32.mrf.mxu0
      %v1262 = vadd.f32 %v1240, %v1261
      %1263 = vdwg.mxu0
      %v1264 = vperm.slane %v1139, 0
      %1265 = vmatpush.msra.mxu0 0.0
      %1266 = vmatpush.msra.mxu0 0.0
      %1267 = vmatpush.msra.mxu0 0.0
      %1268 = vmatpush.msra.mxu0 0.0
      %1269 = vmatpush.msra.mxu0 0.0
      %1270 = vmatpush.msra.mxu0 0.0
      %1271 = vmatpush.msra.mxu0 0.0
      %1272 = vmatpush.msra.mxu0 0.0
      %1273 = vmatpush.msra.mxu0 0.0
      %1274 = vmatpush.msra.mxu0 0.0
      %1275 = vmatpush.msra.mxu0 0.0
      %1276 = vmatpush.msra.mxu0 0.0
      %1277 = vmatpush.msra.mxu0 %v1205
      %1278 = vmatpush.msra.mxu0 %v1204
      %1279 = vmatpush.msra.mxu0 %v1203
      %1280 = vmatpush.msra.mxu0 %v1202
      %1281 = vmatmul.f32.gmra.mxu0 %v1212
      %v1282 = vpop.f32.mrf.mxu0
      %v1283 = vadd.f32 %v1264, %v1282
      %1284 = vmatmul.f32.gmra.mxu0 %v1215
      %v1285 = vpop.f32.mrf.mxu0
      %v1286 = vadd.f32 %v1264, %v1285
      %1287 = vdwg.mxu0
      %v1288 = vmul.f32 %v1235, 0.35355338
      %v1289 = vmul.f32 %v1238, 0.35355338
      %1292 = vrot.lane.b32.xlu0 %v1259, 120
      %v1293 = vpop.permute.xlu0 %1292
      %1294 = vrot.lane.b32.xlu0 %v1262, 120
      %v1295 = vpop.permute.xlu0 %1294
      %v1298 = vmax.f32 %v1259, %v1293
      %v1299 = vmax.f32 %v1262, %v1295
      %1302 = vrot.lane.b32.xlu0 %v1298, 112
      %v1303 = vpop.permute.xlu0 %1302
      %1304 = vrot.lane.b32.xlu0 %v1299, 112
      %v1305 = vpop.permute.xlu0 %1304
      %v1308 = vmax.f32 %v1298, %v1303
      %v1309 = vmax.f32 %v1299, %v1305
      %1312 = vrot.lane.b32.xlu0 %v1308, 8
      %v1313 = vpop.permute.xlu0 %1312
      %1314 = vrot.lane.b32.xlu0 %v1309, 8
      %v1315 = vpop.permute.xlu0 %1314
      %1318 = vrot.lane.b32.xlu0 %v1308, 16
      %v1319 = vpop.permute.xlu0 %1318
      %1320 = vrot.lane.b32.xlu0 %v1309, 16
      %v1321 = vpop.permute.xlu0 %1320
      %1324 = vrot.lane.b32.xlu0 %v1308, 24
      %v1325 = vpop.permute.xlu0 %1324
      %1326 = vrot.lane.b32.xlu0 %v1309, 24
      %v1327 = vpop.permute.xlu0 %1326
      %v1330 = vsel %vm605, %v1308, %v1313
      %v1331 = vsel %vm605, %v1309, %v1315
      %v1332 = vsel %vm608, %v1330, %v1319
      %v1333 = vsel %vm608, %v1331, %v1321
      %v1334 = vsel %vm611, %v1332, %v1325
      %v1335 = vsel %vm611, %v1333, %v1327
      %v1336 = vmin.f32 %v1259, %v1293
      %v1337 = vmin.f32 %v1262, %v1295
      %1340 = vrot.lane.b32.xlu0 %v1336, 112
      %v1341 = vpop.permute.xlu0 %1340
      %1342 = vrot.lane.b32.xlu0 %v1337, 112
      %v1343 = vpop.permute.xlu0 %1342
      %v1346 = vmin.f32 %v1336, %v1341
      %v1347 = vmin.f32 %v1337, %v1343
      %1350 = vrot.lane.b32.xlu0 %v1346, 8
      %v1351 = vpop.permute.xlu0 %1350
      %1352 = vrot.lane.b32.xlu0 %v1347, 8
      %v1353 = vpop.permute.xlu0 %1352
      %1356 = vrot.lane.b32.xlu0 %v1346, 16
      %v1357 = vpop.permute.xlu0 %1356
      %1358 = vrot.lane.b32.xlu0 %v1347, 16
      %v1359 = vpop.permute.xlu0 %1358
      %1362 = vrot.lane.b32.xlu0 %v1346, 24
      %v1363 = vpop.permute.xlu0 %1362
      %1364 = vrot.lane.b32.xlu0 %v1347, 24
      %v1365 = vpop.permute.xlu0 %1364
      %v1368 = vsel %vm605, %v1346, %v1351
      %v1369 = vsel %vm605, %v1347, %v1353
      %v1370 = vsel %vm608, %v1368, %v1357
      %v1371 = vsel %vm608, %v1369, %v1359
      %v1372 = vsel %vm611, %v1370, %v1363
      %v1373 = vsel %vm611, %v1371, %v1365
      %vm1374 = vcmp.ge.f32.partialorder %v1288, 0.0
      %vm1375 = vcmp.ge.f32.partialorder %v1289, 0.0
      %v1376 = vmul.f32 %v1288, %v1334
      %v1377 = vmul.f32 %v1289, %v1335
      %v1378 = vmul.f32 %v1288, %v1372
      %v1379 = vmul.f32 %v1289, %v1373
      %v1380 = vsel %vm1374, %v1376, %v1378
      %v1381 = vsel %vm1375, %v1377, %v1379
      %v1383 = vsel %vm411, %v1288, 0
      %v1386 = vsel %vm411, %v1289, 0
      %1388 = vmatpush.msra.mxu0 0.0
      %1389 = vmatpush.msra.mxu0 0.0
      %1390 = vmatpush.msra.mxu0 0.0
      %1391 = vmatpush.msra.mxu0 0.0
      %1392 = vmatpush.msra.mxu0 0.0
      %1393 = vmatpush.msra.mxu0 0.0
      %1394 = vmatpush.msra.mxu0 0.0
      %1395 = vmatpush.msra.mxu0 0.0
      %1396 = vmatpush.msra.mxu0 0.0
      %1397 = vmatpush.msra.mxu0 0.0
      %1398 = vmatpush.msra.mxu0 0.0
      %1399 = vmatpush.msra.mxu0 0.0
      %1400 = vmatpush.msra.mxu0 %v663
      %1401 = vmatpush.msra.mxu0 %v662
      %1402 = vmatpush.msra.mxu0 %v661
      %1403 = vmatpush.msra.mxu0 %v660
      %1404 = vmatmul.f32.gmra.mxu0 %v1383
      %v1405 = vpop.f32.mrf.mxu0
      %v1406 = vadd.f32 0.0, %v1405
      %1407 = vmatmul.f32.gmra.mxu0 %v1386
      %v1408 = vpop.f32.mrf.mxu0
      %v1409 = vadd.f32 0.0, %v1408
      %1410 = vdwg.mxu0
      %v1412 = vsel %vm411, %v1380, 0
      %v1415 = vsel %vm411, %v1381, 0
      %1417 = vmatpush.msra.mxu0 0.0
      %1418 = vmatpush.msra.mxu0 0.0
      %1419 = vmatpush.msra.mxu0 0.0
      %1420 = vmatpush.msra.mxu0 0.0
      %1421 = vmatpush.msra.mxu0 0.0
      %1422 = vmatpush.msra.mxu0 0.0
      %1423 = vmatpush.msra.mxu0 0.0
      %1424 = vmatpush.msra.mxu0 0.0
      %1425 = vmatpush.msra.mxu0 0.0
      %1426 = vmatpush.msra.mxu0 0.0
      %1427 = vmatpush.msra.mxu0 0.0
      %1428 = vmatpush.msra.mxu0 0.0
      %1429 = vmatpush.msra.mxu0 %v663
      %1430 = vmatpush.msra.mxu0 %v662
      %1431 = vmatpush.msra.mxu0 %v661
      %1432 = vmatpush.msra.mxu0 %v660
      %1433 = vmatmul.f32.gmra.mxu0 %v1412
      %v1434 = vpop.f32.mrf.mxu0
      %v1435 = vadd.f32 0.0, %v1434
      %1436 = vmatmul.f32.gmra.mxu0 %v1415
      %v1437 = vpop.f32.mrf.mxu0
      %v1438 = vadd.f32 0.0, %v1437
      %1439 = vdwg.mxu0
      %v1440 = vsel %vm411, %v1259, 0
      %v1442 = vsel %vm411, %v1262, 0
      %1444 = vmatpush.msra.mxu0 0.0
      %1445 = vmatpush.msra.mxu0 0.0
      %1446 = vmatpush.msra.mxu0 0.0
      %1447 = vmatpush.msra.mxu0 0.0
      %1448 = vmatpush.msra.mxu0 0.0
      %1449 = vmatpush.msra.mxu0 0.0
      %1450 = vmatpush.msra.mxu0 0.0
      %1451 = vmatpush.msra.mxu0 0.0
      %1452 = vmatpush.msra.mxu0 0.0
      %1453 = vmatpush.msra.mxu0 0.0
      %1454 = vmatpush.msra.mxu0 0.0
      %1455 = vmatpush.msra.mxu0 0.0
      %1456 = vmatpush.msra.mxu0 %v725
      %1457 = vmatpush.msra.mxu0 %v724
      %1458 = vmatpush.msra.mxu0 %v723
      %1459 = vmatpush.msra.mxu0 %v722
      %1460 = vmatmul.f32.gmra.mxu0 %v1440
      %v1461 = vpop.f32.mrf.mxu0
      %v1462 = vadd.f32 0.0, %v1461
      %1463 = vmatmul.f32.gmra.mxu0 %v1442
      %v1464 = vpop.f32.mrf.mxu0
      %v1465 = vadd.f32 0.0, %v1464
      %1466 = vdwg.mxu0
      %v1468 = vsel %vm411, %v1283, 0
      %v1471 = vsel %vm411, %v1286, 0
      %1473 = vmatpush.msra.mxu0 0.0
      %1474 = vmatpush.msra.mxu0 0.0
      %1475 = vmatpush.msra.mxu0 0.0
      %1476 = vmatpush.msra.mxu0 0.0
      %1477 = vmatpush.msra.mxu0 0.0
      %1478 = vmatpush.msra.mxu0 0.0
      %1479 = vmatpush.msra.mxu0 0.0
      %1480 = vmatpush.msra.mxu0 0.0
      %1481 = vmatpush.msra.mxu0 0.0
      %1482 = vmatpush.msra.mxu0 0.0
      %1483 = vmatpush.msra.mxu0 0.0
      %1484 = vmatpush.msra.mxu0 0.0
      %1485 = vmatpush.msra.mxu0 %v663
      %1486 = vmatpush.msra.mxu0 %v662
      %1487 = vmatpush.msra.mxu0 %v661
      %1488 = vmatpush.msra.mxu0 %v660
      %1489 = vmatmul.f32.gmra.mxu0 %v1468
      %v1490 = vpop.f32.mrf.mxu0
      %v1491 = vadd.f32 0.0, %v1490
      %1492 = vmatmul.f32.gmra.mxu0 %v1471
      %v1493 = vpop.f32.mrf.mxu0
      %v1494 = vadd.f32 0.0, %v1493
      %1495 = vdwg.mxu0
      %v1496 = vmul.f32 %v1406, %v1462
      %v1497 = vmul.f32 %v1409, %v1465
      %v1498 = vsub.f32 %v1496, %v1435
      %v1499 = vsub.f32 %v1497, %v1438
      %v1500 = vmul.f32 %v1498, 1.442695
      %v1501 = vpow.pop %v1500
      %v1502 = vmul.f32 %v1499, 1.442695
      %v1503 = vpow.pop %v1502
      %1504 = vmatpush.msra.mxu0 %v805
      %1505 = vmatpush.msra.mxu0 %v804
      %1506 = vmatpush.msra.mxu0 %v803
      %1507 = vmatpush.msra.mxu0 %v802
      %1508 = vmatpush.msra.mxu0 %v801
      %1509 = vmatpush.msra.mxu0 %v800
      %1510 = vmatpush.msra.mxu0 %v799
      %1511 = vmatpush.msra.mxu0 %v798
      %1512 = vmatpush.msra.mxu0 %v797
      %1513 = vmatpush.msra.mxu0 %v796
      %1514 = vmatpush.msra.mxu0 %v795
      %1515 = vmatpush.msra.mxu0 %v794
      %1516 = vmatpush.msra.mxu0 %v793
      %1517 = vmatpush.msra.mxu0 %v792
      %1518 = vmatpush.msra.mxu0 %v791
      %1519 = vmatpush.msra.mxu0 %v790
      %1520 = vmatmul.f32.gmra.mxu0 %v1501
      %v1521 = vpop.f32.mrf.mxu0
      %v1522 = vadd.f32 0.0, %v1521
      %1523 = vmatmul.f32.gmra.mxu0 %v1503
      %v1524 = vpop.f32.mrf.mxu0
      %v1525 = vadd.f32 0.0, %v1524
      %1526 = vdwg.mxu0
      %v1527 = vrcp.pop %v1522
      %v1528 = vmul.f32 %v1522, %v1527
      %v1529 = vsub.f32 1.0, %v1528
      %v1530 = vmul.f32 %v1527, %v1529
      %v1531 = vadd.f32 %v1527, %v1530
      %vm1532 = vweird.f32 %v1522
      %vm1533 = vweird.f32 %v1527
      %vm1534 = vmor %vm1532, %vm1533
      %v1535 = vsel %vm1534, %v1527, %v1531
      %v1536 = vand.u32 2147483647, %v1522
      %vm1537 = vcmp.eq.f32.partialorder %v1536, 8.507059e+37
      %v1538 = vand.u32 %v1522, 2147483648
      %v1539 = vor.u32 1.1754944e-38, %v1538
      %v1540 = vsel %vm1537, %v1539, %v1535
      %v1541 = vmul.f32 %v1501, %v1540
      %v1542 = vrcp.pop %v1525
      %v1543 = vmul.f32 %v1525, %v1542
      %v1544 = vsub.f32 1.0, %v1543
      %v1545 = vmul.f32 %v1542, %v1544
      %v1546 = vadd.f32 %v1542, %v1545
      %vm1547 = vweird.f32 %v1525
      %vm1548 = vweird.f32 %v1542
      %vm1549 = vmor %vm1547, %vm1548
      %v1550 = vsel %vm1549, %v1542, %v1546
      %v1551 = vand.u32 2147483647, %v1525
      %vm1552 = vcmp.eq.f32.partialorder %v1551, 8.507059e+37
      %v1553 = vand.u32 %v1525, 2147483648
      %v1554 = vor.u32 1.1754944e-38, %v1553
      %v1555 = vsel %vm1552, %v1554, %v1550
      %v1556 = vmul.f32 %v1503, %v1555
      %v1557 = vmul.f32 %v1541, %v1491
      %v1558 = vmul.f32 %v1556, %v1494
      %1559 = vmatpush.xpose.msra.mxu0 0.0
      %1560 = vmatpush.xpose.msra.mxu0 0.0
      %1561 = vmatpush.xpose.msra.mxu0 0.0
      %1562 = vmatpush.xpose.msra.mxu0 0.0
      %1563 = vmatpush.xpose.msra.mxu0 0.0
      %1564 = vmatpush.xpose.msra.mxu0 0.0
      %1565 = vmatpush.xpose.msra.mxu0 0.0
      %1566 = vmatpush.xpose.msra.mxu0 0.0
      %1567 = vmatpush.xpose.msra.mxu0 0.0
      %1568 = vmatpush.xpose.msra.mxu0 0.0
      %1569 = vmatpush.xpose.msra.mxu0 0.0
      %1570 = vmatpush.xpose.msra.mxu0 0.0
      %1571 = vmatpush.xpose.msra.mxu0 %v864
      %1572 = vmatpush.xpose.msra.mxu0 %v863
      %1573 = vmatpush.xpose.msra.mxu0 %v862
      %1574 = vmatpush.xpose.msra.mxu0 %v861
      %1575 = vmatmul.f32.gmra.mxu0 %v1557
      %v1576 = vpop.f32.mrf.mxu0
      %v1577 = vadd.f32 0.0, %v1576
      %1578 = vmatmul.f32.gmra.mxu0 %v1558
      %v1579 = vpop.f32.mrf.mxu0
      %v1580 = vadd.f32 0.0, %v1579
      %1581 = vdwg.mxu0
      %v1582 = vperm.slane %v1140, 0
      %v1584 = vsel %vm411, %v1577, 0
      %v1587 = vsel %vm411, %v1580, 0
      %1589 = vmatpush.msra.mxu0 0.0
      %1590 = vmatpush.msra.mxu0 0.0
      %1591 = vmatpush.msra.mxu0 0.0
      %1592 = vmatpush.msra.mxu0 0.0
      %1593 = vmatpush.msra.mxu0 0.0
      %1594 = vmatpush.msra.mxu0 0.0
      %1595 = vmatpush.msra.mxu0 0.0
      %1596 = vmatpush.msra.mxu0 0.0
      %1597 = vmatpush.msra.mxu0 0.0
      %1598 = vmatpush.msra.mxu0 0.0
      %1599 = vmatpush.msra.mxu0 0.0
      %1600 = vmatpush.msra.mxu0 0.0
      %1601 = vmatpush.msra.mxu0 %v1209
      %1602 = vmatpush.msra.mxu0 %v1208
      %1603 = vmatpush.msra.mxu0 %v1207
      %1604 = vmatpush.msra.mxu0 %v1206
      %1605 = vmatmul.f32.gmra.mxu0 %v1584
      %v1606 = vpop.f32.mrf.mxu0
      %v1607 = vadd.f32 %v1582, %v1606
      %1608 = vmatmul.f32.gmra.mxu0 %v1587
      %v1609 = vpop.f32.mrf.mxu0
      %v1610 = vadd.f32 %v1582, %v1609
      %1611 = vdwg.mxu0
      %v1612 = vadd.f32 %v1130, %v1607
      %v1613 = vadd.f32 %v1131, %v1610
      %v1614 = vsel %vm411, %v1612, 0.0
      %1615 = vadd.xlane.f32.xlu0 %v1614
      %v1616 = vpop.xlane.xlu0 %1615
      %v1617 = vsel %vm411, %v1613, 0.0
      %1618 = vadd.xlane.f32.xlu0 %v1617
      %v1619 = vpop.xlane.xlu0 %1618
      %v1620 = vmul.f32 %v1616, %v424
      %v1621 = vmul.f32 %v1619, %v424
      %v1622 = vsub.f32 %v1612, %v1620
      %v1623 = vsub.f32 %v1613, %v1621
      %v1624 = vmul.f32 %v1622, %v1622
      %v1625 = vmul.f32 %v1623, %v1623
      %v1626 = vsel %vm411, %v1624, 0.0
      %1627 = vadd.xlane.f32.xlu0 %v1626
      %v1628 = vpop.xlane.xlu0 %1627
      %v1629 = vsel %vm411, %v1625, 0.0
      %1630 = vadd.xlane.f32.xlu0 %v1629
      %v1631 = vpop.xlane.xlu0 %1630
      %v1632 = vmul.f32 %v1628, %v424
      %v1633 = vmul.f32 %v1631, %v424
      %v1634 = vadd.f32 %v1632, 1e-06
      %v1635 = vadd.f32 %v1633, 1e-06
      %v1636 = vrsqrt.pop %v1634
      %v1637 = vmul.f32 %v1636, %v1634
      %v1638 = vmul.f32 %v1637, %v1636
      %v1639 = vmul.f32 0.5, %v1638
      %v1640 = vsub.f32 1.5, %v1639
      %v1641 = vmul.f32 %v1636, %v1640
      %vm1642 = vweird.f32 %v1634
      %vm1643 = vweird.f32 %v1636
      %vm1644 = vmor %vm1642, %vm1643
      %v1645 = vsel %vm1644, %v1636, %v1641
      %v1646 = vrsqrt.pop %v1635
      %v1647 = vmul.f32 %v1646, %v1635
      %v1648 = vmul.f32 %v1647, %v1646
      %v1649 = vmul.f32 0.5, %v1648
      %v1650 = vsub.f32 1.5, %v1649
      %v1651 = vmul.f32 %v1646, %v1650
      %vm1652 = vweird.f32 %v1635
      %vm1653 = vweird.f32 %v1646
      %vm1654 = vmor %vm1652, %vm1653
      %v1655 = vsel %vm1654, %v1646, %v1651
      %v1656 = vmul.f32 %v1622, %v1645
      %v1657 = vmul.f32 %v1623, %v1655
      %v1658 = vperm.slane %v1135, 0
      %v1659 = vmul.f32 %v1656, %v1658
      %v1660 = vmul.f32 %v1657, %v1658
      %v1661 = vperm.slane %v1136, 0
      %v1662 = vadd.f32 %v1659, %v1661
      %v1663 = vadd.f32 %v1660, %v1661
      %v1664 = vld [vmem:[%s1193 + $0x20] sm:$0xff]
      %v1665 = vld [vmem:[%s1193 + $0x50] sm:$0xff]
      %v1666 = vld [vmem:[%s1193 + $0x80] sm:$0xff]
      %v1667 = vld [vmem:[%s1193 + $0xb0] sm:$0xff]
      %v1668 = vld [vmem:[%s1193 + $0x28] sm:$0xff]
      %v1669 = vld [vmem:[%s1193 + $0x58] sm:$0xff]
      %v1670 = vld [vmem:[%s1193 + $0x88] sm:$0xff]
      %v1671 = vld [vmem:[%s1193 + $0xb8] sm:$0xff]
      %v1672 = vperm.slane %v1141, 0
      %v1674 = vsel %vm411, %v1662, 0
      %v1677 = vsel %vm411, %v1663, 0
      %1679 = vmatpush.msra.mxu0 0.0
      %1680 = vmatpush.msra.mxu0 0.0
      %1681 = vmatpush.msra.mxu0 0.0
      %1682 = vmatpush.msra.mxu0 0.0
      %1683 = vmatpush.msra.mxu0 0.0
      %1684 = vmatpush.msra.mxu0 0.0
      %1685 = vmatpush.msra.mxu0 0.0
      %1686 = vmatpush.msra.mxu0 0.0
      %1687 = vmatpush.msra.mxu0 0.0
      %1688 = vmatpush.msra.mxu0 0.0
      %1689 = vmatpush.msra.mxu0 0.0
      %1690 = vmatpush.msra.mxu0 0.0
      %1691 = vmatpush.msra.mxu0 %v1667
      %1692 = vmatpush.msra.mxu0 %v1666
      %1693 = vmatpush.msra.mxu0 %v1665
      %1694 = vmatpush.msra.mxu0 %v1664
      %1695 = vmatmul.f32.gmra.mxu0 %v1674
      %v1696 = vpop.f32.mrf.mxu0
      %v1697 = vadd.f32 %v1672, %v1696
      %1698 = vmatmul.f32.gmra.mxu0 %v1677
      %v1699 = vpop.f32.mrf.mxu0
      %v1700 = vadd.f32 %v1672, %v1699
      %1701 = vdwg.mxu0
      %v1702 = vmul.f32 %v1697, 0.5
      %v1703 = vmul.f32 %v1700, 0.5
      %v1704 = vmul.f32 %v1697, 0.70710677
      %v1705 = vmul.f32 %v1700, 0.70710677
      %vm1706 = vcmp.ge.f32.partialorder %v1704, 0.0
      %vm1707 = vcmp.ge.f32.partialorder %v1705, 0.0
      %v1708 = vsel %vm1706, 1.0, -1.0
      %v1709 = vsel %vm1707, 1.0, -1.0
      %v1710 = vand.u32 2147483647, %v1704
      %v1711 = vand.u32 2147483647, %v1705
      %v1712 = vmul.f32 %v1710, 0.3275911
      %v1713 = vmul.f32 %v1711, 0.3275911
      %v1714 = vadd.f32 %v1712, 1.0
      %v1715 = vadd.f32 %v1713, 1.0
      %v1716 = vrcp.pop %v1714
      %v1717 = vmul.f32 %v1714, %v1716
      %v1718 = vsub.f32 1.0, %v1717
      %v1719 = vmul.f32 %v1716, %v1718
      %v1720 = vadd.f32 %v1716, %v1719
      %vm1721 = vweird.f32 %v1714
      %vm1722 = vweird.f32 %v1716
      %vm1723 = vmor %vm1721, %vm1722
      %v1724 = vsel %vm1723, %v1716, %v1720
      %v1725 = vand.u32 2147483647, %v1714
      %vm1726 = vcmp.eq.f32.partialorder %v1725, 8.507059e+37
      %v1727 = vand.u32 %v1714, 2147483648
      %v1728 = vor.u32 1.1754944e-38, %v1727
      %v1729 = vsel %vm1726, %v1728, %v1724
      %v1730 = vmul.f32 1.0, %v1729
      %v1731 = vrcp.pop %v1715
      %v1732 = vmul.f32 %v1715, %v1731
      %v1733 = vsub.f32 1.0, %v1732
      %v1734 = vmul.f32 %v1731, %v1733
      %v1735 = vadd.f32 %v1731, %v1734
      %vm1736 = vweird.f32 %v1715
      %vm1737 = vweird.f32 %v1731
      %vm1738 = vmor %vm1736, %vm1737
      %v1739 = vsel %vm1738, %v1731, %v1735
      %v1740 = vand.u32 2147483647, %v1715
      %vm1741 = vcmp.eq.f32.partialorder %v1740, 8.507059e+37
      %v1742 = vand.u32 %v1715, 2147483648
      %v1743 = vor.u32 1.1754944e-38, %v1742
      %v1744 = vsel %vm1741, %v1743, %v1739
      %v1745 = vmul.f32 1.0, %v1744
      %v1746 = vmul.f32 %v1730, 1.0614054
      %v1747 = vmul.f32 %v1745, 1.0614054
      %v1748 = vadd.f32 %v1746, -1.4531521
      %v1749 = vadd.f32 %v1747, -1.4531521
      %v1750 = vmul.f32 %v1748, %v1730
      %v1751 = vmul.f32 %v1749, %v1745
      %v1752 = vadd.f32 %v1750, 1.4214138
      %v1753 = vadd.f32 %v1751, 1.4214138
      %v1754 = vmul.f32 %v1752, %v1730
      %v1755 = vmul.f32 %v1753, %v1745
      %v1756 = vadd.f32 %v1754, -0.28449672
      %v1757 = vadd.f32 %v1755, -0.28449672
      %v1758 = vmul.f32 %v1756, %v1730
      %v1759 = vmul.f32 %v1757, %v1745
      %v1760 = vadd.f32 %v1758, 0.2548296
      %v1761 = vadd.f32 %v1759, 0.2548296
      %v1762 = vmul.f32 %v1760, %v1730
      %v1763 = vmul.f32 %v1761, %v1745
      %v1764 = vsub.f32 0.0, %v1710
      %v1765 = vsub.f32 0.0, %v1711
      %v1766 = vmul.f32 %v1764, %v1710
      %v1767 = vmul.f32 %v1765, %v1711
      %v1768 = vmul.f32 %v1766, 1.442695
      %v1769 = vpow.pop %v1768
      %v1770 = vmul.f32 %v1767, 1.442695
      %v1771 = vpow.pop %v1770
      %v1772 = vmul.f32 %v1762, %v1769
      %v1773 = vmul.f32 %v1763, %v1771
      %v1774 = vsub.f32 1.0, %v1772
      %v1775 = vsub.f32 1.0, %v1773
      %v1776 = vmul.f32 %v1708, %v1774
      %v1777 = vmul.f32 %v1709, %v1775
      %v1778 = vadd.f32 %v1776, 1.0
      %v1779 = vadd.f32 %v1777, 1.0
      %v1780 = vmul.f32 %v1702, %v1778
      %v1781 = vmul.f32 %v1703, %v1779
      %v1782 = vperm.slane %v1142, 0
      %v1784 = vsel %vm367, %v1780, 0
      %v1787 = vsel %vm367, %v1781, 0
      %v1790 = vsel %vm367, %v1668, 0
      %v1793 = vsel %vm367, %v1669, 0
      %v1796 = vsel %vm367, %v1670, 0
      %v1799 = vsel %vm367, %v1671, 0
      %1801 = vmatpush.xpose.msra.mxu0 0.0
      %1802 = vmatpush.xpose.msra.mxu0 0.0
      %1803 = vmatpush.xpose.msra.mxu0 0.0
      %1804 = vmatpush.xpose.msra.mxu0 0.0
      %1805 = vmatpush.xpose.msra.mxu0 0.0
      %1806 = vmatpush.xpose.msra.mxu0 0.0
      %1807 = vmatpush.xpose.msra.mxu0 0.0
      %1808 = vmatpush.xpose.msra.mxu0 0.0
      %1809 = vmatpush.xpose.msra.mxu0 0.0
      %1810 = vmatpush.xpose.msra.mxu0 0.0
      %1811 = vmatpush.xpose.msra.mxu0 0.0
      %1812 = vmatpush.xpose.msra.mxu0 0.0
      %1813 = vmatpush.xpose.msra.mxu0 %v1799
      %1814 = vmatpush.xpose.msra.mxu0 %v1796
      %1815 = vmatpush.xpose.msra.mxu0 %v1793
      %1816 = vmatpush.xpose.msra.mxu0 %v1790
      %1817 = vmatmul.f32.gmra.mxu0 %v1784
      %v1818 = vpop.f32.mrf.mxu0
      %v1819 = vadd.f32 %v1782, %v1818
      %1820 = vmatmul.f32.gmra.mxu0 %v1787
      %v1821 = vpop.f32.mrf.mxu0
      %v1822 = vadd.f32 %v1782, %v1821
      %1823 = vdwg.mxu0
      %v1824 = vadd.f32 %v1612, %v1819
      %v1825 = vadd.f32 %v1613, %v1822
      %v1826 = vld [vmem:[%s3 + $0x22] sm:$0x1]
      %v1827 = vld [vmem:[%s3 + $0x23] sm:$0x1]
      %v1828 = vsel %vm411, %v1824, 0.0
      %1829 = vadd.xlane.f32.xlu0 %v1828
      %v1830 = vpop.xlane.xlu0 %1829
      %v1831 = vsel %vm411, %v1825, 0.0
      %1832 = vadd.xlane.f32.xlu0 %v1831
      %v1833 = vpop.xlane.xlu0 %1832
      %v1834 = vmul.f32 %v1830, %v424
      %v1835 = vmul.f32 %v1833, %v424
      %v1836 = vsub.f32 %v1824, %v1834
      %v1837 = vsub.f32 %v1825, %v1835
      %v1838 = vmul.f32 %v1836, %v1836
      %v1839 = vmul.f32 %v1837, %v1837
      %v1840 = vsel %vm411, %v1838, 0.0
      %1841 = vadd.xlane.f32.xlu0 %v1840
      %v1842 = vpop.xlane.xlu0 %1841
      %v1843 = vsel %vm411, %v1839, 0.0
      %1844 = vadd.xlane.f32.xlu0 %v1843
      %v1845 = vpop.xlane.xlu0 %1844
      %v1846 = vmul.f32 %v1842, %v424
      %v1847 = vmul.f32 %v1845, %v424
      %v1848 = vadd.f32 %v1846, 1e-06
      %v1849 = vadd.f32 %v1847, 1e-06
      %v1850 = vrsqrt.pop %v1848
      %v1851 = vmul.f32 %v1850, %v1848
      %v1852 = vmul.f32 %v1851, %v1850
      %v1853 = vmul.f32 0.5, %v1852
      %v1854 = vsub.f32 1.5, %v1853
      %v1855 = vmul.f32 %v1850, %v1854
      %vm1856 = vweird.f32 %v1848
      %vm1857 = vweird.f32 %v1850
      %vm1858 = vmor %vm1856, %vm1857
      %v1859 = vsel %vm1858, %v1850, %v1855
      %v1860 = vrsqrt.pop %v1849
      %v1861 = vmul.f32 %v1860, %v1849
      %v1862 = vmul.f32 %v1861, %v1860
      %v1863 = vmul.f32 0.5, %v1862
      %v1864 = vsub.f32 1.5, %v1863
      %v1865 = vmul.f32 %v1860, %v1864
      %vm1866 = vweird.f32 %v1849
      %vm1867 = vweird.f32 %v1860
      %vm1868 = vmor %vm1866, %vm1867
      %v1869 = vsel %vm1868, %v1860, %v1865
      %v1870 = vmul.f32 %v1836, %v1859
      %v1871 = vmul.f32 %v1837, %v1869
      %v1872 = vperm.slane %v1826, 0
      %v1873 = vmul.f32 %v1870, %v1872
      %v1874 = vmul.f32 %v1871, %v1872
      %v1875 = vperm.slane %v1827, 0
      %v1876 = vadd.f32 %v1873, %v1875
      %v1877 = vadd.f32 %v1874, %v1875
      %v1878 = vld [vmem:[%s3 + $0x20] sm:$0x1]
      %1880 = vset.pattern.permute.xlu0 0
      %1881 = vperm.xlu0 %1880, %v355
      %v1882 = vpop.permute.xlu0 %1881
      %1885 = vset.pattern.permute.xlu0 0
      %1886 = vperm.xlu0 %1885, %v356
      %v1887 = vpop.permute.xlu0 %1886
      %v1889 = vmul.f32 %v1882, %v1876
      %v1890 = vmul.f32 %v1887, %v1877
      %v1891 = vsub.f32 1.0, %v355
      %v1892 = vsub.f32 1.0, %v356
      %1894 = vset.pattern.permute.xlu0 0
      %1895 = vperm.xlu0 %1894, %v1891
      %v1896 = vpop.permute.xlu0 %1895
      %1899 = vset.pattern.permute.xlu0 0
      %1900 = vperm.xlu0 %1899, %v1892
      %v1901 = vpop.permute.xlu0 %1900
      %v1903 = vperm.slane %v1878, 0
      %v1904 = vmul.f32 %v1896, %v1903
      %v1905 = vmul.f32 %v1901, %v1903
      %v1906 = vadd.f32 %v1889, %v1904
      %v1907 = vadd.f32 %v1890, %v1905
      %v1908 = vld [vmem:[%s3 + $0x10] sm:$0xff]
      %v1909 = vld [vmem:[%s3 + $0x18] sm:$0xff]
      %v1910 = vadd.f32 %v1906, %v1908
      %v1911 = vadd.f32 %v1907, %v1909
      %v1912 = vld [vmem:[%s8] sm:$0x1]
      %v1913 = vld [vmem:[%s8 + $0x1] sm:$0x1]
      %v1914 = vld [vmem:[%s8 + $0x2] sm:$0x1]
      %v1915 = vld [vmem:[%s8 + $0x3] sm:$0x1]
      %v1916 = vld [vmem:[%s8 + $0x4] sm:$0x1]
      %v1917 = vld [vmem:[%s8 + $0x5] sm:$0x1]
      %v1918 = vld [vmem:[%s8 + $0x6] sm:$0x1]
      %v1919 = vld [vmem:[%s8 + $0x7] sm:$0x1]
      %v1920 = vld [vmem:[%s8 + $0x8] sm:$0x1]
      %v1921 = vld [vmem:[%s8 + $0x9] sm:$0x1]
      %v1922 = vld [vmem:[%s8 + $0xa] sm:$0x1]
      %v1923 = vld [vmem:[%s8 + $0xb] sm:$0x1]
      %v1924 = vld [vmem:[%s8 + $0xc] sm:$0x1]
      %v1925 = vld [vmem:[%s8 + $0xd] sm:$0x1]
      %v1926 = vld [vmem:[%s8 + $0xe] sm:$0x1]
      %v1927 = vld [vmem:[%s8 + $0xf] sm:$0x1]
      %v1928 = vsel %vm411, %v392, 0.0
      %1929 = vadd.xlane.f32.xlu0 %v1928
      %v1930 = vpop.xlane.xlu0 %1929
      %v1931 = vsel %vm411, %v395, 0.0
      %1932 = vadd.xlane.f32.xlu0 %v1931
      %v1933 = vpop.xlane.xlu0 %1932
      %v1934 = vmul.f32 %v1930, %v424
      %v1935 = vmul.f32 %v1933, %v424
      %v1936 = vsub.f32 %v392, %v1934
      %v1937 = vsub.f32 %v395, %v1935
      %v1938 = vmul.f32 %v1936, %v1936
      %v1939 = vmul.f32 %v1937, %v1937
      %v1940 = vsel %vm411, %v1938, 0.0
      %1941 = vadd.xlane.f32.xlu0 %v1940
      %v1942 = vpop.xlane.xlu0 %1941
      %v1943 = vsel %vm411, %v1939, 0.0
      %1944 = vadd.xlane.f32.xlu0 %v1943
      %v1945 = vpop.xlane.xlu0 %1944
      %v1946 = vmul.f32 %v1942, %v424
      %v1947 = vmul.f32 %v1945, %v424
      %v1948 = vadd.f32 %v1946, 1e-06
      %v1949 = vadd.f32 %v1947, 1e-06
      %v1950 = vrsqrt.pop %v1948
      %v1951 = vmul.f32 %v1950, %v1948
      %v1952 = vmul.f32 %v1951, %v1950
      %v1953 = vmul.f32 0.5, %v1952
      %v1954 = vsub.f32 1.5, %v1953
      %v1955 = vmul.f32 %v1950, %v1954
      %vm1956 = vweird.f32 %v1948
      %vm1957 = vweird.f32 %v1950
      %vm1958 = vmor %vm1956, %vm1957
      %v1959 = vsel %vm1958, %v1950, %v1955
      %v1960 = vrsqrt.pop %v1949
      %v1961 = vmul.f32 %v1960, %v1949
      %v1962 = vmul.f32 %v1961, %v1960
      %v1963 = vmul.f32 0.5, %v1962
      %v1964 = vsub.f32 1.5, %v1963
      %v1965 = vmul.f32 %v1960, %v1964
      %vm1966 = vweird.f32 %v1949
      %vm1967 = vweird.f32 %v1960
      %vm1968 = vmor %vm1966, %vm1967
      %v1969 = vsel %vm1968, %v1960, %v1965
      %v1970 = vmul.f32 %v1936, %v1959
      %v1971 = vmul.f32 %v1937, %v1969
      %v1972 = vperm.slane %v1912, 0
      %v1973 = vmul.f32 %v1970, %v1972
      %v1974 = vmul.f32 %v1971, %v1972
      %v1975 = vperm.slane %v1913, 0
      %v1976 = vadd.f32 %v1973, %v1975
      %v1977 = vadd.f32 %v1974, %v1975
      %v1978 = vld [vmem:[%s7] sm:$0xff]
      %v1979 = vld [vmem:[%s7 + $0x50] sm:$0xff]
      %v1980 = vld [vmem:[%s7 + $0xa0] sm:$0xff]
      %v1981 = vld [vmem:[%s7 + $0xf0] sm:$0xff]
      %v1982 = vld [vmem:[%s7 + $0x8] sm:$0xff]
      %v1983 = vld [vmem:[%s7 + $0x58] sm:$0xff]
      %v1984 = vld [vmem:[%s7 + $0xa8] sm:$0xff]
      %v1985 = vld [vmem:[%s7 + $0xf8] sm:$0xff]
      %v1986 = vld [vmem:[%s7 + $0x10] sm:$0xff]
      %v1987 = vld [vmem:[%s7 + $0x60] sm:$0xff]
      %v1988 = vld [vmem:[%s7 + $0xb0] sm:$0xff]
      %v1989 = vld [vmem:[%s7 + $0x100] sm:$0xff]
      %v1990 = vld [vmem:[%s7 + $0x18] sm:$0xff]
      %v1991 = vld [vmem:[%s7 + $0x68] sm:$0xff]
      %v1992 = vld [vmem:[%s7 + $0xb8] sm:$0xff]
      %v1993 = vld [vmem:[%s7 + $0x108] sm:$0xff]
      %v1994 = vperm.slane %v1918, 0
      %v1996 = vsel %vm411, %v1976, 0
      %v1999 = vsel %vm411, %v1977, 0
      %2001 = vmatpush.msra.mxu0 0.0
      %2002 = vmatpush.msra.mxu0 0.0
      %2003 = vmatpush.msra.mxu0 0.0
      %2004 = vmatpush.msra.mxu0 0.0
      %2005 = vmatpush.msra.mxu0 0.0
      %2006 = vmatpush.msra.mxu0 0.0
      %2007 = vmatpush.msra.mxu0 0.0
      %2008 = vmatpush.msra.mxu0 0.0
      %2009 = vmatpush.msra.mxu0 0.0
      %2010 = vmatpush.msra.mxu0 0.0
      %2011 = vmatpush.msra.mxu0 0.0
      %2012 = vmatpush.msra.mxu0 0.0
      %2013 = vmatpush.msra.mxu0 %v1981
      %2014 = vmatpush.msra.mxu0 %v1980
      %2015 = vmatpush.msra.mxu0 %v1979
      %2016 = vmatpush.msra.mxu0 %v1978
      %2017 = vmatmul.f32.gmra.mxu0 %v1996
      %v2018 = vpop.f32.mrf.mxu0
      %v2019 = vadd.f32 %v1994, %v2018
      %2020 = vmatmul.f32.gmra.mxu0 %v1999
      %v2021 = vpop.f32.mrf.mxu0
      %v2022 = vadd.f32 %v1994, %v2021
      %2023 = vdwg.mxu0
      %v2024 = vperm.slane %v1919, 0
      %2025 = vmatpush.msra.mxu0 0.0
      %2026 = vmatpush.msra.mxu0 0.0
      %2027 = vmatpush.msra.mxu0 0.0
      %2028 = vmatpush.msra.mxu0 0.0
      %2029 = vmatpush.msra.mxu0 0.0
      %2030 = vmatpush.msra.mxu0 0.0
      %2031 = vmatpush.msra.mxu0 0.0
      %2032 = vmatpush.msra.mxu0 0.0
      %2033 = vmatpush.msra.mxu0 0.0
      %2034 = vmatpush.msra.mxu0 0.0
      %2035 = vmatpush.msra.mxu0 0.0
      %2036 = vmatpush.msra.mxu0 0.0
      %2037 = vmatpush.msra.mxu0 %v1985
      %2038 = vmatpush.msra.mxu0 %v1984
      %2039 = vmatpush.msra.mxu0 %v1983
      %2040 = vmatpush.msra.mxu0 %v1982
      %2041 = vmatmul.f32.gmra.mxu0 %v1996
      %v2042 = vpop.f32.mrf.mxu0
      %v2043 = vadd.f32 %v2024, %v2042
      %2044 = vmatmul.f32.gmra.mxu0 %v1999
      %v2045 = vpop.f32.mrf.mxu0
      %v2046 = vadd.f32 %v2024, %v2045
      %2047 = vdwg.mxu0
      %v2048 = vperm.slane %v1920, 0
      %2049 = vmatpush.msra.mxu0 0.0
      %2050 = vmatpush.msra.mxu0 0.0
      %2051 = vmatpush.msra.mxu0 0.0
      %2052 = vmatpush.msra.mxu0 0.0
      %2053 = vmatpush.msra.mxu0 0.0
      %2054 = vmatpush.msra.mxu0 0.0
      %2055 = vmatpush.msra.mxu0 0.0
      %2056 = vmatpush.msra.mxu0 0.0
      %2057 = vmatpush.msra.mxu0 0.0
      %2058 = vmatpush.msra.mxu0 0.0
      %2059 = vmatpush.msra.mxu0 0.0
      %2060 = vmatpush.msra.mxu0 0.0
      %2061 = vmatpush.msra.mxu0 %v1989
      %2062 = vmatpush.msra.mxu0 %v1988
      %2063 = vmatpush.msra.mxu0 %v1987
      %2064 = vmatpush.msra.mxu0 %v1986
      %2065 = vmatmul.f32.gmra.mxu0 %v1996
      %v2066 = vpop.f32.mrf.mxu0
      %v2067 = vadd.f32 %v2048, %v2066
      %2068 = vmatmul.f32.gmra.mxu0 %v1999
      %v2069 = vpop.f32.mrf.mxu0
      %v2070 = vadd.f32 %v2048, %v2069
      %2071 = vdwg.mxu0
      %v2072 = vmul.f32 %v2019, 0.35355338
      %v2073 = vmul.f32 %v2022, 0.35355338
      %2076 = vrot.lane.b32.xlu0 %v2043, 120
      %v2077 = vpop.permute.xlu0 %2076
      %2078 = vrot.lane.b32.xlu0 %v2046, 120
      %v2079 = vpop.permute.xlu0 %2078
      %v2082 = vmax.f32 %v2043, %v2077
      %v2083 = vmax.f32 %v2046, %v2079
      %2086 = vrot.lane.b32.xlu0 %v2082, 112
      %v2087 = vpop.permute.xlu0 %2086
      %2088 = vrot.lane.b32.xlu0 %v2083, 112
      %v2089 = vpop.permute.xlu0 %2088
      %v2092 = vmax.f32 %v2082, %v2087
      %v2093 = vmax.f32 %v2083, %v2089
      %2096 = vrot.lane.b32.xlu0 %v2092, 8
      %v2097 = vpop.permute.xlu0 %2096
      %2098 = vrot.lane.b32.xlu0 %v2093, 8
      %v2099 = vpop.permute.xlu0 %2098
      %2102 = vrot.lane.b32.xlu0 %v2092, 16
      %v2103 = vpop.permute.xlu0 %2102
      %2104 = vrot.lane.b32.xlu0 %v2093, 16
      %v2105 = vpop.permute.xlu0 %2104
      %2108 = vrot.lane.b32.xlu0 %v2092, 24
      %v2109 = vpop.permute.xlu0 %2108
      %2110 = vrot.lane.b32.xlu0 %v2093, 24
      %v2111 = vpop.permute.xlu0 %2110
      %v2114 = vsel %vm605, %v2092, %v2097
      %v2115 = vsel %vm605, %v2093, %v2099
      %v2116 = vsel %vm608, %v2114, %v2103
      %v2117 = vsel %vm608, %v2115, %v2105
      %v2118 = vsel %vm611, %v2116, %v2109
      %v2119 = vsel %vm611, %v2117, %v2111
      %v2120 = vmin.f32 %v2043, %v2077
      %v2121 = vmin.f32 %v2046, %v2079
      %2124 = vrot.lane.b32.xlu0 %v2120, 112
      %v2125 = vpop.permute.xlu0 %2124
      %2126 = vrot.lane.b32.xlu0 %v2121, 112
      %v2127 = vpop.permute.xlu0 %2126
      %v2130 = vmin.f32 %v2120, %v2125
      %v2131 = vmin.f32 %v2121, %v2127
      %2134 = vrot.lane.b32.xlu0 %v2130, 8
      %v2135 = vpop.permute.xlu0 %2134
      %2136 = vrot.lane.b32.xlu0 %v2131, 8
      %v2137 = vpop.permute.xlu0 %2136
      %2140 = vrot.lane.b32.xlu0 %v2130, 16
      %v2141 = vpop.permute.xlu0 %2140
      %2142 = vrot.lane.b32.xlu0 %v2131, 16
      %v2143 = vpop.permute.xlu0 %2142
      %2146 = vrot.lane.b32.xlu0 %v2130, 24
      %v2147 = vpop.permute.xlu0 %2146
      %2148 = vrot.lane.b32.xlu0 %v2131, 24
      %v2149 = vpop.permute.xlu0 %2148
      %v2152 = vsel %vm605, %v2130, %v2135
      %v2153 = vsel %vm605, %v2131, %v2137
      %v2154 = vsel %vm608, %v2152, %v2141
      %v2155 = vsel %vm608, %v2153, %v2143
      %v2156 = vsel %vm611, %v2154, %v2147
      %v2157 = vsel %vm611, %v2155, %v2149
      %vm2158 = vcmp.ge.f32.partialorder %v2072, 0.0
      %vm2159 = vcmp.ge.f32.partialorder %v2073, 0.0
      %v2160 = vmul.f32 %v2072, %v2118
      %v2161 = vmul.f32 %v2073, %v2119
      %v2162 = vmul.f32 %v2072, %v2156
      %v2163 = vmul.f32 %v2073, %v2157
      %v2164 = vsel %vm2158, %v2160, %v2162
      %v2165 = vsel %vm2159, %v2161, %v2163
      %v2167 = vsel %vm411, %v2072, 0
      %v2170 = vsel %vm411, %v2073, 0
      %2172 = vmatpush.msra.mxu0 0.0
      %2173 = vmatpush.msra.mxu0 0.0
      %2174 = vmatpush.msra.mxu0 0.0
      %2175 = vmatpush.msra.mxu0 0.0
      %2176 = vmatpush.msra.mxu0 0.0
      %2177 = vmatpush.msra.mxu0 0.0
      %2178 = vmatpush.msra.mxu0 0.0
      %2179 = vmatpush.msra.mxu0 0.0
      %2180 = vmatpush.msra.mxu0 0.0
      %2181 = vmatpush.msra.mxu0 0.0
      %2182 = vmatpush.msra.mxu0 0.0
      %2183 = vmatpush.msra.mxu0 0.0
      %2184 = vmatpush.msra.mxu0 %v663
      %2185 = vmatpush.msra.mxu0 %v662
      %2186 = vmatpush.msra.mxu0 %v661
      %2187 = vmatpush.msra.mxu0 %v660
      %2188 = vmatmul.f32.gmra.mxu0 %v2167
      %v2189 = vpop.f32.mrf.mxu0
      %v2190 = vadd.f32 0.0, %v2189
      %2191 = vmatmul.f32.gmra.mxu0 %v2170
      %v2192 = vpop.f32.mrf.mxu0
      %v2193 = vadd.f32 0.0, %v2192
      %2194 = vdwg.mxu0
      %v2196 = vsel %vm411, %v2164, 0
      %v2199 = vsel %vm411, %v2165, 0
      %2201 = vmatpush.msra.mxu0 0.0
      %2202 = vmatpush.msra.mxu0 0.0
      %2203 = vmatpush.msra.mxu0 0.0
      %2204 = vmatpush.msra.mxu0 0.0
      %2205 = vmatpush.msra.mxu0 0.0
      %2206 = vmatpush.msra.mxu0 0.0
      %2207 = vmatpush.msra.mxu0 0.0
      %2208 = vmatpush.msra.mxu0 0.0
      %2209 = vmatpush.msra.mxu0 0.0
      %2210 = vmatpush.msra.mxu0 0.0
      %2211 = vmatpush.msra.mxu0 0.0
      %2212 = vmatpush.msra.mxu0 0.0
      %2213 = vmatpush.msra.mxu0 %v663
      %2214 = vmatpush.msra.mxu0 %v662
      %2215 = vmatpush.msra.mxu0 %v661
      %2216 = vmatpush.msra.mxu0 %v660
      %2217 = vmatmul.f32.gmra.mxu0 %v2196
      %v2218 = vpop.f32.mrf.mxu0
      %v2219 = vadd.f32 0.0, %v2218
      %2220 = vmatmul.f32.gmra.mxu0 %v2199
      %v2221 = vpop.f32.mrf.mxu0
      %v2222 = vadd.f32 0.0, %v2221
      %2223 = vdwg.mxu0
      %v2224 = vsel %vm411, %v2043, 0
      %v2226 = vsel %vm411, %v2046, 0
      %2228 = vmatpush.msra.mxu0 0.0
      %2229 = vmatpush.msra.mxu0 0.0
      %2230 = vmatpush.msra.mxu0 0.0
      %2231 = vmatpush.msra.mxu0 0.0
      %2232 = vmatpush.msra.mxu0 0.0
      %2233 = vmatpush.msra.mxu0 0.0
      %2234 = vmatpush.msra.mxu0 0.0
      %2235 = vmatpush.msra.mxu0 0.0
      %2236 = vmatpush.msra.mxu0 0.0
      %2237 = vmatpush.msra.mxu0 0.0
      %2238 = vmatpush.msra.mxu0 0.0
      %2239 = vmatpush.msra.mxu0 0.0
      %2240 = vmatpush.msra.mxu0 %v725
      %2241 = vmatpush.msra.mxu0 %v724
      %2242 = vmatpush.msra.mxu0 %v723
      %2243 = vmatpush.msra.mxu0 %v722
      %2244 = vmatmul.f32.gmra.mxu0 %v2224
      %v2245 = vpop.f32.mrf.mxu0
      %v2246 = vadd.f32 0.0, %v2245
      %2247 = vmatmul.f32.gmra.mxu0 %v2226
      %v2248 = vpop.f32.mrf.mxu0
      %v2249 = vadd.f32 0.0, %v2248
      %2250 = vdwg.mxu0
      %v2252 = vsel %vm411, %v2067, 0
      %v2255 = vsel %vm411, %v2070, 0
      %2257 = vmatpush.msra.mxu0 0.0
      %2258 = vmatpush.msra.mxu0 0.0
      %2259 = vmatpush.msra.mxu0 0.0
      %2260 = vmatpush.msra.mxu0 0.0
      %2261 = vmatpush.msra.mxu0 0.0
      %2262 = vmatpush.msra.mxu0 0.0
      %2263 = vmatpush.msra.mxu0 0.0
      %2264 = vmatpush.msra.mxu0 0.0
      %2265 = vmatpush.msra.mxu0 0.0
      %2266 = vmatpush.msra.mxu0 0.0
      %2267 = vmatpush.msra.mxu0 0.0
      %2268 = vmatpush.msra.mxu0 0.0
      %2269 = vmatpush.msra.mxu0 %v663
      %2270 = vmatpush.msra.mxu0 %v662
      %2271 = vmatpush.msra.mxu0 %v661
      %2272 = vmatpush.msra.mxu0 %v660
      %2273 = vmatmul.f32.gmra.mxu0 %v2252
      %v2274 = vpop.f32.mrf.mxu0
      %v2275 = vadd.f32 0.0, %v2274
      %2276 = vmatmul.f32.gmra.mxu0 %v2255
      %v2277 = vpop.f32.mrf.mxu0
      %v2278 = vadd.f32 0.0, %v2277
      %2279 = vdwg.mxu0
      %v2280 = vmul.f32 %v2190, %v2246
      %v2281 = vmul.f32 %v2193, %v2249
      %v2282 = vsub.f32 %v2280, %v2219
      %v2283 = vsub.f32 %v2281, %v2222
      %v2284 = vmul.f32 %v2282, 1.442695
      %v2285 = vpow.pop %v2284
      %v2286 = vmul.f32 %v2283, 1.442695
      %v2287 = vpow.pop %v2286
      %2288 = vmatpush.msra.mxu0 %v805
      %2289 = vmatpush.msra.mxu0 %v804
      %2290 = vmatpush.msra.mxu0 %v803
      %2291 = vmatpush.msra.mxu0 %v802
      %2292 = vmatpush.msra.mxu0 %v801
      %2293 = vmatpush.msra.mxu0 %v800
      %2294 = vmatpush.msra.mxu0 %v799
      %2295 = vmatpush.msra.mxu0 %v798
      %2296 = vmatpush.msra.mxu0 %v797
      %2297 = vmatpush.msra.mxu0 %v796
      %2298 = vmatpush.msra.mxu0 %v795
      %2299 = vmatpush.msra.mxu0 %v794
      %2300 = vmatpush.msra.mxu0 %v793
      %2301 = vmatpush.msra.mxu0 %v792
      %2302 = vmatpush.msra.mxu0 %v791
      %2303 = vmatpush.msra.mxu0 %v790
      %2304 = vmatmul.f32.gmra.mxu0 %v2285
      %v2305 = vpop.f32.mrf.mxu0
      %v2306 = vadd.f32 0.0, %v2305
      %2307 = vmatmul.f32.gmra.mxu0 %v2287
      %v2308 = vpop.f32.mrf.mxu0
      %v2309 = vadd.f32 0.0, %v2308
      %2310 = vdwg.mxu0
      %v2311 = vrcp.pop %v2306
      %v2312 = vmul.f32 %v2306, %v2311
      %v2313 = vsub.f32 1.0, %v2312
      %v2314 = vmul.f32 %v2311, %v2313
      %v2315 = vadd.f32 %v2311, %v2314
      %vm2316 = vweird.f32 %v2306
      %vm2317 = vweird.f32 %v2311
      %vm2318 = vmor %vm2316, %vm2317
      %v2319 = vsel %vm2318, %v2311, %v2315
      %v2320 = vand.u32 2147483647, %v2306
      %vm2321 = vcmp.eq.f32.partialorder %v2320, 8.507059e+37
      %v2322 = vand.u32 %v2306, 2147483648
      %v2323 = vor.u32 1.1754944e-38, %v2322
      %v2324 = vsel %vm2321, %v2323, %v2319
      %v2325 = vmul.f32 %v2285, %v2324
      %v2326 = vrcp.pop %v2309
      %v2327 = vmul.f32 %v2309, %v2326
      %v2328 = vsub.f32 1.0, %v2327
      %v2329 = vmul.f32 %v2326, %v2328
      %v2330 = vadd.f32 %v2326, %v2329
      %vm2331 = vweird.f32 %v2309
      %vm2332 = vweird.f32 %v2326
      %vm2333 = vmor %vm2331, %vm2332
      %v2334 = vsel %vm2333, %v2326, %v2330
      %v2335 = vand.u32 2147483647, %v2309
      %vm2336 = vcmp.eq.f32.partialorder %v2335, 8.507059e+37
      %v2337 = vand.u32 %v2309, 2147483648
      %v2338 = vor.u32 1.1754944e-38, %v2337
      %v2339 = vsel %vm2336, %v2338, %v2334
      %v2340 = vmul.f32 %v2287, %v2339
      %v2341 = vmul.f32 %v2325, %v2275
      %v2342 = vmul.f32 %v2340, %v2278
      %2343 = vmatpush.xpose.msra.mxu0 0.0
      %2344 = vmatpush.xpose.msra.mxu0 0.0
      %2345 = vmatpush.xpose.msra.mxu0 0.0
      %2346 = vmatpush.xpose.msra.mxu0 0.0
      %2347 = vmatpush.xpose.msra.mxu0 0.0
      %2348 = vmatpush.xpose.msra.mxu0 0.0
      %2349 = vmatpush.xpose.msra.mxu0 0.0
      %2350 = vmatpush.xpose.msra.mxu0 0.0
      %2351 = vmatpush.xpose.msra.mxu0 0.0
      %2352 = vmatpush.xpose.msra.mxu0 0.0
      %2353 = vmatpush.xpose.msra.mxu0 0.0
      %2354 = vmatpush.xpose.msra.mxu0 0.0
      %2355 = vmatpush.xpose.msra.mxu0 %v864
      %2356 = vmatpush.xpose.msra.mxu0 %v863
      %2357 = vmatpush.xpose.msra.mxu0 %v862
      %2358 = vmatpush.xpose.msra.mxu0 %v861
      %2359 = vmatmul.f32.gmra.mxu0 %v2341
      %v2360 = vpop.f32.mrf.mxu0
      %v2361 = vadd.f32 0.0, %v2360
      %2362 = vmatmul.f32.gmra.mxu0 %v2342
      %v2363 = vpop.f32.mrf.mxu0
      %v2364 = vadd.f32 0.0, %v2363
      %2365 = vdwg.mxu0
      %v2366 = vperm.slane %v1921, 0
      %v2368 = vsel %vm411, %v2361, 0
      %v2371 = vsel %vm411, %v2364, 0
      %2373 = vmatpush.msra.mxu0 0.0
      %2374 = vmatpush.msra.mxu0 0.0
      %2375 = vmatpush.msra.mxu0 0.0
      %2376 = vmatpush.msra.mxu0 0.0
      %2377 = vmatpush.msra.mxu0 0.0
      %2378 = vmatpush.msra.mxu0 0.0
      %2379 = vmatpush.msra.mxu0 0.0
      %2380 = vmatpush.msra.mxu0 0.0
      %2381 = vmatpush.msra.mxu0 0.0
      %2382 = vmatpush.msra.mxu0 0.0
      %2383 = vmatpush.msra.mxu0 0.0
      %2384 = vmatpush.msra.mxu0 0.0
      %2385 = vmatpush.msra.mxu0 %v1993
      %2386 = vmatpush.msra.mxu0 %v1992
      %2387 = vmatpush.msra.mxu0 %v1991
      %2388 = vmatpush.msra.mxu0 %v1990
      %2389 = vmatmul.f32.gmra.mxu0 %v2368
      %v2390 = vpop.f32.mrf.mxu0
      %v2391 = vadd.f32 %v2366, %v2390
      %2392 = vmatmul.f32.gmra.mxu0 %v2371
      %v2393 = vpop.f32.mrf.mxu0
      %v2394 = vadd.f32 %v2366, %v2393
      %2395 = vdwg.mxu0
      %v2396 = vadd.f32 %v1976, %v2391
      %v2397 = vadd.f32 %v1977, %v2394
      %v2398 = vsel %vm411, %v2396, 0.0
      %2399 = vadd.xlane.f32.xlu0 %v2398
      %v2400 = vpop.xlane.xlu0 %2399
      %v2401 = vsel %vm411, %v2397, 0.0
      %2402 = vadd.xlane.f32.xlu0 %v2401
      %v2403 = vpop.xlane.xlu0 %2402
      %v2404 = vmul.f32 %v2400, %v424
      %v2405 = vmul.f32 %v2403, %v424
      %v2406 = vsub.f32 %v2396, %v2404
      %v2407 = vsub.f32 %v2397, %v2405
      %v2408 = vmul.f32 %v2406, %v2406
      %v2409 = vmul.f32 %v2407, %v2407
      %v2410 = vsel %vm411, %v2408, 0.0
      %2411 = vadd.xlane.f32.xlu0 %v2410
      %v2412 = vpop.xlane.xlu0 %2411
      %v2413 = vsel %vm411, %v2409, 0.0
      %2414 = vadd.xlane.f32.xlu0 %v2413
      %v2415 = vpop.xlane.xlu0 %2414
      %v2416 = vmul.f32 %v2412, %v424
      %v2417 = vmul.f32 %v2415, %v424
      %v2418 = vadd.f32 %v2416, 1e-06
      %v2419 = vadd.f32 %v2417, 1e-06
      %v2420 = vrsqrt.pop %v2418
      %v2421 = vmul.f32 %v2420, %v2418
      %v2422 = vmul.f32 %v2421, %v2420
      %v2423 = vmul.f32 0.5, %v2422
      %v2424 = vsub.f32 1.5, %v2423
      %v2425 = vmul.f32 %v2420, %v2424
      %vm2426 = vweird.f32 %v2418
      %vm2427 = vweird.f32 %v2420
      %vm2428 = vmor %vm2426, %vm2427
      %v2429 = vsel %vm2428, %v2420, %v2425
      %v2430 = vrsqrt.pop %v2419
      %v2431 = vmul.f32 %v2430, %v2419
      %v2432 = vmul.f32 %v2431, %v2430
      %v2433 = vmul.f32 0.5, %v2432
      %v2434 = vsub.f32 1.5, %v2433
      %v2435 = vmul.f32 %v2430, %v2434
      %vm2436 = vweird.f32 %v2419
      %vm2437 = vweird.f32 %v2430
      %vm2438 = vmor %vm2436, %vm2437
      %v2439 = vsel %vm2438, %v2430, %v2435
      %v2440 = vmul.f32 %v2406, %v2429
      %v2441 = vmul.f32 %v2407, %v2439
      %v2442 = vperm.slane %v1914, 0
      %v2443 = vmul.f32 %v2440, %v2442
      %v2444 = vmul.f32 %v2441, %v2442
      %v2445 = vperm.slane %v1915, 0
      %v2446 = vadd.f32 %v2443, %v2445
      %v2447 = vadd.f32 %v2444, %v2445
      %v2448 = vld [vmem:[%s7 + $0x20] sm:$0xff]
      %v2449 = vld [vmem:[%s7 + $0x70] sm:$0xff]
      %v2450 = vld [vmem:[%s7 + $0xc0] sm:$0xff]
      %v2451 = vld [vmem:[%s7 + $0x110] sm:$0xff]
      %v2452 = vld [vmem:[%s7 + $0x28] sm:$0xff]
      %v2453 = vld [vmem:[%s7 + $0x78] sm:$0xff]
      %v2454 = vld [vmem:[%s7 + $0xc8] sm:$0xff]
      %v2455 = vld [vmem:[%s7 + $0x118] sm:$0xff]
      %v2456 = vld [vmem:[%s7 + $0x30] sm:$0xff]
      %v2457 = vld [vmem:[%s7 + $0x80] sm:$0xff]
      %v2458 = vld [vmem:[%s7 + $0xd0] sm:$0xff]
      %v2459 = vld [vmem:[%s7 + $0x120] sm:$0xff]
      %v2460 = vld [vmem:[%s7 + $0x38] sm:$0xff]
      %v2461 = vld [vmem:[%s7 + $0x88] sm:$0xff]
      %v2462 = vld [vmem:[%s7 + $0xd8] sm:$0xff]
      %v2463 = vld [vmem:[%s7 + $0x128] sm:$0xff]
      %v2464 = vperm.slane %v1922, 0
      %v2466 = vsel %vm411, %v2446, 0
      %v2469 = vsel %vm411, %v2447, 0
      %2471 = vmatpush.msra.mxu0 0.0
      %2472 = vmatpush.msra.mxu0 0.0
      %2473 = vmatpush.msra.mxu0 0.0
      %2474 = vmatpush.msra.mxu0 0.0
      %2475 = vmatpush.msra.mxu0 0.0
      %2476 = vmatpush.msra.mxu0 0.0
      %2477 = vmatpush.msra.mxu0 0.0
      %2478 = vmatpush.msra.mxu0 0.0
      %2479 = vmatpush.msra.mxu0 0.0
      %2480 = vmatpush.msra.mxu0 0.0
      %2481 = vmatpush.msra.mxu0 0.0
      %2482 = vmatpush.msra.mxu0 0.0
      %2483 = vmatpush.msra.mxu0 %v2451
      %2484 = vmatpush.msra.mxu0 %v2450
      %2485 = vmatpush.msra.mxu0 %v2449
      %2486 = vmatpush.msra.mxu0 %v2448
      %2487 = vmatmul.f32.gmra.mxu0 %v2466
      %v2488 = vpop.f32.mrf.mxu0
      %v2489 = vadd.f32 %v2464, %v2488
      %2490 = vmatmul.f32.gmra.mxu0 %v2469
      %v2491 = vpop.f32.mrf.mxu0
      %v2492 = vadd.f32 %v2464, %v2491
      %2493 = vdwg.mxu0
      %v2494 = vperm.slane %v1923, 0
      %v2496 = vsel %vm411, %v1910, 0
      %v2499 = vsel %vm411, %v1911, 0
      %2501 = vmatpush.msra.mxu0 0.0
      %2502 = vmatpush.msra.mxu0 0.0
      %2503 = vmatpush.msra.mxu0 0.0
      %2504 = vmatpush.msra.mxu0 0.0
      %2505 = vmatpush.msra.mxu0 0.0
      %2506 = vmatpush.msra.mxu0 0.0
      %2507 = vmatpush.msra.mxu0 0.0
      %2508 = vmatpush.msra.mxu0 0.0
      %2509 = vmatpush.msra.mxu0 0.0
      %2510 = vmatpush.msra.mxu0 0.0
      %2511 = vmatpush.msra.mxu0 0.0
      %2512 = vmatpush.msra.mxu0 0.0
      %2513 = vmatpush.msra.mxu0 %v2455
      %2514 = vmatpush.msra.mxu0 %v2454
      %2515 = vmatpush.msra.mxu0 %v2453
      %2516 = vmatpush.msra.mxu0 %v2452
      %2517 = vmatmul.f32.gmra.mxu0 %v2496
      %v2518 = vpop.f32.mrf.mxu0
      %v2519 = vadd.f32 %v2494, %v2518
      %2520 = vmatmul.f32.gmra.mxu0 %v2499
      %v2521 = vpop.f32.mrf.mxu0
      %v2522 = vadd.f32 %v2494, %v2521
      %2523 = vdwg.mxu0
      %v2524 = vperm.slane %v1924, 0
      %2525 = vmatpush.msra.mxu0 0.0
      %2526 = vmatpush.msra.mxu0 0.0
      %2527 = vmatpush.msra.mxu0 0.0
      %2528 = vmatpush.msra.mxu0 0.0
      %2529 = vmatpush.msra.mxu0 0.0
      %2530 = vmatpush.msra.mxu0 0.0
      %2531 = vmatpush.msra.mxu0 0.0
      %2532 = vmatpush.msra.mxu0 0.0
      %2533 = vmatpush.msra.mxu0 0.0
      %2534 = vmatpush.msra.mxu0 0.0
      %2535 = vmatpush.msra.mxu0 0.0
      %2536 = vmatpush.msra.mxu0 0.0
      %2537 = vmatpush.msra.mxu0 %v2459
      %2538 = vmatpush.msra.mxu0 %v2458
      %2539 = vmatpush.msra.mxu0 %v2457
      %2540 = vmatpush.msra.mxu0 %v2456
      %2541 = vmatmul.f32.gmra.mxu0 %v2496
      %v2542 = vpop.f32.mrf.mxu0
      %v2543 = vadd.f32 %v2524, %v2542
      %2544 = vmatmul.f32.gmra.mxu0 %v2499
      %v2545 = vpop.f32.mrf.mxu0
      %v2546 = vadd.f32 %v2524, %v2545
      %2547 = vdwg.mxu0
      %v2548 = vmul.f32 %v2489, 0.35355338
      %v2549 = vmul.f32 %v2492, 0.35355338
      %2552 = vrot.lane.b32.xlu0 %v2519, 120
      %v2553 = vpop.permute.xlu0 %2552
      %2554 = vrot.lane.b32.xlu0 %v2522, 120
      %v2555 = vpop.permute.xlu0 %2554
      %v2558 = vmax.f32 %v2519, %v2553
      %v2559 = vmax.f32 %v2522, %v2555
      %2562 = vrot.lane.b32.xlu0 %v2558, 112
      %v2563 = vpop.permute.xlu0 %2562
      %2564 = vrot.lane.b32.xlu0 %v2559, 112
      %v2565 = vpop.permute.xlu0 %2564
      %v2568 = vmax.f32 %v2558, %v2563
      %v2569 = vmax.f32 %v2559, %v2565
      %2572 = vrot.lane.b32.xlu0 %v2568, 8
      %v2573 = vpop.permute.xlu0 %2572
      %2574 = vrot.lane.b32.xlu0 %v2569, 8
      %v2575 = vpop.permute.xlu0 %2574
      %2578 = vrot.lane.b32.xlu0 %v2568, 16
      %v2579 = vpop.permute.xlu0 %2578
      %2580 = vrot.lane.b32.xlu0 %v2569, 16
      %v2581 = vpop.permute.xlu0 %2580
      %2584 = vrot.lane.b32.xlu0 %v2568, 24
      %v2585 = vpop.permute.xlu0 %2584
      %2586 = vrot.lane.b32.xlu0 %v2569, 24
      %v2587 = vpop.permute.xlu0 %2586
      %v2590 = vsel %vm605, %v2568, %v2573
      %v2591 = vsel %vm605, %v2569, %v2575
      %v2592 = vsel %vm608, %v2590, %v2579
      %v2593 = vsel %vm608, %v2591, %v2581
      %v2594 = vsel %vm611, %v2592, %v2585
      %v2595 = vsel %vm611, %v2593, %v2587
      %v2596 = vmin.f32 %v2519, %v2553
      %v2597 = vmin.f32 %v2522, %v2555
      %2600 = vrot.lane.b32.xlu0 %v2596, 112
      %v2601 = vpop.permute.xlu0 %2600
      %2602 = vrot.lane.b32.xlu0 %v2597, 112
      %v2603 = vpop.permute.xlu0 %2602
      %v2606 = vmin.f32 %v2596, %v2601
      %v2607 = vmin.f32 %v2597, %v2603
      %2610 = vrot.lane.b32.xlu0 %v2606, 8
      %v2611 = vpop.permute.xlu0 %2610
      %2612 = vrot.lane.b32.xlu0 %v2607, 8
      %v2613 = vpop.permute.xlu0 %2612
      %2616 = vrot.lane.b32.xlu0 %v2606, 16
      %v2617 = vpop.permute.xlu0 %2616
      %2618 = vrot.lane.b32.xlu0 %v2607, 16
      %v2619 = vpop.permute.xlu0 %2618
      %2622 = vrot.lane.b32.xlu0 %v2606, 24
      %v2623 = vpop.permute.xlu0 %2622
      %2624 = vrot.lane.b32.xlu0 %v2607, 24
      %v2625 = vpop.permute.xlu0 %2624
      %v2628 = vsel %vm605, %v2606, %v2611
      %v2629 = vsel %vm605, %v2607, %v2613
      %v2630 = vsel %vm608, %v2628, %v2617
      %v2631 = vsel %vm608, %v2629, %v2619
      %v2632 = vsel %vm611, %v2630, %v2623
      %v2633 = vsel %vm611, %v2631, %v2625
      %vm2634 = vcmp.ge.f32.partialorder %v2548, 0.0
      %vm2635 = vcmp.ge.f32.partialorder %v2549, 0.0
      %v2636 = vmul.f32 %v2548, %v2594
      %v2637 = vmul.f32 %v2549, %v2595
      %v2638 = vmul.f32 %v2548, %v2632
      %v2639 = vmul.f32 %v2549, %v2633
      %v2640 = vsel %vm2634, %v2636, %v2638
      %v2641 = vsel %vm2635, %v2637, %v2639
      %v2643 = vsel %vm411, %v2548, 0
      %v2646 = vsel %vm411, %v2549, 0
      %2648 = vmatpush.msra.mxu0 0.0
      %2649 = vmatpush.msra.mxu0 0.0
      %2650 = vmatpush.msra.mxu0 0.0
      %2651 = vmatpush.msra.mxu0 0.0
      %2652 = vmatpush.msra.mxu0 0.0
      %2653 = vmatpush.msra.mxu0 0.0
      %2654 = vmatpush.msra.mxu0 0.0
      %2655 = vmatpush.msra.mxu0 0.0
      %2656 = vmatpush.msra.mxu0 0.0
      %2657 = vmatpush.msra.mxu0 0.0
      %2658 = vmatpush.msra.mxu0 0.0
      %2659 = vmatpush.msra.mxu0 0.0
      %2660 = vmatpush.msra.mxu0 %v663
      %2661 = vmatpush.msra.mxu0 %v662
      %2662 = vmatpush.msra.mxu0 %v661
      %2663 = vmatpush.msra.mxu0 %v660
      %2664 = vmatmul.f32.gmra.mxu0 %v2643
      %v2665 = vpop.f32.mrf.mxu0
      %v2666 = vadd.f32 0.0, %v2665
      %2667 = vmatmul.f32.gmra.mxu0 %v2646
      %v2668 = vpop.f32.mrf.mxu0
      %v2669 = vadd.f32 0.0, %v2668
      %2670 = vdwg.mxu0
      %v2672 = vsel %vm411, %v2640, 0
      %v2675 = vsel %vm411, %v2641, 0
      %2677 = vmatpush.msra.mxu0 0.0
      %2678 = vmatpush.msra.mxu0 0.0
      %2679 = vmatpush.msra.mxu0 0.0
      %2680 = vmatpush.msra.mxu0 0.0
      %2681 = vmatpush.msra.mxu0 0.0
      %2682 = vmatpush.msra.mxu0 0.0
      %2683 = vmatpush.msra.mxu0 0.0
      %2684 = vmatpush.msra.mxu0 0.0
      %2685 = vmatpush.msra.mxu0 0.0
      %2686 = vmatpush.msra.mxu0 0.0
      %2687 = vmatpush.msra.mxu0 0.0
      %2688 = vmatpush.msra.mxu0 0.0
      %2689 = vmatpush.msra.mxu0 %v663
      %2690 = vmatpush.msra.mxu0 %v662
      %2691 = vmatpush.msra.mxu0 %v661
      %2692 = vmatpush.msra.mxu0 %v660
      %2693 = vmatmul.f32.gmra.mxu0 %v2672
      %v2694 = vpop.f32.mrf.mxu0
      %v2695 = vadd.f32 0.0, %v2694
      %2696 = vmatmul.f32.gmra.mxu0 %v2675
      %v2697 = vpop.f32.mrf.mxu0
      %v2698 = vadd.f32 0.0, %v2697
      %2699 = vdwg.mxu0
      %v2700 = vsel %vm411, %v2519, 0
      %v2702 = vsel %vm411, %v2522, 0
      %2704 = vmatpush.msra.mxu0 0.0
      %2705 = vmatpush.msra.mxu0 0.0
      %2706 = vmatpush.msra.mxu0 0.0
      %2707 = vmatpush.msra.mxu0 0.0
      %2708 = vmatpush.msra.mxu0 0.0
      %2709 = vmatpush.msra.mxu0 0.0
      %2710 = vmatpush.msra.mxu0 0.0
      %2711 = vmatpush.msra.mxu0 0.0
      %2712 = vmatpush.msra.mxu0 0.0
      %2713 = vmatpush.msra.mxu0 0.0
      %2714 = vmatpush.msra.mxu0 0.0
      %2715 = vmatpush.msra.mxu0 0.0
      %2716 = vmatpush.msra.mxu0 %v725
      %2717 = vmatpush.msra.mxu0 %v724
      %2718 = vmatpush.msra.mxu0 %v723
      %2719 = vmatpush.msra.mxu0 %v722
      %2720 = vmatmul.f32.gmra.mxu0 %v2700
      %v2721 = vpop.f32.mrf.mxu0
      %v2722 = vadd.f32 0.0, %v2721
      %2723 = vmatmul.f32.gmra.mxu0 %v2702
      %v2724 = vpop.f32.mrf.mxu0
      %v2725 = vadd.f32 0.0, %v2724
      %2726 = vdwg.mxu0
      %v2728 = vsel %vm411, %v2543, 0
      %v2731 = vsel %vm411, %v2546, 0
      %2733 = vmatpush.msra.mxu0 0.0
      %2734 = vmatpush.msra.mxu0 0.0
      %2735 = vmatpush.msra.mxu0 0.0
      %2736 = vmatpush.msra.mxu0 0.0
      %2737 = vmatpush.msra.mxu0 0.0
      %2738 = vmatpush.msra.mxu0 0.0
      %2739 = vmatpush.msra.mxu0 0.0
      %2740 = vmatpush.msra.mxu0 0.0
      %2741 = vmatpush.msra.mxu0 0.0
      %2742 = vmatpush.msra.mxu0 0.0
      %2743 = vmatpush.msra.mxu0 0.0
      %2744 = vmatpush.msra.mxu0 0.0
      %2745 = vmatpush.msra.mxu0 %v663
      %2746 = vmatpush.msra.mxu0 %v662
      %2747 = vmatpush.msra.mxu0 %v661
      %2748 = vmatpush.msra.mxu0 %v660
      %2749 = vmatmul.f32.gmra.mxu0 %v2728
      %v2750 = vpop.f32.mrf.mxu0
      %v2751 = vadd.f32 0.0, %v2750
      %2752 = vmatmul.f32.gmra.mxu0 %v2731
      %v2753 = vpop.f32.mrf.mxu0
      %v2754 = vadd.f32 0.0, %v2753
      %2755 = vdwg.mxu0
      %v2756 = vmul.f32 %v2666, %v2722
      %v2757 = vmul.f32 %v2669, %v2725
      %v2758 = vsub.f32 %v2756, %v2695
      %v2759 = vsub.f32 %v2757, %v2698
      %v2760 = vmul.f32 %v2758, 1.442695
      %v2761 = vpow.pop %v2760
      %v2762 = vmul.f32 %v2759, 1.442695
      %v2763 = vpow.pop %v2762
      %2764 = vmatpush.msra.mxu0 %v805
      %2765 = vmatpush.msra.mxu0 %v804
      %2766 = vmatpush.msra.mxu0 %v803
      %2767 = vmatpush.msra.mxu0 %v802
      %2768 = vmatpush.msra.mxu0 %v801
      %2769 = vmatpush.msra.mxu0 %v800
      %2770 = vmatpush.msra.mxu0 %v799
      %2771 = vmatpush.msra.mxu0 %v798
      %2772 = vmatpush.msra.mxu0 %v797
      %2773 = vmatpush.msra.mxu0 %v796
      %2774 = vmatpush.msra.mxu0 %v795
      %2775 = vmatpush.msra.mxu0 %v794
      %2776 = vmatpush.msra.mxu0 %v793
      %2777 = vmatpush.msra.mxu0 %v792
      %2778 = vmatpush.msra.mxu0 %v791
      %2779 = vmatpush.msra.mxu0 %v790
      %2780 = vmatmul.f32.gmra.mxu0 %v2761
      %v2781 = vpop.f32.mrf.mxu0
      %v2782 = vadd.f32 0.0, %v2781
      %2783 = vmatmul.f32.gmra.mxu0 %v2763
      %v2784 = vpop.f32.mrf.mxu0
      %v2785 = vadd.f32 0.0, %v2784
      %2786 = vdwg.mxu0
      %v2787 = vrcp.pop %v2782
      %v2788 = vmul.f32 %v2782, %v2787
      %v2789 = vsub.f32 1.0, %v2788
      %v2790 = vmul.f32 %v2787, %v2789
      %v2791 = vadd.f32 %v2787, %v2790
      %vm2792 = vweird.f32 %v2782
      %vm2793 = vweird.f32 %v2787
      %vm2794 = vmor %vm2792, %vm2793
      %v2795 = vsel %vm2794, %v2787, %v2791
      %v2796 = vand.u32 2147483647, %v2782
      %vm2797 = vcmp.eq.f32.partialorder %v2796, 8.507059e+37
      %v2798 = vand.u32 %v2782, 2147483648
      %v2799 = vor.u32 1.1754944e-38, %v2798
      %v2800 = vsel %vm2797, %v2799, %v2795
      %v2801 = vmul.f32 %v2761, %v2800
      %v2802 = vrcp.pop %v2785
      %v2803 = vmul.f32 %v2785, %v2802
      %v2804 = vsub.f32 1.0, %v2803
      %v2805 = vmul.f32 %v2802, %v2804
      %v2806 = vadd.f32 %v2802, %v2805
      %vm2807 = vweird.f32 %v2785
      %vm2808 = vweird.f32 %v2802
      %vm2809 = vmor %vm2807, %vm2808
      %v2810 = vsel %vm2809, %v2802, %v2806
      %v2811 = vand.u32 2147483647, %v2785
      %vm2812 = vcmp.eq.f32.partialorder %v2811, 8.507059e+37
      %v2813 = vand.u32 %v2785, 2147483648
      %v2814 = vor.u32 1.1754944e-38, %v2813
      %v2815 = vsel %vm2812, %v2814, %v2810
      %v2816 = vmul.f32 %v2763, %v2815
      %v2817 = vmul.f32 %v2801, %v2751
      %v2818 = vmul.f32 %v2816, %v2754
      %2819 = vmatpush.xpose.msra.mxu0 0.0
      %2820 = vmatpush.xpose.msra.mxu0 0.0
      %2821 = vmatpush.xpose.msra.mxu0 0.0
      %2822 = vmatpush.xpose.msra.mxu0 0.0
      %2823 = vmatpush.xpose.msra.mxu0 0.0
      %2824 = vmatpush.xpose.msra.mxu0 0.0
      %2825 = vmatpush.xpose.msra.mxu0 0.0
      %2826 = vmatpush.xpose.msra.mxu0 0.0
      %2827 = vmatpush.xpose.msra.mxu0 0.0
      %2828 = vmatpush.xpose.msra.mxu0 0.0
      %2829 = vmatpush.xpose.msra.mxu0 0.0
      %2830 = vmatpush.xpose.msra.mxu0 0.0
      %2831 = vmatpush.xpose.msra.mxu0 %v864
      %2832 = vmatpush.xpose.msra.mxu0 %v863
      %2833 = vmatpush.xpose.msra.mxu0 %v862
      %2834 = vmatpush.xpose.msra.mxu0 %v861
      %2835 = vmatmul.f32.gmra.mxu0 %v2817
      %v2836 = vpop.f32.mrf.mxu0
      %v2837 = vadd.f32 0.0, %v2836
      %2838 = vmatmul.f32.gmra.mxu0 %v2818
      %v2839 = vpop.f32.mrf.mxu0
      %v2840 = vadd.f32 0.0, %v2839
      %2841 = vdwg.mxu0
      %v2842 = vperm.slane %v1925, 0
      %v2844 = vsel %vm411, %v2837, 0
      %v2847 = vsel %vm411, %v2840, 0
      %2849 = vmatpush.msra.mxu0 0.0
      %2850 = vmatpush.msra.mxu0 0.0
      %2851 = vmatpush.msra.mxu0 0.0
      %2852 = vmatpush.msra.mxu0 0.0
      %2853 = vmatpush.msra.mxu0 0.0
      %2854 = vmatpush.msra.mxu0 0.0
      %2855 = vmatpush.msra.mxu0 0.0
      %2856 = vmatpush.msra.mxu0 0.0
      %2857 = vmatpush.msra.mxu0 0.0
      %2858 = vmatpush.msra.mxu0 0.0
      %2859 = vmatpush.msra.mxu0 0.0
      %2860 = vmatpush.msra.mxu0 0.0
      %2861 = vmatpush.msra.mxu0 %v2463
      %2862 = vmatpush.msra.mxu0 %v2462
      %2863 = vmatpush.msra.mxu0 %v2461
      %2864 = vmatpush.msra.mxu0 %v2460
      %2865 = vmatmul.f32.gmra.mxu0 %v2844
      %v2866 = vpop.f32.mrf.mxu0
      %v2867 = vadd.f32 %v2842, %v2866
      %2868 = vmatmul.f32.gmra.mxu0 %v2847
      %v2869 = vpop.f32.mrf.mxu0
      %v2870 = vadd.f32 %v2842, %v2869
      %2871 = vdwg.mxu0
      %v2872 = vsel %vm411, %v2867, 0.0
      %2873 = vadd.xlane.f32.xlu0 %v2872
      %v2874 = vpop.xlane.xlu0 %2873
      %v2875 = vsel %vm411, %v2870, 0.0
      %2876 = vadd.xlane.f32.xlu0 %v2875
      %v2877 = vpop.xlane.xlu0 %2876
      %v2878 = vmul.f32 %v2874, %v424
      %v2879 = vmul.f32 %v2877, %v424
      %v2880 = vsub.f32 %v2867, %v2878
      %v2881 = vsub.f32 %v2870, %v2879
      %v2882 = vmul.f32 %v2880, %v2880
      %v2883 = vmul.f32 %v2881, %v2881
      %v2884 = vsel %vm411, %v2882, 0.0
      %2885 = vadd.xlane.f32.xlu0 %v2884
      %v2886 = vpop.xlane.xlu0 %2885
      %v2887 = vsel %vm411, %v2883, 0.0
      %2888 = vadd.xlane.f32.xlu0 %v2887
      %v2889 = vpop.xlane.xlu0 %2888
      %v2890 = vmul.f32 %v2886, %v424
      %v2891 = vmul.f32 %v2889, %v424
      %v2892 = vadd.f32 %v2890, 1e-06
      %v2893 = vadd.f32 %v2891, 1e-06
      %v2894 = vrsqrt.pop %v2892
      %v2895 = vmul.f32 %v2894, %v2892
      %v2896 = vmul.f32 %v2895, %v2894
      %v2897 = vmul.f32 0.5, %v2896
      %v2898 = vsub.f32 1.5, %v2897
      %v2899 = vmul.f32 %v2894, %v2898
      %vm2900 = vweird.f32 %v2892
      %vm2901 = vweird.f32 %v2894
      %vm2902 = vmor %vm2900, %vm2901
      %v2903 = vsel %vm2902, %v2894, %v2899
      %v2904 = vrsqrt.pop %v2893
      %v2905 = vmul.f32 %v2904, %v2893
      %v2906 = vmul.f32 %v2905, %v2904
      %v2907 = vmul.f32 0.5, %v2906
      %v2908 = vsub.f32 1.5, %v2907
      %v2909 = vmul.f32 %v2904, %v2908
      %vm2910 = vweird.f32 %v2893
      %vm2911 = vweird.f32 %v2904
      %vm2912 = vmor %vm2910, %vm2911
      %v2913 = vsel %vm2912, %v2904, %v2909
      %v2914 = vmul.f32 %v2880, %v2903
      %v2915 = vmul.f32 %v2881, %v2913
      %v2916 = vperm.slane %v1916, 0
      %v2917 = vmul.f32 %v2914, %v2916
      %v2918 = vmul.f32 %v2915, %v2916
      %v2919 = vperm.slane %v1917, 0
      %v2920 = vadd.f32 %v2917, %v2919
      %v2921 = vadd.f32 %v2918, %v2919
      %v2922 = vld [vmem:[%s7 + $0x40] sm:$0xff]
      %v2923 = vld [vmem:[%s7 + $0x90] sm:$0xff]
      %v2924 = vld [vmem:[%s7 + $0xe0] sm:$0xff]
      %v2925 = vld [vmem:[%s7 + $0x130] sm:$0xff]
      %v2926 = vld [vmem:[%s7 + $0x48] sm:$0xff]
      %v2927 = vld [vmem:[%s7 + $0x98] sm:$0xff]
      %v2928 = vld [vmem:[%s7 + $0xe8] sm:$0xff]
      %v2929 = vld [vmem:[%s7 + $0x138] sm:$0xff]
      %v2930 = vperm.slane %v1926, 0
      %v2932 = vsel %vm411, %v2920, 0
      %v2935 = vsel %vm411, %v2921, 0
      %2937 = vmatpush.msra.mxu0 0.0
      %2938 = vmatpush.msra.mxu0 0.0
      %2939 = vmatpush.msra.mxu0 0.0
      %2940 = vmatpush.msra.mxu0 0.0
      %2941 = vmatpush.msra.mxu0 0.0
      %2942 = vmatpush.msra.mxu0 0.0
      %2943 = vmatpush.msra.mxu0 0.0
      %2944 = vmatpush.msra.mxu0 0.0
      %2945 = vmatpush.msra.mxu0 0.0
      %2946 = vmatpush.msra.mxu0 0.0
      %2947 = vmatpush.msra.mxu0 0.0
      %2948 = vmatpush.msra.mxu0 0.0
      %2949 = vmatpush.msra.mxu0 %v2925
      %2950 = vmatpush.msra.mxu0 %v2924
      %2951 = vmatpush.msra.mxu0 %v2923
      %2952 = vmatpush.msra.mxu0 %v2922
      %2953 = vmatmul.f32.gmra.mxu0 %v2932
      %v2954 = vpop.f32.mrf.mxu0
      %v2955 = vadd.f32 %v2930, %v2954
      %2956 = vmatmul.f32.gmra.mxu0 %v2935
      %v2957 = vpop.f32.mrf.mxu0
      %v2958 = vadd.f32 %v2930, %v2957
      %2959 = vdwg.mxu0
      %v2960 = vmul.f32 %v2955, 0.5
      %v2961 = vmul.f32 %v2958, 0.5
      %v2962 = vmul.f32 %v2955, 0.70710677
      %v2963 = vmul.f32 %v2958, 0.70710677
      %vm2964 = vcmp.ge.f32.partialorder %v2962, 0.0
      %vm2965 = vcmp.ge.f32.partialorder %v2963, 0.0
      %v2966 = vsel %vm2964, 1.0, -1.0
      %v2967 = vsel %vm2965, 1.0, -1.0
      %v2968 = vand.u32 2147483647, %v2962
      %v2969 = vand.u32 2147483647, %v2963
      %v2970 = vmul.f32 %v2968, 0.3275911
      %v2971 = vmul.f32 %v2969, 0.3275911
      %v2972 = vadd.f32 %v2970, 1.0
      %v2973 = vadd.f32 %v2971, 1.0
      %v2974 = vrcp.pop %v2972
      %v2975 = vmul.f32 %v2972, %v2974
      %v2976 = vsub.f32 1.0, %v2975
      %v2977 = vmul.f32 %v2974, %v2976
      %v2978 = vadd.f32 %v2974, %v2977
      %vm2979 = vweird.f32 %v2972
      %vm2980 = vweird.f32 %v2974
      %vm2981 = vmor %vm2979, %vm2980
      %v2982 = vsel %vm2981, %v2974, %v2978
      %v2983 = vand.u32 2147483647, %v2972
      %vm2984 = vcmp.eq.f32.partialorder %v2983, 8.507059e+37
      %v2985 = vand.u32 %v2972, 2147483648
      %v2986 = vor.u32 1.1754944e-38, %v2985
      %v2987 = vsel %vm2984, %v2986, %v2982
      %v2988 = vmul.f32 1.0, %v2987
      %v2989 = vrcp.pop %v2973
      %v2990 = vmul.f32 %v2973, %v2989
      %v2991 = vsub.f32 1.0, %v2990
      %v2992 = vmul.f32 %v2989, %v2991
      %v2993 = vadd.f32 %v2989, %v2992
      %vm2994 = vweird.f32 %v2973
      %vm2995 = vweird.f32 %v2989
      %vm2996 = vmor %vm2994, %vm2995
      %v2997 = vsel %vm2996, %v2989, %v2993
      %v2998 = vand.u32 2147483647, %v2973
      %vm2999 = vcmp.eq.f32.partialorder %v2998, 8.507059e+37
      %v3000 = vand.u32 %v2973, 2147483648
      %v3001 = vor.u32 1.1754944e-38, %v3000
      %v3002 = vsel %vm2999, %v3001, %v2997
      %v3003 = vmul.f32 1.0, %v3002
      %v3004 = vmul.f32 %v2988, 1.0614054
      %v3005 = vmul.f32 %v3003, 1.0614054
      %v3006 = vadd.f32 %v3004, -1.4531521
      %v3007 = vadd.f32 %v3005, -1.4531521
      %v3008 = vmul.f32 %v3006, %v2988
      %v3009 = vmul.f32 %v3007, %v3003
      %v3010 = vadd.f32 %v3008, 1.4214138
      %v3011 = vadd.f32 %v3009, 1.4214138
      %v3012 = vmul.f32 %v3010, %v2988
      %v3013 = vmul.f32 %v3011, %v3003
      %v3014 = vadd.f32 %v3012, -0.28449672
      %v3015 = vadd.f32 %v3013, -0.28449672
      %v3016 = vmul.f32 %v3014, %v2988
      %v3017 = vmul.f32 %v3015, %v3003
      %v3018 = vadd.f32 %v3016, 0.2548296
      %v3019 = vadd.f32 %v3017, 0.2548296
      %v3020 = vmul.f32 %v3018, %v2988
      %v3021 = vmul.f32 %v3019, %v3003
      %v3022 = vsub.f32 0.0, %v2968
      %v3023 = vsub.f32 0.0, %v2969
      %v3024 = vmul.f32 %v3022, %v2968
      %v3025 = vmul.f32 %v3023, %v2969
      %v3026 = vmul.f32 %v3024, 1.442695
      %v3027 = vpow.pop %v3026
      %v3028 = vmul.f32 %v3025, 1.442695
      %v3029 = vpow.pop %v3028
      %v3030 = vmul.f32 %v3020, %v3027
      %v3031 = vmul.f32 %v3021, %v3029
      %v3032 = vsub.f32 1.0, %v3030
      %v3033 = vsub.f32 1.0, %v3031
      %v3034 = vmul.f32 %v2966, %v3032
      %v3035 = vmul.f32 %v2967, %v3033
      %v3036 = vadd.f32 %v3034, 1.0
      %v3037 = vadd.f32 %v3035, 1.0
      %v3038 = vmul.f32 %v2960, %v3036
      %v3039 = vmul.f32 %v2961, %v3037
      %v3040 = vperm.slane %v1927, 0
      %v3042 = vsel %vm367, %v3038, 0
      %v3045 = vsel %vm367, %v3039, 0
      %v3048 = vsel %vm367, %v2926, 0
      %v3051 = vsel %vm367, %v2927, 0
      %v3054 = vsel %vm367, %v2928, 0
      %v3057 = vsel %vm367, %v2929, 0
      %3059 = vmatpush.xpose.msra.mxu0 0.0
      %3060 = vmatpush.xpose.msra.mxu0 0.0
      %3061 = vmatpush.xpose.msra.mxu0 0.0
      %3062 = vmatpush.xpose.msra.mxu0 0.0
      %3063 = vmatpush.xpose.msra.mxu0 0.0
      %3064 = vmatpush.xpose.msra.mxu0 0.0
      %3065 = vmatpush.xpose.msra.mxu0 0.0
      %3066 = vmatpush.xpose.msra.mxu0 0.0
      %3067 = vmatpush.xpose.msra.mxu0 0.0
      %3068 = vmatpush.xpose.msra.mxu0 0.0
      %3069 = vmatpush.xpose.msra.mxu0 0.0
      %3070 = vmatpush.xpose.msra.mxu0 0.0
      %3071 = vmatpush.xpose.msra.mxu0 %v3057
      %3072 = vmatpush.xpose.msra.mxu0 %v3054
      %3073 = vmatpush.xpose.msra.mxu0 %v3051
      %3074 = vmatpush.xpose.msra.mxu0 %v3048
      %3075 = vmatmul.f32.gmra.mxu0 %v3042
      %v3076 = vpop.f32.mrf.mxu0
      %v3077 = vadd.f32 %v3040, %v3076
      %3078 = vmatmul.f32.gmra.mxu0 %v3045
      %v3079 = vpop.f32.mrf.mxu0
      %v3080 = vadd.f32 %v3040, %v3079
      %3081 = vdwg.mxu0
      %v3082 = vadd.f32 %v2867, %v3077
      %v3083 = vadd.f32 %v2870, %v3080
      %s3084 = scalar_lea.vmem %s8, 16
      %v3085 = vld [vmem:[%s3084] sm:$0x1]
      %v3086 = vld [vmem:[%s3084 + $0x1] sm:$0x1]
      %v3087 = vld [vmem:[%s3084 + $0x2] sm:$0x1]
      %v3088 = vld [vmem:[%s3084 + $0x3] sm:$0x1]
      %v3089 = vld [vmem:[%s3084 + $0x4] sm:$0x1]
      %v3090 = vld [vmem:[%s3084 + $0x5] sm:$0x1]
      %v3091 = vld [vmem:[%s3084 + $0x6] sm:$0x1]
      %v3092 = vld [vmem:[%s3084 + $0x7] sm:$0x1]
      %v3093 = vld [vmem:[%s3084 + $0x8] sm:$0x1]
      %v3094 = vld [vmem:[%s3084 + $0x9] sm:$0x1]
      %v3095 = vld [vmem:[%s3084 + $0xa] sm:$0x1]
      %v3096 = vld [vmem:[%s3084 + $0xb] sm:$0x1]
      %v3097 = vld [vmem:[%s3084 + $0xc] sm:$0x1]
      %v3098 = vld [vmem:[%s3084 + $0xd] sm:$0x1]
      %v3099 = vld [vmem:[%s3084 + $0xe] sm:$0x1]
      %v3100 = vld [vmem:[%s3084 + $0xf] sm:$0x1]
      %v3101 = vsel %vm411, %v3082, 0.0
      %3102 = vadd.xlane.f32.xlu0 %v3101
      %v3103 = vpop.xlane.xlu0 %3102
      %v3104 = vsel %vm411, %v3083, 0.0
      %3105 = vadd.xlane.f32.xlu0 %v3104
      %v3106 = vpop.xlane.xlu0 %3105
      %v3107 = vmul.f32 %v3103, %v424
      %v3108 = vmul.f32 %v3106, %v424
      %v3109 = vsub.f32 %v3082, %v3107
      %v3110 = vsub.f32 %v3083, %v3108
      %v3111 = vmul.f32 %v3109, %v3109
      %v3112 = vmul.f32 %v3110, %v3110
      %v3113 = vsel %vm411, %v3111, 0.0
      %3114 = vadd.xlane.f32.xlu0 %v3113
      %v3115 = vpop.xlane.xlu0 %3114
      %v3116 = vsel %vm411, %v3112, 0.0
      %3117 = vadd.xlane.f32.xlu0 %v3116
      %v3118 = vpop.xlane.xlu0 %3117
      %v3119 = vmul.f32 %v3115, %v424
      %v3120 = vmul.f32 %v3118, %v424
      %v3121 = vadd.f32 %v3119, 1e-06
      %v3122 = vadd.f32 %v3120, 1e-06
      %v3123 = vrsqrt.pop %v3121
      %v3124 = vmul.f32 %v3123, %v3121
      %v3125 = vmul.f32 %v3124, %v3123
      %v3126 = vmul.f32 0.5, %v3125
      %v3127 = vsub.f32 1.5, %v3126
      %v3128 = vmul.f32 %v3123, %v3127
      %vm3129 = vweird.f32 %v3121
      %vm3130 = vweird.f32 %v3123
      %vm3131 = vmor %vm3129, %vm3130
      %v3132 = vsel %vm3131, %v3123, %v3128
      %v3133 = vrsqrt.pop %v3122
      %v3134 = vmul.f32 %v3133, %v3122
      %v3135 = vmul.f32 %v3134, %v3133
      %v3136 = vmul.f32 0.5, %v3135
      %v3137 = vsub.f32 1.5, %v3136
      %v3138 = vmul.f32 %v3133, %v3137
      %vm3139 = vweird.f32 %v3122
      %vm3140 = vweird.f32 %v3133
      %vm3141 = vmor %vm3139, %vm3140
      %v3142 = vsel %vm3141, %v3133, %v3138
      %v3143 = vmul.f32 %v3109, %v3132
      %v3144 = vmul.f32 %v3110, %v3142
      %v3145 = vperm.slane %v3085, 0
      %v3146 = vmul.f32 %v3143, %v3145
      %v3147 = vmul.f32 %v3144, %v3145
      %v3148 = vperm.slane %v3086, 0
      %v3149 = vadd.f32 %v3146, %v3148
      %v3150 = vadd.f32 %v3147, %v3148
      %s3151 = scalar_lea.vmem %s7, 320
      %v3152 = vld [vmem:[%s3151] sm:$0xff]
      %v3153 = vld [vmem:[%s3151 + $0x50] sm:$0xff]
      %v3154 = vld [vmem:[%s3151 + $0xa0] sm:$0xff]
      %v3155 = vld [vmem:[%s3151 + $0xf0] sm:$0xff]
      %v3156 = vld [vmem:[%s3151 + $0x8] sm:$0xff]
      %v3157 = vld [vmem:[%s3151 + $0x58] sm:$0xff]
      %v3158 = vld [vmem:[%s3151 + $0xa8] sm:$0xff]
      %v3159 = vld [vmem:[%s3151 + $0xf8] sm:$0xff]
      %v3160 = vld [vmem:[%s3151 + $0x10] sm:$0xff]
      %v3161 = vld [vmem:[%s3151 + $0x60] sm:$0xff]
      %v3162 = vld [vmem:[%s3151 + $0xb0] sm:$0xff]
      %v3163 = vld [vmem:[%s3151 + $0x100] sm:$0xff]
      %v3164 = vld [vmem:[%s3151 + $0x18] sm:$0xff]
      %v3165 = vld [vmem:[%s3151 + $0x68] sm:$0xff]
      %v3166 = vld [vmem:[%s3151 + $0xb8] sm:$0xff]
      %v3167 = vld [vmem:[%s3151 + $0x108] sm:$0xff]
      %v3168 = vperm.slane %v3091, 0
      %v3170 = vsel %vm411, %v3149, 0
      %v3173 = vsel %vm411, %v3150, 0
      %3175 = vmatpush.msra.mxu0 0.0
      %3176 = vmatpush.msra.mxu0 0.0
      %3177 = vmatpush.msra.mxu0 0.0
      %3178 = vmatpush.msra.mxu0 0.0
      %3179 = vmatpush.msra.mxu0 0.0
      %3180 = vmatpush.msra.mxu0 0.0
      %3181 = vmatpush.msra.mxu0 0.0
      %3182 = vmatpush.msra.mxu0 0.0
      %3183 = vmatpush.msra.mxu0 0.0
      %3184 = vmatpush.msra.mxu0 0.0
      %3185 = vmatpush.msra.mxu0 0.0
      %3186 = vmatpush.msra.mxu0 0.0
      %3187 = vmatpush.msra.mxu0 %v3155
      %3188 = vmatpush.msra.mxu0 %v3154
      %3189 = vmatpush.msra.mxu0 %v3153
      %3190 = vmatpush.msra.mxu0 %v3152
      %3191 = vmatmul.f32.gmra.mxu0 %v3170
      %v3192 = vpop.f32.mrf.mxu0
      %v3193 = vadd.f32 %v3168, %v3192
      %3194 = vmatmul.f32.gmra.mxu0 %v3173
      %v3195 = vpop.f32.mrf.mxu0
      %v3196 = vadd.f32 %v3168, %v3195
      %3197 = vdwg.mxu0
      %v3198 = vperm.slane %v3092, 0
      %3199 = vmatpush.msra.mxu0 0.0
      %3200 = vmatpush.msra.mxu0 0.0
      %3201 = vmatpush.msra.mxu0 0.0
      %3202 = vmatpush.msra.mxu0 0.0
      %3203 = vmatpush.msra.mxu0 0.0
      %3204 = vmatpush.msra.mxu0 0.0
      %3205 = vmatpush.msra.mxu0 0.0
      %3206 = vmatpush.msra.mxu0 0.0
      %3207 = vmatpush.msra.mxu0 0.0
      %3208 = vmatpush.msra.mxu0 0.0
      %3209 = vmatpush.msra.mxu0 0.0
      %3210 = vmatpush.msra.mxu0 0.0
      %3211 = vmatpush.msra.mxu0 %v3159
      %3212 = vmatpush.msra.mxu0 %v3158
      %3213 = vmatpush.msra.mxu0 %v3157
      %3214 = vmatpush.msra.mxu0 %v3156
      %3215 = vmatmul.f32.gmra.mxu0 %v3170
      %v3216 = vpop.f32.mrf.mxu0
      %v3217 = vadd.f32 %v3198, %v3216
      %3218 = vmatmul.f32.gmra.mxu0 %v3173
      %v3219 = vpop.f32.mrf.mxu0
      %v3220 = vadd.f32 %v3198, %v3219
      %3221 = vdwg.mxu0
      %v3222 = vperm.slane %v3093, 0
      %3223 = vmatpush.msra.mxu0 0.0
      %3224 = vmatpush.msra.mxu0 0.0
      %3225 = vmatpush.msra.mxu0 0.0
      %3226 = vmatpush.msra.mxu0 0.0
      %3227 = vmatpush.msra.mxu0 0.0
      %3228 = vmatpush.msra.mxu0 0.0
      %3229 = vmatpush.msra.mxu0 0.0
      %3230 = vmatpush.msra.mxu0 0.0
      %3231 = vmatpush.msra.mxu0 0.0
      %3232 = vmatpush.msra.mxu0 0.0
      %3233 = vmatpush.msra.mxu0 0.0
      %3234 = vmatpush.msra.mxu0 0.0
      %3235 = vmatpush.msra.mxu0 %v3163
      %3236 = vmatpush.msra.mxu0 %v3162
      %3237 = vmatpush.msra.mxu0 %v3161
      %3238 = vmatpush.msra.mxu0 %v3160
      %3239 = vmatmul.f32.gmra.mxu0 %v3170
      %v3240 = vpop.f32.mrf.mxu0
      %v3241 = vadd.f32 %v3222, %v3240
      %3242 = vmatmul.f32.gmra.mxu0 %v3173
      %v3243 = vpop.f32.mrf.mxu0
      %v3244 = vadd.f32 %v3222, %v3243
      %3245 = vdwg.mxu0
      %v3246 = vmul.f32 %v3193, 0.35355338
      %v3247 = vmul.f32 %v3196, 0.35355338
      %3250 = vrot.lane.b32.xlu0 %v3217, 120
      %v3251 = vpop.permute.xlu0 %3250
      %3252 = vrot.lane.b32.xlu0 %v3220, 120
      %v3253 = vpop.permute.xlu0 %3252
      %v3256 = vmax.f32 %v3217, %v3251
      %v3257 = vmax.f32 %v3220, %v3253
      %3260 = vrot.lane.b32.xlu0 %v3256, 112
      %v3261 = vpop.permute.xlu0 %3260
      %3262 = vrot.lane.b32.xlu0 %v3257, 112
      %v3263 = vpop.permute.xlu0 %3262
      %v3266 = vmax.f32 %v3256, %v3261
      %v3267 = vmax.f32 %v3257, %v3263
      %3270 = vrot.lane.b32.xlu0 %v3266, 8
      %v3271 = vpop.permute.xlu0 %3270
      %3272 = vrot.lane.b32.xlu0 %v3267, 8
      %v3273 = vpop.permute.xlu0 %3272
      %3276 = vrot.lane.b32.xlu0 %v3266, 16
      %v3277 = vpop.permute.xlu0 %3276
      %3278 = vrot.lane.b32.xlu0 %v3267, 16
      %v3279 = vpop.permute.xlu0 %3278
      %3282 = vrot.lane.b32.xlu0 %v3266, 24
      %v3283 = vpop.permute.xlu0 %3282
      %3284 = vrot.lane.b32.xlu0 %v3267, 24
      %v3285 = vpop.permute.xlu0 %3284
      %v3288 = vsel %vm605, %v3266, %v3271
      %v3289 = vsel %vm605, %v3267, %v3273
      %v3290 = vsel %vm608, %v3288, %v3277
      %v3291 = vsel %vm608, %v3289, %v3279
      %v3292 = vsel %vm611, %v3290, %v3283
      %v3293 = vsel %vm611, %v3291, %v3285
      %v3294 = vmin.f32 %v3217, %v3251
      %v3295 = vmin.f32 %v3220, %v3253
      %3298 = vrot.lane.b32.xlu0 %v3294, 112
      %v3299 = vpop.permute.xlu0 %3298
      %3300 = vrot.lane.b32.xlu0 %v3295, 112
      %v3301 = vpop.permute.xlu0 %3300
      %v3304 = vmin.f32 %v3294, %v3299
      %v3305 = vmin.f32 %v3295, %v3301
      %3308 = vrot.lane.b32.xlu0 %v3304, 8
      %v3309 = vpop.permute.xlu0 %3308
      %3310 = vrot.lane.b32.xlu0 %v3305, 8
      %v3311 = vpop.permute.xlu0 %3310
      %3314 = vrot.lane.b32.xlu0 %v3304, 16
      %v3315 = vpop.permute.xlu0 %3314
      %3316 = vrot.lane.b32.xlu0 %v3305, 16
      %v3317 = vpop.permute.xlu0 %3316
      %3320 = vrot.lane.b32.xlu0 %v3304, 24
      %v3321 = vpop.permute.xlu0 %3320
      %3322 = vrot.lane.b32.xlu0 %v3305, 24
      %v3323 = vpop.permute.xlu0 %3322
      %v3326 = vsel %vm605, %v3304, %v3309
      %v3327 = vsel %vm605, %v3305, %v3311
      %v3328 = vsel %vm608, %v3326, %v3315
      %v3329 = vsel %vm608, %v3327, %v3317
      %v3330 = vsel %vm611, %v3328, %v3321
      %v3331 = vsel %vm611, %v3329, %v3323
      %vm3332 = vcmp.ge.f32.partialorder %v3246, 0.0
      %vm3333 = vcmp.ge.f32.partialorder %v3247, 0.0
      %v3334 = vmul.f32 %v3246, %v3292
      %v3335 = vmul.f32 %v3247, %v3293
      %v3336 = vmul.f32 %v3246, %v3330
      %v3337 = vmul.f32 %v3247, %v3331
      %v3338 = vsel %vm3332, %v3334, %v3336
      %v3339 = vsel %vm3333, %v3335, %v3337
      %v3341 = vsel %vm411, %v3246, 0
      %v3344 = vsel %vm411, %v3247, 0
      %3346 = vmatpush.msra.mxu0 0.0
      %3347 = vmatpush.msra.mxu0 0.0
      %3348 = vmatpush.msra.mxu0 0.0
      %3349 = vmatpush.msra.mxu0 0.0
      %3350 = vmatpush.msra.mxu0 0.0
      %3351 = vmatpush.msra.mxu0 0.0
      %3352 = vmatpush.msra.mxu0 0.0
      %3353 = vmatpush.msra.mxu0 0.0
      %3354 = vmatpush.msra.mxu0 0.0
      %3355 = vmatpush.msra.mxu0 0.0
      %3356 = vmatpush.msra.mxu0 0.0
      %3357 = vmatpush.msra.mxu0 0.0
      %3358 = vmatpush.msra.mxu0 %v663
      %3359 = vmatpush.msra.mxu0 %v662
      %3360 = vmatpush.msra.mxu0 %v661
      %3361 = vmatpush.msra.mxu0 %v660
      %3362 = vmatmul.f32.gmra.mxu0 %v3341
      %v3363 = vpop.f32.mrf.mxu0
      %v3364 = vadd.f32 0.0, %v3363
      %3365 = vmatmul.f32.gmra.mxu0 %v3344
      %v3366 = vpop.f32.mrf.mxu0
      %v3367 = vadd.f32 0.0, %v3366
      %3368 = vdwg.mxu0
      %v3370 = vsel %vm411, %v3338, 0
      %v3373 = vsel %vm411, %v3339, 0
      %3375 = vmatpush.msra.mxu0 0.0
      %3376 = vmatpush.msra.mxu0 0.0
      %3377 = vmatpush.msra.mxu0 0.0
      %3378 = vmatpush.msra.mxu0 0.0
      %3379 = vmatpush.msra.mxu0 0.0
      %3380 = vmatpush.msra.mxu0 0.0
      %3381 = vmatpush.msra.mxu0 0.0
      %3382 = vmatpush.msra.mxu0 0.0
      %3383 = vmatpush.msra.mxu0 0.0
      %3384 = vmatpush.msra.mxu0 0.0
      %3385 = vmatpush.msra.mxu0 0.0
      %3386 = vmatpush.msra.mxu0 0.0
      %3387 = vmatpush.msra.mxu0 %v663
      %3388 = vmatpush.msra.mxu0 %v662
      %3389 = vmatpush.msra.mxu0 %v661
      %3390 = vmatpush.msra.mxu0 %v660
      %3391 = vmatmul.f32.gmra.mxu0 %v3370
      %v3392 = vpop.f32.mrf.mxu0
      %v3393 = vadd.f32 0.0, %v3392
      %3394 = vmatmul.f32.gmra.mxu0 %v3373
      %v3395 = vpop.f32.mrf.mxu0
      %v3396 = vadd.f32 0.0, %v3395
      %3397 = vdwg.mxu0
      %v3398 = vsel %vm411, %v3217, 0
      %v3400 = vsel %vm411, %v3220, 0
      %3402 = vmatpush.msra.mxu0 0.0
      %3403 = vmatpush.msra.mxu0 0.0
      %3404 = vmatpush.msra.mxu0 0.0
      %3405 = vmatpush.msra.mxu0 0.0
      %3406 = vmatpush.msra.mxu0 0.0
      %3407 = vmatpush.msra.mxu0 0.0
      %3408 = vmatpush.msra.mxu0 0.0
      %3409 = vmatpush.msra.mxu0 0.0
      %3410 = vmatpush.msra.mxu0 0.0
      %3411 = vmatpush.msra.mxu0 0.0
      %3412 = vmatpush.msra.mxu0 0.0
      %3413 = vmatpush.msra.mxu0 0.0
      %3414 = vmatpush.msra.mxu0 %v725
      %3415 = vmatpush.msra.mxu0 %v724
      %3416 = vmatpush.msra.mxu0 %v723
      %3417 = vmatpush.msra.mxu0 %v722
      %3418 = vmatmul.f32.gmra.mxu0 %v3398
      %v3419 = vpop.f32.mrf.mxu0
      %v3420 = vadd.f32 0.0, %v3419
      %3421 = vmatmul.f32.gmra.mxu0 %v3400
      %v3422 = vpop.f32.mrf.mxu0
      %v3423 = vadd.f32 0.0, %v3422
      %3424 = vdwg.mxu0
      %v3426 = vsel %vm411, %v3241, 0
      %v3429 = vsel %vm411, %v3244, 0
      %3431 = vmatpush.msra.mxu0 0.0
      %3432 = vmatpush.msra.mxu0 0.0
      %3433 = vmatpush.msra.mxu0 0.0
      %3434 = vmatpush.msra.mxu0 0.0
      %3435 = vmatpush.msra.mxu0 0.0
      %3436 = vmatpush.msra.mxu0 0.0
      %3437 = vmatpush.msra.mxu0 0.0
      %3438 = vmatpush.msra.mxu0 0.0
      %3439 = vmatpush.msra.mxu0 0.0
      %3440 = vmatpush.msra.mxu0 0.0
      %3441 = vmatpush.msra.mxu0 0.0
      %3442 = vmatpush.msra.mxu0 0.0
      %3443 = vmatpush.msra.mxu0 %v663
      %3444 = vmatpush.msra.mxu0 %v662
      %3445 = vmatpush.msra.mxu0 %v661
      %3446 = vmatpush.msra.mxu0 %v660
      %3447 = vmatmul.f32.gmra.mxu0 %v3426
      %v3448 = vpop.f32.mrf.mxu0
      %v3449 = vadd.f32 0.0, %v3448
      %3450 = vmatmul.f32.gmra.mxu0 %v3429
      %v3451 = vpop.f32.mrf.mxu0
      %v3452 = vadd.f32 0.0, %v3451
      %3453 = vdwg.mxu0
      %v3454 = vmul.f32 %v3364, %v3420
      %v3455 = vmul.f32 %v3367, %v3423
      %v3456 = vsub.f32 %v3454, %v3393
      %v3457 = vsub.f32 %v3455, %v3396
      %v3458 = vmul.f32 %v3456, 1.442695
      %v3459 = vpow.pop %v3458
      %v3460 = vmul.f32 %v3457, 1.442695
      %v3461 = vpow.pop %v3460
      %3462 = vmatpush.msra.mxu0 %v805
      %3463 = vmatpush.msra.mxu0 %v804
      %3464 = vmatpush.msra.mxu0 %v803
      %3465 = vmatpush.msra.mxu0 %v802
      %3466 = vmatpush.msra.mxu0 %v801
      %3467 = vmatpush.msra.mxu0 %v800
      %3468 = vmatpush.msra.mxu0 %v799
      %3469 = vmatpush.msra.mxu0 %v798
      %3470 = vmatpush.msra.mxu0 %v797
      %3471 = vmatpush.msra.mxu0 %v796
      %3472 = vmatpush.msra.mxu0 %v795
      %3473 = vmatpush.msra.mxu0 %v794
      %3474 = vmatpush.msra.mxu0 %v793
      %3475 = vmatpush.msra.mxu0 %v792
      %3476 = vmatpush.msra.mxu0 %v791
      %3477 = vmatpush.msra.mxu0 %v790
      %3478 = vmatmul.f32.gmra.mxu0 %v3459
      %v3479 = vpop.f32.mrf.mxu0
      %v3480 = vadd.f32 0.0, %v3479
      %3481 = vmatmul.f32.gmra.mxu0 %v3461
      %v3482 = vpop.f32.mrf.mxu0
      %v3483 = vadd.f32 0.0, %v3482
      %3484 = vdwg.mxu0
      %v3485 = vrcp.pop %v3480
      %v3486 = vmul.f32 %v3480, %v3485
      %v3487 = vsub.f32 1.0, %v3486
      %v3488 = vmul.f32 %v3485, %v3487
      %v3489 = vadd.f32 %v3485, %v3488
      %vm3490 = vweird.f32 %v3480
      %vm3491 = vweird.f32 %v3485
      %vm3492 = vmor %vm3490, %vm3491
      %v3493 = vsel %vm3492, %v3485, %v3489
      %v3494 = vand.u32 2147483647, %v3480
      %vm3495 = vcmp.eq.f32.partialorder %v3494, 8.507059e+37
      %v3496 = vand.u32 %v3480, 2147483648
      %v3497 = vor.u32 1.1754944e-38, %v3496
      %v3498 = vsel %vm3495, %v3497, %v3493
      %v3499 = vmul.f32 %v3459, %v3498
      %v3500 = vrcp.pop %v3483
      %v3501 = vmul.f32 %v3483, %v3500
      %v3502 = vsub.f32 1.0, %v3501
      %v3503 = vmul.f32 %v3500, %v3502
      %v3504 = vadd.f32 %v3500, %v3503
      %vm3505 = vweird.f32 %v3483
      %vm3506 = vweird.f32 %v3500
      %vm3507 = vmor %vm3505, %vm3506
      %v3508 = vsel %vm3507, %v3500, %v3504
      %v3509 = vand.u32 2147483647, %v3483
      %vm3510 = vcmp.eq.f32.partialorder %v3509, 8.507059e+37
      %v3511 = vand.u32 %v3483, 2147483648
      %v3512 = vor.u32 1.1754944e-38, %v3511
      %v3513 = vsel %vm3510, %v3512, %v3508
      %v3514 = vmul.f32 %v3461, %v3513
      %v3515 = vmul.f32 %v3499, %v3449
      %v3516 = vmul.f32 %v3514, %v3452
      %3517 = vmatpush.xpose.msra.mxu0 0.0
      %3518 = vmatpush.xpose.msra.mxu0 0.0
      %3519 = vmatpush.xpose.msra.mxu0 0.0
      %3520 = vmatpush.xpose.msra.mxu0 0.0
      %3521 = vmatpush.xpose.msra.mxu0 0.0
      %3522 = vmatpush.xpose.msra.mxu0 0.0
      %3523 = vmatpush.xpose.msra.mxu0 0.0
      %3524 = vmatpush.xpose.msra.mxu0 0.0
      %3525 = vmatpush.xpose.msra.mxu0 0.0
      %3526 = vmatpush.xpose.msra.mxu0 0.0
      %3527 = vmatpush.xpose.msra.mxu0 0.0
      %3528 = vmatpush.xpose.msra.mxu0 0.0
      %3529 = vmatpush.xpose.msra.mxu0 %v864
      %3530 = vmatpush.xpose.msra.mxu0 %v863
      %3531 = vmatpush.xpose.msra.mxu0 %v862
      %3532 = vmatpush.xpose.msra.mxu0 %v861
      %3533 = vmatmul.f32.gmra.mxu0 %v3515
      %v3534 = vpop.f32.mrf.mxu0
      %v3535 = vadd.f32 0.0, %v3534
      %3536 = vmatmul.f32.gmra.mxu0 %v3516
      %v3537 = vpop.f32.mrf.mxu0
      %v3538 = vadd.f32 0.0, %v3537
      %3539 = vdwg.mxu0
      %v3540 = vperm.slane %v3094, 0
      %v3542 = vsel %vm411, %v3535, 0
      %v3545 = vsel %vm411, %v3538, 0
      %3547 = vmatpush.msra.mxu0 0.0
      %3548 = vmatpush.msra.mxu0 0.0
      %3549 = vmatpush.msra.mxu0 0.0
      %3550 = vmatpush.msra.mxu0 0.0
      %3551 = vmatpush.msra.mxu0 0.0
      %3552 = vmatpush.msra.mxu0 0.0
      %3553 = vmatpush.msra.mxu0 0.0
      %3554 = vmatpush.msra.mxu0 0.0
      %3555 = vmatpush.msra.mxu0 0.0
      %3556 = vmatpush.msra.mxu0 0.0
      %3557 = vmatpush.msra.mxu0 0.0
      %3558 = vmatpush.msra.mxu0 0.0
      %3559 = vmatpush.msra.mxu0 %v3167
      %3560 = vmatpush.msra.mxu0 %v3166
      %3561 = vmatpush.msra.mxu0 %v3165
      %3562 = vmatpush.msra.mxu0 %v3164
      %3563 = vmatmul.f32.gmra.mxu0 %v3542
      %v3564 = vpop.f32.mrf.mxu0
      %v3565 = vadd.f32 %v3540, %v3564
      %3566 = vmatmul.f32.gmra.mxu0 %v3545
      %v3567 = vpop.f32.mrf.mxu0
      %v3568 = vadd.f32 %v3540, %v3567
      %3569 = vdwg.mxu0
      %v3570 = vadd.f32 %v3149, %v3565
      %v3571 = vadd.f32 %v3150, %v3568
      %v3572 = vsel %vm411, %v3570, 0.0
      %3573 = vadd.xlane.f32.xlu0 %v3572
      %v3574 = vpop.xlane.xlu0 %3573
      %v3575 = vsel %vm411, %v3571, 0.0
      %3576 = vadd.xlane.f32.xlu0 %v3575
      %v3577 = vpop.xlane.xlu0 %3576
      %v3578 = vmul.f32 %v3574, %v424
      %v3579 = vmul.f32 %v3577, %v424
      %v3580 = vsub.f32 %v3570, %v3578
      %v3581 = vsub.f32 %v3571, %v3579
      %v3582 = vmul.f32 %v3580, %v3580
      %v3583 = vmul.f32 %v3581, %v3581
      %v3584 = vsel %vm411, %v3582, 0.0
      %3585 = vadd.xlane.f32.xlu0 %v3584
      %v3586 = vpop.xlane.xlu0 %3585
      %v3587 = vsel %vm411, %v3583, 0.0
      %3588 = vadd.xlane.f32.xlu0 %v3587
      %v3589 = vpop.xlane.xlu0 %3588
      %v3590 = vmul.f32 %v3586, %v424
      %v3591 = vmul.f32 %v3589, %v424
      %v3592 = vadd.f32 %v3590, 1e-06
      %v3593 = vadd.f32 %v3591, 1e-06
      %v3594 = vrsqrt.pop %v3592
      %v3595 = vmul.f32 %v3594, %v3592
      %v3596 = vmul.f32 %v3595, %v3594
      %v3597 = vmul.f32 0.5, %v3596
      %v3598 = vsub.f32 1.5, %v3597
      %v3599 = vmul.f32 %v3594, %v3598
      %vm3600 = vweird.f32 %v3592
      %vm3601 = vweird.f32 %v3594
      %vm3602 = vmor %vm3600, %vm3601
      %v3603 = vsel %vm3602, %v3594, %v3599
      %v3604 = vrsqrt.pop %v3593
      %v3605 = vmul.f32 %v3604, %v3593
      %v3606 = vmul.f32 %v3605, %v3604
      %v3607 = vmul.f32 0.5, %v3606
      %v3608 = vsub.f32 1.5, %v3607
      %v3609 = vmul.f32 %v3604, %v3608
      %vm3610 = vweird.f32 %v3593
      %vm3611 = vweird.f32 %v3604
      %vm3612 = vmor %vm3610, %vm3611
      %v3613 = vsel %vm3612, %v3604, %v3609
      %v3614 = vmul.f32 %v3580, %v3603
      %v3615 = vmul.f32 %v3581, %v3613
      %v3616 = vperm.slane %v3087, 0
      %v3617 = vmul.f32 %v3614, %v3616
      %v3618 = vmul.f32 %v3615, %v3616
      %v3619 = vperm.slane %v3088, 0
      %v3620 = vadd.f32 %v3617, %v3619
      %v3621 = vadd.f32 %v3618, %v3619
      %v3622 = vld [vmem:[%s3151 + $0x20] sm:$0xff]
      %v3623 = vld [vmem:[%s3151 + $0x70] sm:$0xff]
      %v3624 = vld [vmem:[%s3151 + $0xc0] sm:$0xff]
      %v3625 = vld [vmem:[%s3151 + $0x110] sm:$0xff]
      %v3626 = vld [vmem:[%s3151 + $0x28] sm:$0xff]
      %v3627 = vld [vmem:[%s3151 + $0x78] sm:$0xff]
      %v3628 = vld [vmem:[%s3151 + $0xc8] sm:$0xff]
      %v3629 = vld [vmem:[%s3151 + $0x118] sm:$0xff]
      %v3630 = vld [vmem:[%s3151 + $0x30] sm:$0xff]
      %v3631 = vld [vmem:[%s3151 + $0x80] sm:$0xff]
      %v3632 = vld [vmem:[%s3151 + $0xd0] sm:$0xff]
      %v3633 = vld [vmem:[%s3151 + $0x120] sm:$0xff]
      %v3634 = vld [vmem:[%s3151 + $0x38] sm:$0xff]
      %v3635 = vld [vmem:[%s3151 + $0x88] sm:$0xff]
      %v3636 = vld [vmem:[%s3151 + $0xd8] sm:$0xff]
      %v3637 = vld [vmem:[%s3151 + $0x128] sm:$0xff]
      %v3638 = vperm.slane %v3095, 0
      %v3640 = vsel %vm411, %v3620, 0
      %v3643 = vsel %vm411, %v3621, 0
      %3645 = vmatpush.msra.mxu0 0.0
      %3646 = vmatpush.msra.mxu0 0.0
      %3647 = vmatpush.msra.mxu0 0.0
      %3648 = vmatpush.msra.mxu0 0.0
      %3649 = vmatpush.msra.mxu0 0.0
      %3650 = vmatpush.msra.mxu0 0.0
      %3651 = vmatpush.msra.mxu0 0.0
      %3652 = vmatpush.msra.mxu0 0.0
      %3653 = vmatpush.msra.mxu0 0.0
      %3654 = vmatpush.msra.mxu0 0.0
      %3655 = vmatpush.msra.mxu0 0.0
      %3656 = vmatpush.msra.mxu0 0.0
      %3657 = vmatpush.msra.mxu0 %v3625
      %3658 = vmatpush.msra.mxu0 %v3624
      %3659 = vmatpush.msra.mxu0 %v3623
      %3660 = vmatpush.msra.mxu0 %v3622
      %3661 = vmatmul.f32.gmra.mxu0 %v3640
      %v3662 = vpop.f32.mrf.mxu0
      %v3663 = vadd.f32 %v3638, %v3662
      %3664 = vmatmul.f32.gmra.mxu0 %v3643
      %v3665 = vpop.f32.mrf.mxu0
      %v3666 = vadd.f32 %v3638, %v3665
      %3667 = vdwg.mxu0
      %v3668 = vperm.slane %v3096, 0
      %3669 = vmatpush.msra.mxu0 0.0
      %3670 = vmatpush.msra.mxu0 0.0
      %3671 = vmatpush.msra.mxu0 0.0
      %3672 = vmatpush.msra.mxu0 0.0
      %3673 = vmatpush.msra.mxu0 0.0
      %3674 = vmatpush.msra.mxu0 0.0
      %3675 = vmatpush.msra.mxu0 0.0
      %3676 = vmatpush.msra.mxu0 0.0
      %3677 = vmatpush.msra.mxu0 0.0
      %3678 = vmatpush.msra.mxu0 0.0
      %3679 = vmatpush.msra.mxu0 0.0
      %3680 = vmatpush.msra.mxu0 0.0
      %3681 = vmatpush.msra.mxu0 %v3629
      %3682 = vmatpush.msra.mxu0 %v3628
      %3683 = vmatpush.msra.mxu0 %v3627
      %3684 = vmatpush.msra.mxu0 %v3626
      %3685 = vmatmul.f32.gmra.mxu0 %v2496
      %v3686 = vpop.f32.mrf.mxu0
      %v3687 = vadd.f32 %v3668, %v3686
      %3688 = vmatmul.f32.gmra.mxu0 %v2499
      %v3689 = vpop.f32.mrf.mxu0
      %v3690 = vadd.f32 %v3668, %v3689
      %3691 = vdwg.mxu0
      %v3692 = vperm.slane %v3097, 0
      %3693 = vmatpush.msra.mxu0 0.0
      %3694 = vmatpush.msra.mxu0 0.0
      %3695 = vmatpush.msra.mxu0 0.0
      %3696 = vmatpush.msra.mxu0 0.0
      %3697 = vmatpush.msra.mxu0 0.0
      %3698 = vmatpush.msra.mxu0 0.0
      %3699 = vmatpush.msra.mxu0 0.0
      %3700 = vmatpush.msra.mxu0 0.0
      %3701 = vmatpush.msra.mxu0 0.0
      %3702 = vmatpush.msra.mxu0 0.0
      %3703 = vmatpush.msra.mxu0 0.0
      %3704 = vmatpush.msra.mxu0 0.0
      %3705 = vmatpush.msra.mxu0 %v3633
      %3706 = vmatpush.msra.mxu0 %v3632
      %3707 = vmatpush.msra.mxu0 %v3631
      %3708 = vmatpush.msra.mxu0 %v3630
      %3709 = vmatmul.f32.gmra.mxu0 %v2496
      %v3710 = vpop.f32.mrf.mxu0
      %v3711 = vadd.f32 %v3692, %v3710
      %3712 = vmatmul.f32.gmra.mxu0 %v2499
      %v3713 = vpop.f32.mrf.mxu0
      %v3714 = vadd.f32 %v3692, %v3713
      %3715 = vdwg.mxu0
      %v3716 = vmul.f32 %v3663, 0.35355338
      %v3717 = vmul.f32 %v3666, 0.35355338
      %3720 = vrot.lane.b32.xlu0 %v3687, 120
      %v3721 = vpop.permute.xlu0 %3720
      %3722 = vrot.lane.b32.xlu0 %v3690, 120
      %v3723 = vpop.permute.xlu0 %3722
      %v3726 = vmax.f32 %v3687, %v3721
      %v3727 = vmax.f32 %v3690, %v3723
      %3730 = vrot.lane.b32.xlu0 %v3726, 112
      %v3731 = vpop.permute.xlu0 %3730
      %3732 = vrot.lane.b32.xlu0 %v3727, 112
      %v3733 = vpop.permute.xlu0 %3732
      %v3736 = vmax.f32 %v3726, %v3731
      %v3737 = vmax.f32 %v3727, %v3733
      %3740 = vrot.lane.b32.xlu0 %v3736, 8
      %v3741 = vpop.permute.xlu0 %3740
      %3742 = vrot.lane.b32.xlu0 %v3737, 8
      %v3743 = vpop.permute.xlu0 %3742
      %3746 = vrot.lane.b32.xlu0 %v3736, 16
      %v3747 = vpop.permute.xlu0 %3746
      %3748 = vrot.lane.b32.xlu0 %v3737, 16
      %v3749 = vpop.permute.xlu0 %3748
      %3752 = vrot.lane.b32.xlu0 %v3736, 24
      %v3753 = vpop.permute.xlu0 %3752
      %3754 = vrot.lane.b32.xlu0 %v3737, 24
      %v3755 = vpop.permute.xlu0 %3754
      %v3758 = vsel %vm605, %v3736, %v3741
      %v3759 = vsel %vm605, %v3737, %v3743
      %v3760 = vsel %vm608, %v3758, %v3747
      %v3761 = vsel %vm608, %v3759, %v3749
      %v3762 = vsel %vm611, %v3760, %v3753
      %v3763 = vsel %vm611, %v3761, %v3755
      %v3764 = vmin.f32 %v3687, %v3721
      %v3765 = vmin.f32 %v3690, %v3723
      %3768 = vrot.lane.b32.xlu0 %v3764, 112
      %v3769 = vpop.permute.xlu0 %3768
      %3770 = vrot.lane.b32.xlu0 %v3765, 112
      %v3771 = vpop.permute.xlu0 %3770
      %v3774 = vmin.f32 %v3764, %v3769
      %v3775 = vmin.f32 %v3765, %v3771
      %3778 = vrot.lane.b32.xlu0 %v3774, 8
      %v3779 = vpop.permute.xlu0 %3778
      %3780 = vrot.lane.b32.xlu0 %v3775, 8
      %v3781 = vpop.permute.xlu0 %3780
      %3784 = vrot.lane.b32.xlu0 %v3774, 16
      %v3785 = vpop.permute.xlu0 %3784
      %3786 = vrot.lane.b32.xlu0 %v3775, 16
      %v3787 = vpop.permute.xlu0 %3786
      %3790 = vrot.lane.b32.xlu0 %v3774, 24
      %v3791 = vpop.permute.xlu0 %3790
      %3792 = vrot.lane.b32.xlu0 %v3775, 24
      %v3793 = vpop.permute.xlu0 %3792
      %v3796 = vsel %vm605, %v3774, %v3779
      %v3797 = vsel %vm605, %v3775, %v3781
      %v3798 = vsel %vm608, %v3796, %v3785
      %v3799 = vsel %vm608, %v3797, %v3787
      %v3800 = vsel %vm611, %v3798, %v3791
      %v3801 = vsel %vm611, %v3799, %v3793
      %vm3802 = vcmp.ge.f32.partialorder %v3716, 0.0
      %vm3803 = vcmp.ge.f32.partialorder %v3717, 0.0
      %v3804 = vmul.f32 %v3716, %v3762
      %v3805 = vmul.f32 %v3717, %v3763
      %v3806 = vmul.f32 %v3716, %v3800
      %v3807 = vmul.f32 %v3717, %v3801
      %v3808 = vsel %vm3802, %v3804, %v3806
      %v3809 = vsel %vm3803, %v3805, %v3807
      %v3811 = vsel %vm411, %v3716, 0
      %v3814 = vsel %vm411, %v3717, 0
      %3816 = vmatpush.msra.mxu0 0.0
      %3817 = vmatpush.msra.mxu0 0.0
      %3818 = vmatpush.msra.mxu0 0.0
      %3819 = vmatpush.msra.mxu0 0.0
      %3820 = vmatpush.msra.mxu0 0.0
      %3821 = vmatpush.msra.mxu0 0.0
      %3822 = vmatpush.msra.mxu0 0.0
      %3823 = vmatpush.msra.mxu0 0.0
      %3824 = vmatpush.msra.mxu0 0.0
      %3825 = vmatpush.msra.mxu0 0.0
      %3826 = vmatpush.msra.mxu0 0.0
      %3827 = vmatpush.msra.mxu0 0.0
      %3828 = vmatpush.msra.mxu0 %v663
      %3829 = vmatpush.msra.mxu0 %v662
      %3830 = vmatpush.msra.mxu0 %v661
      %3831 = vmatpush.msra.mxu0 %v660
      %3832 = vmatmul.f32.gmra.mxu0 %v3811
      %v3833 = vpop.f32.mrf.mxu0
      %v3834 = vadd.f32 0.0, %v3833
      %3835 = vmatmul.f32.gmra.mxu0 %v3814
      %v3836 = vpop.f32.mrf.mxu0
      %v3837 = vadd.f32 0.0, %v3836
      %3838 = vdwg.mxu0
      %v3840 = vsel %vm411, %v3808, 0
      %v3843 = vsel %vm411, %v3809, 0
      %3845 = vmatpush.msra.mxu0 0.0
      %3846 = vmatpush.msra.mxu0 0.0
      %3847 = vmatpush.msra.mxu0 0.0
      %3848 = vmatpush.msra.mxu0 0.0
      %3849 = vmatpush.msra.mxu0 0.0
      %3850 = vmatpush.msra.mxu0 0.0
      %3851 = vmatpush.msra.mxu0 0.0
      %3852 = vmatpush.msra.mxu0 0.0
      %3853 = vmatpush.msra.mxu0 0.0
      %3854 = vmatpush.msra.mxu0 0.0
      %3855 = vmatpush.msra.mxu0 0.0
      %3856 = vmatpush.msra.mxu0 0.0
      %3857 = vmatpush.msra.mxu0 %v663
      %3858 = vmatpush.msra.mxu0 %v662
      %3859 = vmatpush.msra.mxu0 %v661
      %3860 = vmatpush.msra.mxu0 %v660
      %3861 = vmatmul.f32.gmra.mxu0 %v3840
      %v3862 = vpop.f32.mrf.mxu0
      %v3863 = vadd.f32 0.0, %v3862
      %3864 = vmatmul.f32.gmra.mxu0 %v3843
      %v3865 = vpop.f32.mrf.mxu0
      %v3866 = vadd.f32 0.0, %v3865
      %3867 = vdwg.mxu0
      %v3868 = vsel %vm411, %v3687, 0
      %v3870 = vsel %vm411, %v3690, 0
      %3872 = vmatpush.msra.mxu0 0.0
      %3873 = vmatpush.msra.mxu0 0.0
      %3874 = vmatpush.msra.mxu0 0.0
      %3875 = vmatpush.msra.mxu0 0.0
      %3876 = vmatpush.msra.mxu0 0.0
      %3877 = vmatpush.msra.mxu0 0.0
      %3878 = vmatpush.msra.mxu0 0.0
      %3879 = vmatpush.msra.mxu0 0.0
      %3880 = vmatpush.msra.mxu0 0.0
      %3881 = vmatpush.msra.mxu0 0.0
      %3882 = vmatpush.msra.mxu0 0.0
      %3883 = vmatpush.msra.mxu0 0.0
      %3884 = vmatpush.msra.mxu0 %v725
      %3885 = vmatpush.msra.mxu0 %v724
      %3886 = vmatpush.msra.mxu0 %v723
      %3887 = vmatpush.msra.mxu0 %v722
      %3888 = vmatmul.f32.gmra.mxu0 %v3868
      %v3889 = vpop.f32.mrf.mxu0
      %v3890 = vadd.f32 0.0, %v3889
      %3891 = vmatmul.f32.gmra.mxu0 %v3870
      %v3892 = vpop.f32.mrf.mxu0
      %v3893 = vadd.f32 0.0, %v3892
      %3894 = vdwg.mxu0
      %v3896 = vsel %vm411, %v3711, 0
      %v3899 = vsel %vm411, %v3714, 0
      %3901 = vmatpush.msra.mxu0 0.0
      %3902 = vmatpush.msra.mxu0 0.0
      %3903 = vmatpush.msra.mxu0 0.0
      %3904 = vmatpush.msra.mxu0 0.0
      %3905 = vmatpush.msra.mxu0 0.0
      %3906 = vmatpush.msra.mxu0 0.0
      %3907 = vmatpush.msra.mxu0 0.0
      %3908 = vmatpush.msra.mxu0 0.0
      %3909 = vmatpush.msra.mxu0 0.0
      %3910 = vmatpush.msra.mxu0 0.0
      %3911 = vmatpush.msra.mxu0 0.0
      %3912 = vmatpush.msra.mxu0 0.0
      %3913 = vmatpush.msra.mxu0 %v663
      %3914 = vmatpush.msra.mxu0 %v662
      %3915 = vmatpush.msra.mxu0 %v661
      %3916 = vmatpush.msra.mxu0 %v660
      %3917 = vmatmul.f32.gmra.mxu0 %v3896
      %v3918 = vpop.f32.mrf.mxu0
      %v3919 = vadd.f32 0.0, %v3918
      %3920 = vmatmul.f32.gmra.mxu0 %v3899
      %v3921 = vpop.f32.mrf.mxu0
      %v3922 = vadd.f32 0.0, %v3921
      %3923 = vdwg.mxu0
      %v3924 = vmul.f32 %v3834, %v3890
      %v3925 = vmul.f32 %v3837, %v3893
      %v3926 = vsub.f32 %v3924, %v3863
      %v3927 = vsub.f32 %v3925, %v3866
      %v3928 = vmul.f32 %v3926, 1.442695
      %v3929 = vpow.pop %v3928
      %v3930 = vmul.f32 %v3927, 1.442695
      %v3931 = vpow.pop %v3930
      %3932 = vmatpush.msra.mxu0 %v805
      %3933 = vmatpush.msra.mxu0 %v804
      %3934 = vmatpush.msra.mxu0 %v803
      %3935 = vmatpush.msra.mxu0 %v802
      %3936 = vmatpush.msra.mxu0 %v801
      %3937 = vmatpush.msra.mxu0 %v800
      %3938 = vmatpush.msra.mxu0 %v799
      %3939 = vmatpush.msra.mxu0 %v798
      %3940 = vmatpush.msra.mxu0 %v797
      %3941 = vmatpush.msra.mxu0 %v796
      %3942 = vmatpush.msra.mxu0 %v795
      %3943 = vmatpush.msra.mxu0 %v794
      %3944 = vmatpush.msra.mxu0 %v793
      %3945 = vmatpush.msra.mxu0 %v792
      %3946 = vmatpush.msra.mxu0 %v791
      %3947 = vmatpush.msra.mxu0 %v790
      %3948 = vmatmul.f32.gmra.mxu0 %v3929
      %v3949 = vpop.f32.mrf.mxu0
      %v3950 = vadd.f32 0.0, %v3949
      %3951 = vmatmul.f32.gmra.mxu0 %v3931
      %v3952 = vpop.f32.mrf.mxu0
      %v3953 = vadd.f32 0.0, %v3952
      %3954 = vdwg.mxu0
      %v3955 = vrcp.pop %v3950
      %v3956 = vmul.f32 %v3950, %v3955
      %v3957 = vsub.f32 1.0, %v3956
      %v3958 = vmul.f32 %v3955, %v3957
      %v3959 = vadd.f32 %v3955, %v3958
      %vm3960 = vweird.f32 %v3950
      %vm3961 = vweird.f32 %v3955
      %vm3962 = vmor %vm3960, %vm3961
      %v3963 = vsel %vm3962, %v3955, %v3959
      %v3964 = vand.u32 2147483647, %v3950
      %vm3965 = vcmp.eq.f32.partialorder %v3964, 8.507059e+37
      %v3966 = vand.u32 %v3950, 2147483648
      %v3967 = vor.u32 1.1754944e-38, %v3966
      %v3968 = vsel %vm3965, %v3967, %v3963
      %v3969 = vmul.f32 %v3929, %v3968
      %v3970 = vrcp.pop %v3953
      %v3971 = vmul.f32 %v3953, %v3970
      %v3972 = vsub.f32 1.0, %v3971
      %v3973 = vmul.f32 %v3970, %v3972
      %v3974 = vadd.f32 %v3970, %v3973
      %vm3975 = vweird.f32 %v3953
      %vm3976 = vweird.f32 %v3970
      %vm3977 = vmor %vm3975, %vm3976
      %v3978 = vsel %vm3977, %v3970, %v3974
      %v3979 = vand.u32 2147483647, %v3953
      %vm3980 = vcmp.eq.f32.partialorder %v3979, 8.507059e+37
      %v3981 = vand.u32 %v3953, 2147483648
      %v3982 = vor.u32 1.1754944e-38, %v3981
      %v3983 = vsel %vm3980, %v3982, %v3978
      %v3984 = vmul.f32 %v3931, %v3983
      %v3985 = vmul.f32 %v3969, %v3919
      %v3986 = vmul.f32 %v3984, %v3922
      %3987 = vmatpush.xpose.msra.mxu0 0.0
      %3988 = vmatpush.xpose.msra.mxu0 0.0
      %3989 = vmatpush.xpose.msra.mxu0 0.0
      %3990 = vmatpush.xpose.msra.mxu0 0.0
      %3991 = vmatpush.xpose.msra.mxu0 0.0
      %3992 = vmatpush.xpose.msra.mxu0 0.0
      %3993 = vmatpush.xpose.msra.mxu0 0.0
      %3994 = vmatpush.xpose.msra.mxu0 0.0
      %3995 = vmatpush.xpose.msra.mxu0 0.0
      %3996 = vmatpush.xpose.msra.mxu0 0.0
      %3997 = vmatpush.xpose.msra.mxu0 0.0
      %3998 = vmatpush.xpose.msra.mxu0 0.0
      %3999 = vmatpush.xpose.msra.mxu0 %v864
      %4000 = vmatpush.xpose.msra.mxu0 %v863
      %4001 = vmatpush.xpose.msra.mxu0 %v862
      %4002 = vmatpush.xpose.msra.mxu0 %v861
      %4003 = vmatmul.f32.gmra.mxu0 %v3985
      %v4004 = vpop.f32.mrf.mxu0
      %v4005 = vadd.f32 0.0, %v4004
      %4006 = vmatmul.f32.gmra.mxu0 %v3986
      %v4007 = vpop.f32.mrf.mxu0
      %v4008 = vadd.f32 0.0, %v4007
      %4009 = vdwg.mxu0
      %v4010 = vperm.slane %v3098, 0
      %v4012 = vsel %vm411, %v4005, 0
      %v4015 = vsel %vm411, %v4008, 0
      %4017 = vmatpush.msra.mxu0 0.0
      %4018 = vmatpush.msra.mxu0 0.0
      %4019 = vmatpush.msra.mxu0 0.0
      %4020 = vmatpush.msra.mxu0 0.0
      %4021 = vmatpush.msra.mxu0 0.0
      %4022 = vmatpush.msra.mxu0 0.0
      %4023 = vmatpush.msra.mxu0 0.0
      %4024 = vmatpush.msra.mxu0 0.0
      %4025 = vmatpush.msra.mxu0 0.0
      %4026 = vmatpush.msra.mxu0 0.0
      %4027 = vmatpush.msra.mxu0 0.0
      %4028 = vmatpush.msra.mxu0 0.0
      %4029 = vmatpush.msra.mxu0 %v3637
      %4030 = vmatpush.msra.mxu0 %v3636
      %4031 = vmatpush.msra.mxu0 %v3635
      %4032 = vmatpush.msra.mxu0 %v3634
      %4033 = vmatmul.f32.gmra.mxu0 %v4012
      %v4034 = vpop.f32.mrf.mxu0
      %v4035 = vadd.f32 %v4010, %v4034
      %4036 = vmatmul.f32.gmra.mxu0 %v4015
      %v4037 = vpop.f32.mrf.mxu0
      %v4038 = vadd.f32 %v4010, %v4037
      %4039 = vdwg.mxu0
      %v4040 = vsel %vm411, %v4035, 0.0
      %4041 = vadd.xlane.f32.xlu0 %v4040
      %v4042 = vpop.xlane.xlu0 %4041
      %v4043 = vsel %vm411, %v4038, 0.0
      %4044 = vadd.xlane.f32.xlu0 %v4043
      %v4045 = vpop.xlane.xlu0 %4044
      %v4046 = vmul.f32 %v4042, %v424
      %v4047 = vmul.f32 %v4045, %v424
      %v4048 = vsub.f32 %v4035, %v4046
      %v4049 = vsub.f32 %v4038, %v4047
      %v4050 = vmul.f32 %v4048, %v4048
      %v4051 = vmul.f32 %v4049, %v4049
      %v4052 = vsel %vm411, %v4050, 0.0
      %4053 = vadd.xlane.f32.xlu0 %v4052
      %v4054 = vpop.xlane.xlu0 %4053
      %v4055 = vsel %vm411, %v4051, 0.0
      %4056 = vadd.xlane.f32.xlu0 %v4055
      %v4057 = vpop.xlane.xlu0 %4056
      %v4058 = vmul.f32 %v4054, %v424
      %v4059 = vmul.f32 %v4057, %v424
      %v4060 = vadd.f32 %v4058, 1e-06
      %v4061 = vadd.f32 %v4059, 1e-06
      %v4062 = vrsqrt.pop %v4060
      %v4063 = vmul.f32 %v4062, %v4060
      %v4064 = vmul.f32 %v4063, %v4062
      %v4065 = vmul.f32 0.5, %v4064
      %v4066 = vsub.f32 1.5, %v4065
      %v4067 = vmul.f32 %v4062, %v4066
      %vm4068 = vweird.f32 %v4060
      %vm4069 = vweird.f32 %v4062
      %vm4070 = vmor %vm4068, %vm4069
      %v4071 = vsel %vm4070, %v4062, %v4067
      %v4072 = vrsqrt.pop %v4061
      %v4073 = vmul.f32 %v4072, %v4061
      %v4074 = vmul.f32 %v4073, %v4072
      %v4075 = vmul.f32 0.5, %v4074
      %v4076 = vsub.f32 1.5, %v4075
      %v4077 = vmul.f32 %v4072, %v4076
      %vm4078 = vweird.f32 %v4061
      %vm4079 = vweird.f32 %v4072
      %vm4080 = vmor %vm4078, %vm4079
      %v4081 = vsel %vm4080, %v4072, %v4077
      %v4082 = vmul.f32 %v4048, %v4071
      %v4083 = vmul.f32 %v4049, %v4081
      %v4084 = vperm.slane %v3089, 0
      %v4085 = vmul.f32 %v4082, %v4084
      %v4086 = vmul.f32 %v4083, %v4084
      %v4087 = vperm.slane %v3090, 0
      %v4088 = vadd.f32 %v4085, %v4087
      %v4089 = vadd.f32 %v4086, %v4087
      %v4090 = vld [vmem:[%s3151 + $0x40] sm:$0xff]
      %v4091 = vld [vmem:[%s3151 + $0x90] sm:$0xff]
      %v4092 = vld [vmem:[%s3151 + $0xe0] sm:$0xff]
      %v4093 = vld [vmem:[%s3151 + $0x130] sm:$0xff]
      %v4094 = vld [vmem:[%s3151 + $0x48] sm:$0xff]
      %v4095 = vld [vmem:[%s3151 + $0x98] sm:$0xff]
      %v4096 = vld [vmem:[%s3151 + $0xe8] sm:$0xff]
      %v4097 = vld [vmem:[%s3151 + $0x138] sm:$0xff]
      %v4098 = vperm.slane %v3099, 0
      %v4100 = vsel %vm411, %v4088, 0
      %v4103 = vsel %vm411, %v4089, 0
      %4105 = vmatpush.msra.mxu0 0.0
      %4106 = vmatpush.msra.mxu0 0.0
      %4107 = vmatpush.msra.mxu0 0.0
      %4108 = vmatpush.msra.mxu0 0.0
      %4109 = vmatpush.msra.mxu0 0.0
      %4110 = vmatpush.msra.mxu0 0.0
      %4111 = vmatpush.msra.mxu0 0.0
      %4112 = vmatpush.msra.mxu0 0.0
      %4113 = vmatpush.msra.mxu0 0.0
      %4114 = vmatpush.msra.mxu0 0.0
      %4115 = vmatpush.msra.mxu0 0.0
      %4116 = vmatpush.msra.mxu0 0.0
      %4117 = vmatpush.msra.mxu0 %v4093
      %4118 = vmatpush.msra.mxu0 %v4092
      %4119 = vmatpush.msra.mxu0 %v4091
      %4120 = vmatpush.msra.mxu0 %v4090
      %4121 = vmatmul.f32.gmra.mxu0 %v4100
      %v4122 = vpop.f32.mrf.mxu0
      %v4123 = vadd.f32 %v4098, %v4122
      %4124 = vmatmul.f32.gmra.mxu0 %v4103
      %v4125 = vpop.f32.mrf.mxu0
      %v4126 = vadd.f32 %v4098, %v4125
      %4127 = vdwg.mxu0
      %v4128 = vmul.f32 %v4123, 0.5
      %v4129 = vmul.f32 %v4126, 0.5
      %v4130 = vmul.f32 %v4123, 0.70710677
      %v4131 = vmul.f32 %v4126, 0.70710677
      %vm4132 = vcmp.ge.f32.partialorder %v4130, 0.0
      %vm4133 = vcmp.ge.f32.partialorder %v4131, 0.0
      %v4134 = vsel %vm4132, 1.0, -1.0
      %v4135 = vsel %vm4133, 1.0, -1.0
      %v4136 = vand.u32 2147483647, %v4130
      %v4137 = vand.u32 2147483647, %v4131
      %v4138 = vmul.f32 %v4136, 0.3275911
      %v4139 = vmul.f32 %v4137, 0.3275911
      %v4140 = vadd.f32 %v4138, 1.0
      %v4141 = vadd.f32 %v4139, 1.0
      %v4142 = vrcp.pop %v4140
      %v4143 = vmul.f32 %v4140, %v4142
      %v4144 = vsub.f32 1.0, %v4143
      %v4145 = vmul.f32 %v4142, %v4144
      %v4146 = vadd.f32 %v4142, %v4145
      %vm4147 = vweird.f32 %v4140
      %vm4148 = vweird.f32 %v4142
      %vm4149 = vmor %vm4147, %vm4148
      %v4150 = vsel %vm4149, %v4142, %v4146
      %v4151 = vand.u32 2147483647, %v4140
      %vm4152 = vcmp.eq.f32.partialorder %v4151, 8.507059e+37
      %v4153 = vand.u32 %v4140, 2147483648
      %v4154 = vor.u32 1.1754944e-38, %v4153
      %v4155 = vsel %vm4152, %v4154, %v4150
      %v4156 = vmul.f32 1.0, %v4155
      %v4157 = vrcp.pop %v4141
      %v4158 = vmul.f32 %v4141, %v4157
      %v4159 = vsub.f32 1.0, %v4158
      %v4160 = vmul.f32 %v4157, %v4159
      %v4161 = vadd.f32 %v4157, %v4160
      %vm4162 = vweird.f32 %v4141
      %vm4163 = vweird.f32 %v4157
      %vm4164 = vmor %vm4162, %vm4163
      %v4165 = vsel %vm4164, %v4157, %v4161
      %v4166 = vand.u32 2147483647, %v4141
      %vm4167 = vcmp.eq.f32.partialorder %v4166, 8.507059e+37
      %v4168 = vand.u32 %v4141, 2147483648
      %v4169 = vor.u32 1.1754944e-38, %v4168
      %v4170 = vsel %vm4167, %v4169, %v4165
      %v4171 = vmul.f32 1.0, %v4170
      %v4172 = vmul.f32 %v4156, 1.0614054
      %v4173 = vmul.f32 %v4171, 1.0614054
      %v4174 = vadd.f32 %v4172, -1.4531521
      %v4175 = vadd.f32 %v4173, -1.4531521
      %v4176 = vmul.f32 %v4174, %v4156
      %v4177 = vmul.f32 %v4175, %v4171
      %v4178 = vadd.f32 %v4176, 1.4214138
      %v4179 = vadd.f32 %v4177, 1.4214138
      %v4180 = vmul.f32 %v4178, %v4156
      %v4181 = vmul.f32 %v4179, %v4171
      %v4182 = vadd.f32 %v4180, -0.28449672
      %v4183 = vadd.f32 %v4181, -0.28449672
      %v4184 = vmul.f32 %v4182, %v4156
      %v4185 = vmul.f32 %v4183, %v4171
      %v4186 = vadd.f32 %v4184, 0.2548296
      %v4187 = vadd.f32 %v4185, 0.2548296
      %v4188 = vmul.f32 %v4186, %v4156
      %v4189 = vmul.f32 %v4187, %v4171
      %v4190 = vsub.f32 0.0, %v4136
      %v4191 = vsub.f32 0.0, %v4137
      %v4192 = vmul.f32 %v4190, %v4136
      %v4193 = vmul.f32 %v4191, %v4137
      %v4194 = vmul.f32 %v4192, 1.442695
      %v4195 = vpow.pop %v4194
      %v4196 = vmul.f32 %v4193, 1.442695
      %v4197 = vpow.pop %v4196
      %v4198 = vmul.f32 %v4188, %v4195
      %v4199 = vmul.f32 %v4189, %v4197
      %v4200 = vsub.f32 1.0, %v4198
      %v4201 = vsub.f32 1.0, %v4199
      %v4202 = vmul.f32 %v4134, %v4200
      %v4203 = vmul.f32 %v4135, %v4201
      %v4204 = vadd.f32 %v4202, 1.0
      %v4205 = vadd.f32 %v4203, 1.0
      %v4206 = vmul.f32 %v4128, %v4204
      %v4207 = vmul.f32 %v4129, %v4205
      %v4208 = vperm.slane %v3100, 0
      %v4210 = vsel %vm367, %v4206, 0
      %v4213 = vsel %vm367, %v4207, 0
      %v4216 = vsel %vm367, %v4094, 0
      %v4219 = vsel %vm367, %v4095, 0
      %v4222 = vsel %vm367, %v4096, 0
      %v4225 = vsel %vm367, %v4097, 0
      %4227 = vmatpush.xpose.msra.mxu0 0.0
      %4228 = vmatpush.xpose.msra.mxu0 0.0
      %4229 = vmatpush.xpose.msra.mxu0 0.0
      %4230 = vmatpush.xpose.msra.mxu0 0.0
      %4231 = vmatpush.xpose.msra.mxu0 0.0
      %4232 = vmatpush.xpose.msra.mxu0 0.0
      %4233 = vmatpush.xpose.msra.mxu0 0.0
      %4234 = vmatpush.xpose.msra.mxu0 0.0
      %4235 = vmatpush.xpose.msra.mxu0 0.0
      %4236 = vmatpush.xpose.msra.mxu0 0.0
      %4237 = vmatpush.xpose.msra.mxu0 0.0
      %4238 = vmatpush.xpose.msra.mxu0 0.0
      %4239 = vmatpush.xpose.msra.mxu0 %v4225
      %4240 = vmatpush.xpose.msra.mxu0 %v4222
      %4241 = vmatpush.xpose.msra.mxu0 %v4219
      %4242 = vmatpush.xpose.msra.mxu0 %v4216
      %4243 = vmatmul.f32.gmra.mxu0 %v4210
      %v4244 = vpop.f32.mrf.mxu0
      %v4245 = vadd.f32 %v4208, %v4244
      %4246 = vmatmul.f32.gmra.mxu0 %v4213
      %v4247 = vpop.f32.mrf.mxu0
      %v4248 = vadd.f32 %v4208, %v4247
      %4249 = vdwg.mxu0
      %v4250 = vadd.f32 %v4035, %v4245
      %v4251 = vadd.f32 %v4038, %v4248
      %v4252 = vld [vmem:[%s3 + $0x24] sm:$0x1]
      %v4253 = vld [vmem:[%s3 + $0x25] sm:$0x1]
      %v4254 = vsel %vm411, %v4250, 0.0
      %4255 = vadd.xlane.f32.xlu0 %v4254
      %v4256 = vpop.xlane.xlu0 %4255
      %v4257 = vsel %vm411, %v4251, 0.0
      %4258 = vadd.xlane.f32.xlu0 %v4257
      %v4259 = vpop.xlane.xlu0 %4258
      %v4260 = vmul.f32 %v4256, %v424
      %v4261 = vmul.f32 %v4259, %v424
      %v4262 = vsub.f32 %v4250, %v4260
      %v4263 = vsub.f32 %v4251, %v4261
      %v4264 = vmul.f32 %v4262, %v4262
      %v4265 = vmul.f32 %v4263, %v4263
      %v4266 = vsel %vm411, %v4264, 0.0
      %4267 = vadd.xlane.f32.xlu0 %v4266
      %v4268 = vpop.xlane.xlu0 %4267
      %v4269 = vsel %vm411, %v4265, 0.0
      %4270 = vadd.xlane.f32.xlu0 %v4269
      %v4271 = vpop.xlane.xlu0 %4270
      %v4272 = vmul.f32 %v4268, %v424
      %v4273 = vmul.f32 %v4271, %v424
      %v4274 = vadd.f32 %v4272, 1e-06
      %v4275 = vadd.f32 %v4273, 1e-06
      %v4276 = vrsqrt.pop %v4274
      %v4277 = vmul.f32 %v4276, %v4274
      %v4278 = vmul.f32 %v4277, %v4276
      %v4279 = vmul.f32 0.5, %v4278
      %v4280 = vsub.f32 1.5, %v4279
      %v4281 = vmul.f32 %v4276, %v4280
      %vm4282 = vweird.f32 %v4274
      %vm4283 = vweird.f32 %v4276
      %vm4284 = vmor %vm4282, %vm4283
      %v4285 = vsel %vm4284, %v4276, %v4281
      %v4286 = vrsqrt.pop %v4275
      %v4287 = vmul.f32 %v4286, %v4275
      %v4288 = vmul.f32 %v4287, %v4286
      %v4289 = vmul.f32 0.5, %v4288
      %v4290 = vsub.f32 1.5, %v4289
      %v4291 = vmul.f32 %v4286, %v4290
      %vm4292 = vweird.f32 %v4275
      %vm4293 = vweird.f32 %v4286
      %vm4294 = vmor %vm4292, %vm4293
      %v4295 = vsel %vm4294, %v4286, %v4291
      %v4296 = vmul.f32 %v4262, %v4285
      %v4297 = vmul.f32 %v4263, %v4295
      %v4298 = vperm.slane %v4252, 0
      %v4299 = vmul.f32 %v4296, %v4298
      %v4300 = vmul.f32 %v4297, %v4298
      %v4301 = vperm.slane %v4253, 0
      %v4302 = vadd.f32 %v4299, %v4301
      %v4303 = vadd.f32 %v4300, %v4301
      %v4304 = vld [vmem:[%s3 + $0x28] sm:$0xff]
      %v4305 = vld [vmem:[%s3 + $0x30] sm:$0xff]
      %v4306 = vld [vmem:[%s3 + $0x38] sm:$0xff]
      %v4307 = vld [vmem:[%s3 + $0x40] sm:$0xff]
      %v4308 = vld [vmem:[%s3 + $0x26] sm:$0x1]
      %v4309 = vperm.slane %v4308, 0
      %v4311 = vsel %vm411, %v4302, 0
      %v4314 = vsel %vm411, %v4303, 0
      %4316 = vmatpush.msra.mxu0 0.0
      %4317 = vmatpush.msra.mxu0 0.0
      %4318 = vmatpush.msra.mxu0 0.0
      %4319 = vmatpush.msra.mxu0 0.0
      %4320 = vmatpush.msra.mxu0 0.0
      %4321 = vmatpush.msra.mxu0 0.0
      %4322 = vmatpush.msra.mxu0 0.0
      %4323 = vmatpush.msra.mxu0 0.0
      %4324 = vmatpush.msra.mxu0 0.0
      %4325 = vmatpush.msra.mxu0 0.0
      %4326 = vmatpush.msra.mxu0 0.0
      %4327 = vmatpush.msra.mxu0 0.0
      %4328 = vmatpush.msra.mxu0 %v4307
      %4329 = vmatpush.msra.mxu0 %v4306
      %4330 = vmatpush.msra.mxu0 %v4305
      %4331 = vmatpush.msra.mxu0 %v4304
      %4332 = vmatmul.f32.gmra.mxu0 %v4311
      %v4333 = vpop.f32.mrf.mxu0
      %v4334 = vadd.f32 %v4309, %v4333
      %4335 = vmatmul.f32.gmra.mxu0 %v4314
      %v4336 = vpop.f32.mrf.mxu0
      %v4337 = vadd.f32 %v4309, %v4336
      %4338 = vdwg.mxu0
      %4339 = vst [vmem:[%s352] sm:$0xff] %v4334
      %4340 = vst [vmem:[%s352 + $0x8] sm:$0xff] %v4337
      %p4341 = scmp.lt.s32.totalorder %s20, 1
      %s4342 = scalar_select %p4341, %s20, 1
      %s4343 = smul.addr %s4342, 2
      %s4344 = smul.addr %s4343, 8
      %s4345 = scalar_lea.vmem %s9, %s4344
      // Predicated region
      $region57: #{forward.1} parent=55 // pred_check
        %p4346 = pneg %p237
      $region58: #{forward.1} parent=55 // pred_check_branch
        %4348 = sbr.rel (%p4346) target = $region60
      $region59: #{forward.1} parent=55 // pred_region
        _
      $region60: #{forward.1} parent=55 // pred_fallthru
        _
    $region56: #{forward.1} parent=5 // pred_fallthru
      _
    %p4349 = scmp.le.s32.totalorder 2, %s15
    // Predicated region
    $region61: #{forward.1} parent=5 // pred_check
      %p4350 = pneg %p4349
    $region62: #{forward.1} parent=5 // pred_check_branch
      %4352 = sbr.rel (%p4350) target = $region64
    $region63: #{forward.1} parent=5 // pred_region
      %s4353 = ssub.s32 %s15, 2
      // Predicated region
      $region65: #{forward.1} parent=63 // pred_check
        %p4354 = pneg %p243
      $region66: #{forward.1} parent=63 // pred_check_branch
        %4356 = sbr.rel (%p4354) target = $region68
      $region67: #{forward.1} parent=63 // pred_region
        %p4357 = scmp.lt.s32.totalorder %s21, 1
        %s4358 = scalar_select %p4357, %s21, 1
        %s4359 = smul.addr %s4358, 2
        %s4360 = smul.addr %s4359, 8
        %s4361 = scalar_lea.vmem %s9, %s4360
      $region68: #{forward.1} parent=63 // pred_fallthru
        _
    $region64: #{forward.1} parent=5 // pred_fallthru
      _
  $region6: #{forward.1} parent=0 // loop_footer
    %s19 = sadd.s32 1, %s15
  $region7: #{forward.1} parent=0 // loop_footer_branch
    %14 = sbr.rel target = $region3
  $region8: #{forward.1} parent=0 // loop_exit
    _

</llo_original>
